<compile_context>
chip_gen: v7x
topology: tpu7x:2x2x1
jax: 0.10.0
libtpu: 0.0.40
codegen_flags: <defaults>
</compile_context>

<pallas_src>
import functools

import numpy as np
import jax
import jax.numpy as jnp
from jax import lax
from jax.experimental import pallas as pl
from jax.experimental.pallas import tpu as pltpu


def _spectral_conv1d_local_kernel(qs_ref, qa_ref, kbd_ref, vbd_ref, t_ref,
                                  ones_ref, out_ref, *, scale):
    qs = qs_ref[...]          # (Bb, H*L*E)     bf16  spectral lhs, index (h, l, e)
    qa = qa_ref[...]          # (Bb, L, H*E)    bf16  q in its native layout
    kbd = kbd_ref[...]        # (Bb, H*E, H*S)  bf16  per-batch block-diag K^T
    vbd = vbd_ref[...]        # (Bb, H*S, H*D)  bf16  per-batch block-diag V
    t_bd = t_ref[...]         # (H*L*E, H*O*L)  bf16  fused rfft->mix->irfft (*0.5)
    ones_bd = ones_ref[...]   # (H*S, H*S)      f32   block-diag ones (denom broadcast)

    bb, l_len, _ = qa.shape
    hs = kbd.shape[-1]
    hd = vbd.shape[-1]

    # ---------------- spectral branch: one lane-dense MXU matmul ------------
    # xs[b, h*O*L + o*L + l] = 0.5 * x_spec[b, h, o, l]
    xs = jnp.dot(qs, t_bd, preferred_element_type=jnp.float32)       # (Bb, H*O*L)

    # ---------------- local attention branch, lane-dense over (head, key) ---
    # s[b, l, h*S + s'] = scores[b, h, l, s']
    s = jnp.einsum('ble,bes->bls', qa, kbd,
                   preferred_element_type=jnp.float32) * scale       # (Bb, L, H*S)
    s2 = s.reshape(bb * l_len, hs)                                   # free leading merge
    # Row max over ALL (head, key) lanes is constant within each (b, h, l)
    # softmax group (independent of the key index), so subtracting it keeps
    # the softmax exact while guaranteeing exponents <= 0.
    p = jnp.exp(s2 - jnp.max(s2, axis=-1, keepdims=True))            # (Bb*L, H*S)
    # Per-head denominator, already broadcast over keys, via one MXU matmul
    # (MXU is otherwise idle here; avoids narrow-lane segment reductions).
    denom = jnp.dot(p, ones_bd, preferred_element_type=jnp.float32)  # (Bb*L, H*S)
    # 0.5 of the module's final (spectral + attention) / 2 is folded in here.
    a = (p * (0.5 * pl.reciprocal(denom, approx=True))).astype(vbd.dtype)
    # vloc[b, l, h*D + d] = 0.5 * V_local[b, l, h, d]
    vloc = jnp.einsum('blc,bcd->bld', a.reshape(bb, l_len, hs), vbd,
                      preferred_element_type=jnp.float32)            # (Bb, L, H*D)

    # out[b, i*E*L + j*L + m] = 0.5*x_spec[b,h=i,o=j,l=m] + 0.5*V_local[b,l=i,h=j,d=m]
    # Both branches flatten to the same (i, j, m) lane order, so the store is a
    # single full-width lane-dense write.
    out_ref[...] = (xs + vloc.reshape(bb, l_len * hd)).astype(out_ref.dtype)


def _build_spectral_operator(w_re, w_im, seq_len, index):
    """Fold (rfft at `index`) -> complex mixing -> irfft(n=L) -> *0.5 into one
    real BLOCK-DIAGONAL matrix T_bd[h*L*E + l*E + e, h*O*L + o*L + l'] so that
    (q transposed to (B,H,L,E) and flattened) @ T_bd == 0.5 * x_spec flattened
    in (h, o, l') order.  Matches torch.fft.rfft / irfft semantics used by the
    module, including that only out_ft bins 0..M-1 are nonzero (written by
    enumeration) and that irfft ignores the imaginary parts of DC / Nyquist
    bins.  Only module parameters / static config are touched (legit constant
    folding)."""
    w_re = np.asarray(w_re, dtype=np.float64)
    w_im = np.asarray(w_im, dtype=np.float64)
    num_h, e_dim, o_dim, m_dim = w_re.shape
    l_dim = seq_len
    l = np.arange(l_dim)
    freqs = np.asarray(index)                                # frequencies read by rfft
    th_f = 2.0 * np.pi * np.outer(l, freqs) / l_dim          # (L, M)
    f_re = np.cos(th_f)                                      # Re part of rfft gather
    f_im = -np.sin(th_f)                                     # Im part of rfft gather
    m_out = np.arange(m_dim)                                 # bins written: 0..M-1
    th_i = 2.0 * np.pi * np.outer(m_out, l) / l_dim          # (M, L)
    wgt = np.where((m_out == 0) | (m_out == l_dim // 2), 1.0, 2.0)[:, None] / l_dim
    c_i = wgt * np.cos(th_i)                                 # irfft weight on Re
    s_i = -wgt * np.sin(th_i)                                # irfft weight on Im
    coef_re = (np.einsum('heom,mp->heomp', w_re, c_i)
               + np.einsum('heom,mp->heomp', w_im, s_i))
    coef_im = (np.einsum('heom,mp->heomp', w_re, s_i)
               - np.einsum('heom,mp->heomp', w_im, c_i))
    c = (np.einsum('lm,heomp->hleop', f_re, coef_re)
         + np.einsum('lm,heomp->hleop', f_im, coef_im))      # (H, L, E, O, L)
    t = 0.5 * c.reshape(num_h, l_dim * e_dim, o_dim * l_dim)  # fold the final /2
    n_in, n_out = l_dim * e_dim, o_dim * l_dim
    t_bd = np.zeros((num_h * n_in, num_h * n_out), dtype=np.float64)
    for h in range(num_h):                                   # block-diag over heads
        t_bd[h * n_in:(h + 1) * n_in, h * n_out:(h + 1) * n_out] = t[h]
    return jnp.asarray(t_bd, dtype=jnp.bfloat16)


def _default_num_blocks(batch):
    """2 parallel grid steps on v7x (2 TensorCores/chip); 1 on single-core
    v5e/v6e where extra grid steps only add per-step overhead."""
    try:
        kind = jax.devices()[0].device_kind.lower()
    except Exception:
        kind = ""
    if ("v7" in kind or "tpu7" in kind) and batch % 16 == 0:
        return 2
    return 1


def spectral_conv1d_local(q, k, v, mask, w_re, w_im, index, scale, *,
                          num_blocks=None):
    """Pallas TPU implementation of SpectralConv1d_local.forward.

    The PyTorch module only constructs/applies a LocalMask when `mask is None`;
    a provided (non-None) mask is ignored, which is the path implemented here.
    Returns (out, None) with out of shape (B, H, E, L), like the module.
    """
    # TODO(synk): mask=None path (LocalMask masking of the scores) not implemented.
    assert mask is not None, "pass a non-None mask (the module ignores it)"

    B, L, H, E = q.shape
    _, S, _, _ = k.shape
    D = v.shape[-1]
    M = len(index)
    O = w_re.shape[2]
    # The module's final `x + V_local` adds (B,H,E,L) and (B,L,H,D) elementwise.
    assert L == H == E == D and O == E and w_re.shape == (H, E, O, M)

    if num_blocks is None:
        num_blocks = _default_num_blocks(B)
    if B % num_blocks != 0 or (num_blocks != 1 and (B // num_blocks) % 8 != 0):
        num_blocks = 1                 # keep the sublane-divisibility constraint
    block_b = B // num_blocks

    # Wrapper-side layout plumbing (pure transposes / block-diagonal placement,
    # zero FLOPs), done once so every in-kernel tensor is lane-dense, bf16:
    cdt = jnp.bfloat16
    qs = jnp.transpose(q, (0, 2, 1, 3)).reshape(B, H * L * E).astype(cdt)
    qa = q.reshape(B, L, H * E).astype(cdt)
    eye_h = jnp.eye(H, dtype=q.dtype)
    # k_bd[b, h*E+e, g*S+s] = k[b,s,h,e] * (h==g);  v_bd[b, h*S+s, g*D+d] = v[b,s,h,d] * (h==g)
    k_bd = jnp.einsum('bhes,hg->bhegs', jnp.transpose(k, (0, 2, 3, 1)),
                      eye_h).reshape(B, H * E, H * S).astype(cdt)
    v_bd = jnp.einsum('bhsd,hg->bhsgd', jnp.transpose(v, (0, 2, 1, 3)),
                      eye_h).reshape(B, H * S, H * D).astype(cdt)
    t_bd = _build_spectral_operator(w_re, w_im, L, index)     # (H*L*E, H*O*L) bf16
    r = np.arange(H * S)
    ones_bd = jnp.asarray((r[:, None] // S) == (r[None, :] // S), dtype=jnp.float32)

    n_out = H * O * L
    kernel = functools.partial(_spectral_conv1d_local_kernel, scale=float(scale))

    cost = pl.CostEstimate(
        flops=int(2 * B * (H * L * E) * n_out          # spectral
                  + 2 * B * L * (H * E) * (H * S)      # scores
                  + 2 * B * L * (H * S) * (H * S)      # denominator broadcast
                  + 2 * B * L * (H * S) * (H * D)),    # PV
        transcendentals=int(2 * B * L * H * S),        # exp + reciprocal
        bytes_accessed=int(qs.size * 2 + qa.size * 2 + k_bd.size * 2
                           + v_bd.size * 2 + t_bd.size * 2 + ones_bd.size * 4
                           + B * n_out * 4),
    )

    out_flat = pl.pallas_call(
        kernel,
        out_shape=jax.ShapeDtypeStruct((B, n_out), jnp.float32),
        grid=(num_blocks,),
        in_specs=[
            pl.BlockSpec((block_b, H * L * E), lambda b: (b, 0)),        # qs
            pl.BlockSpec((block_b, L, H * E), lambda b: (b, 0, 0)),      # qa
            pl.BlockSpec((block_b, H * E, H * S), lambda b: (b, 0, 0)),  # k_bd
            pl.BlockSpec((block_b, H * S, H * D), lambda b: (b, 0, 0)),  # v_bd
            pl.BlockSpec((H * L * E, n_out), lambda b: (0, 0)),          # T_bd (grid-invariant)
            pl.BlockSpec((H * S, H * S), lambda b: (0, 0)),              # ones_bd (grid-invariant)
        ],
        out_specs=pl.BlockSpec((block_b, n_out), lambda b: (b, 0)),      # lane-dense slab
        compiler_params=pltpu.CompilerParams(
            dimension_semantics=("parallel",),   # no cross-step state -> megacore OK
        ),
        cost_estimate=cost,
    )(qs, qa, k_bd, v_bd, t_bd, ones_bd)

    out = out_flat.reshape(B, H, E, L)    # lane-dense slab -> module's (B, H, E, L)
    return out, None


if __name__ == "__main__":
    # Module constraints: weights1.shape[0] == 8 -> H == 8, E = in_channels // 8,
    # out_channels == in_channels, and the final elementwise add of (B,H,E,L)
    # with (B,L,H,D) forces L == H == E == D (== 8).
    B, L, S, H, E = 16, 8, 8, 8, 8
    D = E
    in_channels = H * E            # 64
    out_channels = in_channels     # 64
    seq_len = L
    modes1 = 4                     # modes1 <= 1000 branch: index = [0, 1, 2, 3]
    index = list(range(0, min(seq_len // 2, modes1)))
    M = len(index)
    scale = 1.0 / (in_channels * out_channels)

    key = jax.random.PRNGKey(0)
    kq, kk, kv, kwr, kwi = jax.random.split(key, 5)
    q = jax.random.normal(kq, (B, L, H, E), dtype=jnp.float32)
    k = jax.random.normal(kk, (B, S, H, E), dtype=jnp.float32)
    v = jax.random.normal(kv, (B, S, H, D), dtype=jnp.float32)
    # weights1 = scale * torch.rand(8, C//8, C//8, len(index), dtype=cfloat)
    w_re = scale * jax.random.uniform(
        kwr, (8, in_channels // 8, out_channels // 8, M), dtype=jnp.float32)
    w_im = scale * jax.random.uniform(
        kwi, (8, in_channels // 8, out_channels // 8, M), dtype=jnp.float32)
    mask = jnp.ones((B, 1, L, S), dtype=jnp.bool_)   # non-None -> module skips masking

    out, _ = spectral_conv1d_local(q, k, v, mask, w_re, w_im, index, scale)
    out = jax.block_until_ready(out)

    # ---------------- pure-JAX reference (module semantics) ----------------
    hi = lax.Precision.HIGHEST
    scores = jnp.einsum('blhe,bshe->bhls', q, k, precision=hi)
    A_local = jax.nn.softmax(scale * scores, axis=-1)
    V_local = jnp.einsum('bhls,bshd->blhd', A_local, v, precision=hi)
    x = jnp.transpose(q, (0, 2, 3, 1))                          # (B, H, E, L)
    x_ft = jnp.fft.rfft(x, axis=-1)
    out_ft = jnp.zeros((B, H, E, L // 2 + 1), dtype=jnp.complex64)
    w_c = w_re + 1j * w_im
    for wi_, i in enumerate(index):
        out_ft = out_ft.at[:, :, :, wi_].set(
            jnp.einsum('bhi,hio->bho', x_ft[:, :, :, i], w_c[:, :, :, wi_],
                       precision=hi))
    x_sp = jnp.fft.irfft(out_ft, n=L, axis=-1)
    ref = (x_sp + V_local) / 2.0

    # Tolerance budget: explicit bf16 MXU operands (q, k, v, a, T) each carry
    # ~2^-9 relative rounding plus the approximate reciprocal in the softmax
    # normalization; against the f32/HIGHEST reference this stays well inside
    # 5e-3 at these magnitudes.
    np.testing.assert_allclose(np.asarray(out), np.asarray(ref),
                               atol=5e-3, rtol=5e-3)
    print("KERNEL_OK")
</pallas_src>

<mosaic_0001>
module attributes {stable_mosaic.version = 11 : i64} {
  func.func @_spectral_conv1d_local_kernel(%arg0: i32, %arg1: memref<16x512xbf16, #tpu.memory_space<vmem>>, %arg2: memref<16x8x64xbf16, #tpu.memory_space<vmem>>, %arg3: memref<16x64x64xbf16, #tpu.memory_space<vmem>>, %arg4: memref<16x64x64xbf16, #tpu.memory_space<vmem>>, %arg5: memref<512x512xbf16, #tpu.memory_space<vmem>>, %arg6: memref<64x64xf32, #tpu.memory_space<vmem>>, %arg7: memref<16x512xf32, #tpu.memory_space<vmem>>) attributes {dimension_semantics = [#tpu.dimension_semantics<parallel>], iteration_bounds = array<i64: 1>, scalar_prefetch = 0 : i64, scratch_operands = 0 : i64, tpu.core_type = #tpu.core_type<tc>, window_params = [{transform_indices = @transform_0, window_bounds = array<i64: 16, 512>}, {transform_indices = @transform_1, window_bounds = array<i64: 16, 8, 64>}, {transform_indices = @transform_2, window_bounds = array<i64: 16, 64, 64>}, {transform_indices = @transform_3, window_bounds = array<i64: 16, 64, 64>}, {pipeline_mode = #tpu.pipeline_mode<synchronous>, transform_indices = @transform_4, window_bounds = array<i64: 512, 512>}, {pipeline_mode = #tpu.pipeline_mode<synchronous>, transform_indices = @transform_5, window_bounds = array<i64: 64, 64>}, {transform_indices = @transform_6, window_bounds = array<i64: 16, 512>}]} {
    %c0 = arith.constant 0 : index
    %c0_0 = arith.constant 0 : index
    %0 = vector.load %arg1[%c0, %c0_0] : memref<16x512xbf16, #tpu.memory_space<vmem>>, vector<16x512xbf16>
    %c0_1 = arith.constant 0 : index
    %c0_2 = arith.constant 0 : index
    %c0_3 = arith.constant 0 : index
    %1 = vector.load %arg2[%c0_1, %c0_2, %c0_3] : memref<16x8x64xbf16, #tpu.memory_space<vmem>>, vector<16x8x64xbf16>
    %c0_4 = arith.constant 0 : index
    %c0_5 = arith.constant 0 : index
    %c0_6 = arith.constant 0 : index
    %2 = vector.load %arg3[%c0_4, %c0_5, %c0_6] : memref<16x64x64xbf16, #tpu.memory_space<vmem>>, vector<16x64x64xbf16>
    %c0_7 = arith.constant 0 : index
    %c0_8 = arith.constant 0 : index
    %c0_9 = arith.constant 0 : index
    %3 = vector.load %arg4[%c0_7, %c0_8, %c0_9] : memref<16x64x64xbf16, #tpu.memory_space<vmem>>, vector<16x64x64xbf16>
    %c0_10 = arith.constant 0 : index
    %c0_11 = arith.constant 0 : index
    %4 = vector.load %arg5[%c0_10, %c0_11] : memref<512x512xbf16, #tpu.memory_space<vmem>>, vector<512x512xbf16>
    %c0_12 = arith.constant 0 : index
    %c0_13 = arith.constant 0 : index
    %5 = vector.load %arg6[%c0_12, %c0_13] : memref<64x64xf32, #tpu.memory_space<vmem>>, vector<64x64xf32>
    %cst = arith.constant dense<0.000000e+00> : vector<16x512xf32>
    %6 = tpu.matmul %0, %4, %cst {dimension_numbers = #tpu.dot_dimension_numbers<[1], [0], [0], [1], [0, 0, 1, 1], [], []>} : vector<16x512xbf16>, vector<512x512xbf16>, vector<16x512xf32> -> vector<16x512xf32>
    "tpu.trace_start"() <{level = 10 : i32, message = "ble,bes->bls"}> : () -> ()
    %cst_14 = arith.constant dense<0.000000e+00> : vector<16x8x64xf32>
    %7 = tpu.matmul %1, %2, %cst_14 {dimension_numbers = #tpu.dot_dimension_numbers<[2], [1], [1], [2], [0, 0, 0, 1, 1, 2], [0], [0]>} : vector<16x8x64xbf16>, vector<16x64x64xbf16>, vector<16x8x64xf32> -> vector<16x8x64xf32>
    "tpu.trace_stop"() : () -> ()
    %cst_15 = arith.constant 2.44140625E-4 : f32
    %8 = vector.broadcast %cst_15 : f32 to vector<16x8x64xf32>
    %9 = arith.mulf %7, %8 : vector<16x8x64xf32>
    %10 = vector.shape_cast %9 : vector<16x8x64xf32> to vector<128x64xf32>
    %cst_16 = arith.constant dense<0xFF800000> : vector<128xf32>
    %11 = vector.multi_reduction <maximumf>, %10, %cst_16 [1] : vector<128x64xf32> to vector<128xf32>
    %12 = vector.shape_cast %11 : vector<128xf32> to vector<128x1xf32>
    %13 = vector.broadcast %12 : vector<128x1xf32> to vector<128x64xf32>
    %14 = arith.subf %10, %13 : vector<128x64xf32>
    %15 = math.exp %14 : vector<128x64xf32>
    %cst_17 = arith.constant dense<0.000000e+00> : vector<128x64xf32>
    %16 = tpu.matmul %15, %5, %cst_17 {dimension_numbers = #tpu.dot_dimension_numbers<[1], [0], [0], [1], [0, 0, 1, 1], [], []>} : vector<128x64xf32>, vector<64x64xf32>, vector<128x64xf32> -> vector<128x64xf32>
    %17 = tpu.reciprocal %16 {approx = true} : vector<128x64xf32> -> vector<128x64xf32>
    %cst_18 = arith.constant 5.000000e-01 : f32
    %18 = vector.broadcast %cst_18 : f32 to vector<128x64xf32>
    %19 = arith.mulf %18, %17 : vector<128x64xf32>
    %20 = arith.mulf %15, %19 : vector<128x64xf32>
    %21 = arith.truncf %20 : vector<128x64xf32> to vector<128x64xbf16>
    %22 = vector.shape_cast %21 : vector<128x64xbf16> to vector<16x8x64xbf16>
    "tpu.trace_start"() <{level = 10 : i32, message = "blc,bcd->bld"}> : () -> ()
    %cst_19 = arith.constant dense<0.000000e+00> : vector<16x8x64xf32>
    %23 = tpu.matmul %22, %3, %cst_19 {dimension_numbers = #tpu.dot_dimension_numbers<[2], [1], [1], [2], [0, 0, 0, 1, 1, 2], [0], [0]>} : vector<16x8x64xbf16>, vector<16x64x64xbf16>, vector<16x8x64xf32> -> vector<16x8x64xf32>
    "tpu.trace_stop"() : () -> ()
    %24 = vector.shape_cast %23 : vector<16x8x64xf32> to vector<16x512xf32>
    %25 = arith.addf %6, %24 : vector<16x512xf32>
    %c0_20 = arith.constant 0 : index
    %c0_21 = arith.constant 0 : index
    %26 = vector.load %arg7[%c0_20, %c0_21] : memref<16x512xf32, #tpu.memory_space<vmem>>, vector<16x512xf32>
    tpu.vector_store %arg7[%c0_20, %c0_21], %25 {strides = array<i32>} : memref<16x512xf32, #tpu.memory_space<vmem>>, vector<16x512xf32>,
    return
  }
  func.func @transform_0(%arg0: i32) -> (i32, i32) {
    %c0_i32 = arith.constant 0 : i32
    %c0_i32_0 = arith.constant 0 : i32
    return %arg0, %c0_i32 : i32, i32
  }
  func.func @transform_1(%arg0: i32) -> (i32, i32, i32) {
    %c0_i32 = arith.constant 0 : i32
    %c0_i32_0 = arith.constant 0 : i32
    %c0_i32_1 = arith.constant 0 : i32
    return %arg0, %c0_i32, %c0_i32_0 : i32, i32, i32
  }
  func.func @transform_2(%arg0: i32) -> (i32, i32, i32) {
    %c0_i32 = arith.constant 0 : i32
    %c0_i32_0 = arith.constant 0 : i32
    %c0_i32_1 = arith.constant 0 : i32
    return %arg0, %c0_i32, %c0_i32_0 : i32, i32, i32
  }
  func.func @transform_3(%arg0: i32) -> (i32, i32, i32) {
    %c0_i32 = arith.constant 0 : i32
    %c0_i32_0 = arith.constant 0 : i32
    %c0_i32_1 = arith.constant 0 : i32
    return %arg0, %c0_i32, %c0_i32_0 : i32, i32, i32
  }
  func.func @transform_4(%arg0: i32) -> (i32, i32) {
    %c0_i32 = arith.constant 0 : i32
    %c0_i32_0 = arith.constant 0 : i32
    %c0_i32_1 = arith.constant 0 : i32
    return %c0_i32, %c0_i32_0 : i32, i32
  }
  func.func @transform_5(%arg0: i32) -> (i32, i32) {
    %c0_i32 = arith.constant 0 : i32
    %c0_i32_0 = arith.constant 0 : i32
    %c0_i32_1 = arith.constant 0 : i32
    return %c0_i32, %c0_i32_0 : i32, i32
  }
  func.func @transform_6(%arg0: i32) -> (i32, i32) {
    %c0_i32 = arith.constant 0 : i32
    %c0_i32_0 = arith.constant 0 : i32
    return %arg0, %c0_i32 : i32, i32
  }
}

</mosaic_0001>

<llo_original>
// kernel: tpu_custom_call.1
$region0: #{tpu_custom_call.1}
  #allocation0 [shape = 'u32[]', space=smem, size = 0x4, offset = 0x4, fixed_abs, tag = 'smem constant byte address 0x4 - core index']
  #allocation1 [shape = 'u32[144,128]{1,0:T(1,128)}', space=vmem, size = 0x12000, scoped, tag = 'internal scratch']
  %s0 = inlined_call_operand.hbm [shape: bf16[16,512], index: 0, kind: input, shape index: {}]
  %s1 = inlined_call_operand.hbm [shape: bf16[16,8,64], index: 1, kind: input, shape index: {}]
  %s2 = inlined_call_operand.hbm [shape: bf16[16,64,64], index: 2, kind: input, shape index: {}]
  %s3 = inlined_call_operand.hbm [shape: bf16[16,64,64], index: 3, kind: input, shape index: {}]
  %s4 = inlined_call_operand.hbm [shape: bf16[512,512], index: 4, kind: input, shape index: {}]
  %s5 = inlined_call_operand.hbm [shape: f32[64,64], index: 5, kind: input, shape index: {}]
  %s6 = inlined_call_operand.hbm [shape: f32[16,512], index: 6, kind: output, shape index: {}]
  %s7 = sld [smem:[#allocation0]]
  $region58: #{tpu_custom_call.1} parent=0
    _
  %s9 = ssub.s32 1, %s7
  %s10 = scalar_select 0, %s9, %s7
  $region1: #{tpu_custom_call.1} parent=0
    #allocation2 [shape = 'u8[16384]{0}', space=vmem, size = 0x4000, scoped, tag = 'input window, operand 0, single buffered']
    #allocation3 [shape = 's32[1]{0}', space=sflag, size = 0x4, scoped, tag = 'scoped memory for tpu_custom_call.1']
    #allocation4 [shape = 's32[1]{0}', space=sflag, size = 0x4, scoped, tag = 'scoped memory for tpu_custom_call.1']
    #allocation5 [shape = 'u8[32768]{0}', space=vmem, size = 0x8000, scoped, tag = 'input window, operand 1, single buffered']
    #allocation6 [shape = 's32[1]{0}', space=sflag, size = 0x4, scoped, tag = 'scoped memory for tpu_custom_call.1']
    #allocation7 [shape = 'u8[262144]{0}', space=vmem, size = 0x40000, scoped, tag = 'input window, operand 2, single buffered']
    #allocation8 [shape = 'u8[262144]{0}', space=vmem, size = 0x40000, scoped, tag = 'input window, operand 3, single buffered']
    #allocation9 [shape = 's32[1]{0}', space=sflag, size = 0x4, scoped, tag = 'scoped memory for tpu_custom_call.1']
    #allocation10 [shape = 'u8[524288]{0}', space=vmem, size = 0x80000, scoped, tag = 'input window, operand 4, single buffered']
    #allocation11 [shape = 'u8[32768]{0}', space=vmem, size = 0x8000, scoped, tag = 'input window, operand 5, single buffered']
    #allocation12 [shape = 's32[1]{0}', space=sflag, size = 0x4, scoped, tag = 'scoped memory for tpu_custom_call.1']
    #allocation13 [shape = 'u8[32768]{0}', space=vmem, size = 0x8000, scoped, tag = 'output window, operand 0, single buffered']
    %11 = vsyncpa [#allocation3], 0
    %12 = vsyncpa [#allocation6], 0
    %13 = vsyncpa [#allocation9], 0
    %14 = vsyncpa [#allocation12], 0
    %15 = vsyncpa [#allocation4], 0
    // Predicated region
    $region2: #{tpu_custom_call.1} parent=1 // pred_check
      _
    $region3: #{tpu_custom_call.1} parent=1 // pred_check_branch
      %17 = sbr.rel (0) target = $region5
    $region4: #{tpu_custom_call.1} parent=1 // pred_region
      %s19 = ssub.s32 512, 512
      %20 = vsyncadd [#allocation3], %s19
      %s21 = sshll.u32 [#allocation2], 4
      %s22 = int_to_ptr.vmem [resolvable:$true] %s21
      %27 = dma.hbm_to_vmem [thread:$0]  %s0, 512, %s22, [#allocation3], 256, 256, 16
    $region5: #{tpu_custom_call.1} parent=1 // pred_fallthru
      _
    // Predicated region
    $region6: #{tpu_custom_call.1} parent=1 // pred_check
      _
    $region7: #{tpu_custom_call.1} parent=1 // pred_check_branch
      %29 = sbr.rel (0) target = $region9
    $region8: #{tpu_custom_call.1} parent=1 // pred_region
      %s31 = ssub.s32 1024, 1024
      %32 = vsyncadd [#allocation6], %s31
      %s33 = sshll.u32 [#allocation5], 4
      %s34 = int_to_ptr.vmem [resolvable:$true] %s33
      %39 = dma.hbm_to_vmem [thread:$0]  %s1, 1024, %s34, [#allocation6], 64, 64, 4
    $region9: #{tpu_custom_call.1} parent=1 // pred_fallthru
      _
    // Predicated region
    $region10: #{tpu_custom_call.1} parent=1 // pred_check
      _
    $region11: #{tpu_custom_call.1} parent=1 // pred_check_branch
      %41 = sbr.rel (0) target = $region13
    $region12: #{tpu_custom_call.1} parent=1 // pred_region
      %s43 = ssub.s32 8192, 8192
      %44 = vsyncadd [#allocation6], %s43
      %s45 = sshll.u32 [#allocation7], 4
      %s46 = int_to_ptr.vmem [resolvable:$true] %s45
      %51 = dma.hbm_to_vmem [thread:$0]  %s2, 8192, %s46, [#allocation6], 64, 64, 4
    $region13: #{tpu_custom_call.1} parent=1 // pred_fallthru
      _
    // Predicated region
    $region14: #{tpu_custom_call.1} parent=1 // pred_check
      _
    $region15: #{tpu_custom_call.1} parent=1 // pred_check_branch
      %53 = sbr.rel (0) target = $region17
    $region16: #{tpu_custom_call.1} parent=1 // pred_region
      %s55 = ssub.s32 8192, 8192
      %56 = vsyncadd [#allocation9], %s55
      %s57 = sshll.u32 [#allocation8], 4
      %s58 = int_to_ptr.vmem [resolvable:$true] %s57
      %63 = dma.hbm_to_vmem [thread:$0]  %s3, 8192, %s58, [#allocation9], 64, 64, 4
    $region17: #{tpu_custom_call.1} parent=1 // pred_fallthru
      _
    // Predicated region
    $region18: #{tpu_custom_call.1} parent=1 // pred_check
      _
    $region19: #{tpu_custom_call.1} parent=1 // pred_check_branch
      %65 = sbr.rel (0) target = $region21
    $region20: #{tpu_custom_call.1} parent=1 // pred_region
      %s67 = ssub.s32 16384, 16384
      %68 = vsyncadd [#allocation9], %s67
      %s69 = sshll.u32 [#allocation10], 4
      %s70 = int_to_ptr.vmem [resolvable:$true] %s69
      %75 = dma.hbm_to_vmem [thread:$0]  %s4, 16384, %s70, [#allocation9], 256, 256, 16
    $region21: #{tpu_custom_call.1} parent=1 // pred_fallthru
      _
    // Predicated region
    $region22: #{tpu_custom_call.1} parent=1 // pred_check
      _
    $region23: #{tpu_custom_call.1} parent=1 // pred_check_branch
      %77 = sbr.rel (0) target = $region25
    $region24: #{tpu_custom_call.1} parent=1 // pred_region
      %s79 = ssub.s32 1024, 1024
      %80 = vsyncadd [#allocation12], %s79
      %s81 = sshll.u32 [#allocation11], 4
      %s82 = int_to_ptr.vmem [resolvable:$true] %s81
      %87 = dma.hbm_to_vmem [thread:$0]  %s5, 1024, %s82, [#allocation12], 128, 128, 8
    $region25: #{tpu_custom_call.1} parent=1 // pred_fallthru
      _
    // Predicated region
    $region26: #{tpu_custom_call.1} parent=1 // pred_check
      _
    $region27: #{tpu_custom_call.1} parent=1 // pred_check_branch
      %89 = sbr.rel (0) target = $region29
    $region28: #{tpu_custom_call.1} parent=1 // pred_region
      %90 = dma.done [#allocation3], 512
    $region29: #{tpu_custom_call.1} parent=1 // pred_fallthru
      _
    // Predicated region
    $region30: #{tpu_custom_call.1} parent=1 // pred_check
      _
    $region31: #{tpu_custom_call.1} parent=1 // pred_check_branch
      %92 = sbr.rel (0) target = $region33
    $region32: #{tpu_custom_call.1} parent=1 // pred_region
      %93 = dma.done [#allocation6], 1024
    $region33: #{tpu_custom_call.1} parent=1 // pred_fallthru
      _
    // Predicated region
    $region34: #{tpu_custom_call.1} parent=1 // pred_check
      _
    $region35: #{tpu_custom_call.1} parent=1 // pred_check_branch
      %95 = sbr.rel (0) target = $region37
    $region36: #{tpu_custom_call.1} parent=1 // pred_region
      %96 = dma.done [#allocation6], 8192
    $region37: #{tpu_custom_call.1} parent=1 // pred_fallthru
      _
    // Predicated region
    $region38: #{tpu_custom_call.1} parent=1 // pred_check
      _
    $region39: #{tpu_custom_call.1} parent=1 // pred_check_branch
      %98 = sbr.rel (0) target = $region41
    $region40: #{tpu_custom_call.1} parent=1 // pred_region
      %99 = dma.done [#allocation9], 8192
    $region41: #{tpu_custom_call.1} parent=1 // pred_fallthru
      _
    // Predicated region
    $region42: #{tpu_custom_call.1} parent=1 // pred_check
      _
    $region43: #{tpu_custom_call.1} parent=1 // pred_check_branch
      %101 = sbr.rel (0) target = $region45
    $region44: #{tpu_custom_call.1} parent=1 // pred_region
      %102 = dma.done [#allocation9], 16384
    $region45: #{tpu_custom_call.1} parent=1 // pred_fallthru
      _
    // Predicated region
    $region46: #{tpu_custom_call.1} parent=1 // pred_check
      _
    $region47: #{tpu_custom_call.1} parent=1 // pred_check_branch
      %104 = sbr.rel (0) target = $region49
    $region48: #{tpu_custom_call.1} parent=1 // pred_region
      %105 = dma.done [#allocation12], 1024
    $region49: #{tpu_custom_call.1} parent=1 // pred_fallthru
      _
    %v107 = vld [vmem:[#allocation2] sm:$0xff]
    %v108 = vld [vmem:[#allocation2 + $0x8] sm:$0xff]
    %v109 = vld [vmem:[#allocation2 + $0x10] sm:$0xff]
    %v110 = vld [vmem:[#allocation2 + $0x18] sm:$0xff]
    %v111 = vld [vmem:[#allocation5] sm:$0xf]
    %v112 = vld [vmem:[#allocation5 + $0x4] sm:$0xf]
    %v113 = vld [vmem:[#allocation5 + $0x8] sm:$0xf]
    %v114 = vld [vmem:[#allocation5 + $0xc] sm:$0xf]
    %v115 = vld [vmem:[#allocation5 + $0x10] sm:$0xf]
    %v116 = vld [vmem:[#allocation5 + $0x14] sm:$0xf]
    %v117 = vld [vmem:[#allocation5 + $0x18] sm:$0xf]
    %v118 = vld [vmem:[#allocation5 + $0x1c] sm:$0xf]
    %v119 = vld [vmem:[#allocation5 + $0x20] sm:$0xf]
    %v120 = vld [vmem:[#allocation5 + $0x24] sm:$0xf]
    %v121 = vld [vmem:[#allocation5 + $0x28] sm:$0xf]
    %v122 = vld [vmem:[#allocation5 + $0x2c] sm:$0xf]
    %v123 = vld [vmem:[#allocation5 + $0x30] sm:$0xf]
    %v124 = vld [vmem:[#allocation5 + $0x34] sm:$0xf]
    %v125 = vld [vmem:[#allocation5 + $0x38] sm:$0xf]
    %v126 = vld [vmem:[#allocation5 + $0x3c] sm:$0xf]
    %v127 = vld [vmem:[#allocation7] sm:$0xf]
    %v128 = vld [vmem:[#allocation7 + $0x4] sm:$0xf]
    %v129 = vld [vmem:[#allocation7 + $0x8] sm:$0xf]
    %v130 = vld [vmem:[#allocation7 + $0xc] sm:$0xf]
    %v131 = vld [vmem:[#allocation7 + $0x10] sm:$0xf]
    %v132 = vld [vmem:[#allocation7 + $0x14] sm:$0xf]
    %v133 = vld [vmem:[#allocation7 + $0x18] sm:$0xf]
    %v134 = vld [vmem:[#allocation7 + $0x1c] sm:$0xf]
    %v135 = vld [vmem:[#allocation7 + $0x20] sm:$0xf]
    %v136 = vld [vmem:[#allocation7 + $0x24] sm:$0xf]
    %v137 = vld [vmem:[#allocation7 + $0x28] sm:$0xf]
    %v138 = vld [vmem:[#allocation7 + $0x2c] sm:$0xf]
    %v139 = vld [vmem:[#allocation7 + $0x30] sm:$0xf]
    %v140 = vld [vmem:[#allocation7 + $0x34] sm:$0xf]
    %v141 = vld [vmem:[#allocation7 + $0x38] sm:$0xf]
    %v142 = vld [vmem:[#allocation7 + $0x3c] sm:$0xf]
    %v143 = vld [vmem:[#allocation7 + $0x40] sm:$0xf]
    %v144 = vld [vmem:[#allocation7 + $0x44] sm:$0xf]
    %v145 = vld [vmem:[#allocation7 + $0x48] sm:$0xf]
    %v146 = vld [vmem:[#allocation7 + $0x4c] sm:$0xf]
    %v147 = vld [vmem:[#allocation7 + $0x50] sm:$0xf]
    %v148 = vld [vmem:[#allocation7 + $0x54] sm:$0xf]
    %v149 = vld [vmem:[#allocation7 + $0x58] sm:$0xf]
    %v150 = vld [vmem:[#allocation7 + $0x5c] sm:$0xf]
    %v151 = vld [vmem:[#allocation7 + $0x60] sm:$0xf]
    %v152 = vld [vmem:[#allocation7 + $0x64] sm:$0xf]
    %v153 = vld [vmem:[#allocation7 + $0x68] sm:$0xf]
    %v154 = vld [vmem:[#allocation7 + $0x6c] sm:$0xf]
    %v155 = vld [vmem:[#allocation7 + $0x70] sm:$0xf]
    %v156 = vld [vmem:[#allocation7 + $0x74] sm:$0xf]
    %v157 = vld [vmem:[#allocation7 + $0x78] sm:$0xf]
    %v158 = vld [vmem:[#allocation7 + $0x7c] sm:$0xf]
    %v159 = vld [vmem:[#allocation7 + $0x80] sm:$0xf]
    %v160 = vld [vmem:[#allocation7 + $0x84] sm:$0xf]
    %v161 = vld [vmem:[#allocation7 + $0x88] sm:$0xf]
    %v162 = vld [vmem:[#allocation7 + $0x8c] sm:$0xf]
    %v163 = vld [vmem:[#allocation7 + $0x90] sm:$0xf]
    %v164 = vld [vmem:[#allocation7 + $0x94] sm:$0xf]
    %v165 = vld [vmem:[#allocation7 + $0x98] sm:$0xf]
    %v166 = vld [vmem:[#allocation7 + $0x9c] sm:$0xf]
    %v167 = vld [vmem:[#allocation7 + $0xa0] sm:$0xf]
    %v168 = vld [vmem:[#allocation7 + $0xa4] sm:$0xf]
    %v169 = vld [vmem:[#allocation7 + $0xa8] sm:$0xf]
    %v170 = vld [vmem:[#allocation7 + $0xac] sm:$0xf]
    %v171 = vld [vmem:[#allocation7 + $0xb0] sm:$0xf]
    %v172 = vld [vmem:[#allocation7 + $0xb4] sm:$0xf]
    %v173 = vld [vmem:[#allocation7 + $0xb8] sm:$0xf]
    %v174 = vld [vmem:[#allocation7 + $0xbc] sm:$0xf]
    %v175 = vld [vmem:[#allocation7 + $0xc0] sm:$0xf]
    %v176 = vld [vmem:[#allocation7 + $0xc4] sm:$0xf]
    %v177 = vld [vmem:[#allocation7 + $0xc8] sm:$0xf]
    %v178 = vld [vmem:[#allocation7 + $0xcc] sm:$0xf]
    %v179 = vld [vmem:[#allocation7 + $0xd0] sm:$0xf]
    %v180 = vld [vmem:[#allocation7 + $0xd4] sm:$0xf]
    %v181 = vld [vmem:[#allocation7 + $0xd8] sm:$0xf]
    %v182 = vld [vmem:[#allocation7 + $0xdc] sm:$0xf]
    %v183 = vld [vmem:[#allocation7 + $0xe0] sm:$0xf]
    %v184 = vld [vmem:[#allocation7 + $0xe4] sm:$0xf]
    %v185 = vld [vmem:[#allocation7 + $0xe8] sm:$0xf]
    %v186 = vld [vmem:[#allocation7 + $0xec] sm:$0xf]
    %v187 = vld [vmem:[#allocation7 + $0xf0] sm:$0xf]
    %v188 = vld [vmem:[#allocation7 + $0xf4] sm:$0xf]
    %v189 = vld [vmem:[#allocation7 + $0xf8] sm:$0xf]
    %v190 = vld [vmem:[#allocation7 + $0xfc] sm:$0xf]
    %v191 = vld [vmem:[#allocation7 + $0x100] sm:$0xf]
    %v192 = vld [vmem:[#allocation7 + $0x104] sm:$0xf]
    %v193 = vld [vmem:[#allocation7 + $0x108] sm:$0xf]
    %v194 = vld [vmem:[#allocation7 + $0x10c] sm:$0xf]
    %v195 = vld [vmem:[#allocation7 + $0x110] sm:$0xf]
    %v196 = vld [vmem:[#allocation7 + $0x114] sm:$0xf]
    %v197 = vld [vmem:[#allocation7 + $0x118] sm:$0xf]
    %v198 = vld [vmem:[#allocation7 + $0x11c] sm:$0xf]
    %v199 = vld [vmem:[#allocation7 + $0x120] sm:$0xf]
    %v200 = vld [vmem:[#allocation7 + $0x124] sm:$0xf]
    %v201 = vld [vmem:[#allocation7 + $0x128] sm:$0xf]
    %v202 = vld [vmem:[#allocation7 + $0x12c] sm:$0xf]
    %v203 = vld [vmem:[#allocation7 + $0x130] sm:$0xf]
    %v204 = vld [vmem:[#allocation7 + $0x134] sm:$0xf]
    %v205 = vld [vmem:[#allocation7 + $0x138] sm:$0xf]
    %v206 = vld [vmem:[#allocation7 + $0x13c] sm:$0xf]
    %v207 = vld [vmem:[#allocation7 + $0x140] sm:$0xf]
    %v208 = vld [vmem:[#allocation7 + $0x144] sm:$0xf]
    %v209 = vld [vmem:[#allocation7 + $0x148] sm:$0xf]
    %v210 = vld [vmem:[#allocation7 + $0x14c] sm:$0xf]
    %v211 = vld [vmem:[#allocation7 + $0x150] sm:$0xf]
    %v212 = vld [vmem:[#allocation7 + $0x154] sm:$0xf]
    %v213 = vld [vmem:[#allocation7 + $0x158] sm:$0xf]
    %v214 = vld [vmem:[#allocation7 + $0x15c] sm:$0xf]
    %v215 = vld [vmem:[#allocation7 + $0x160] sm:$0xf]
    %v216 = vld [vmem:[#allocation7 + $0x164] sm:$0xf]
    %v217 = vld [vmem:[#allocation7 + $0x168] sm:$0xf]
    %v218 = vld [vmem:[#allocation7 + $0x16c] sm:$0xf]
    %v219 = vld [vmem:[#allocation7 + $0x170] sm:$0xf]
    %v220 = vld [vmem:[#allocation7 + $0x174] sm:$0xf]
    %v221 = vld [vmem:[#allocation7 + $0x178] sm:$0xf]
    %v222 = vld [vmem:[#allocation7 + $0x17c] sm:$0xf]
    %v223 = vld [vmem:[#allocation7 + $0x180] sm:$0xf]
    %v224 = vld [vmem:[#allocation7 + $0x184] sm:$0xf]
    %v225 = vld [vmem:[#allocation7 + $0x188] sm:$0xf]
    %v226 = vld [vmem:[#allocation7 + $0x18c] sm:$0xf]
    %v227 = vld [vmem:[#allocation7 + $0x190] sm:$0xf]
    %v228 = vld [vmem:[#allocation7 + $0x194] sm:$0xf]
    %v229 = vld [vmem:[#allocation7 + $0x198] sm:$0xf]
    %v230 = vld [vmem:[#allocation7 + $0x19c] sm:$0xf]
    %v231 = vld [vmem:[#allocation7 + $0x1a0] sm:$0xf]
    %v232 = vld [vmem:[#allocation7 + $0x1a4] sm:$0xf]
    %v233 = vld [vmem:[#allocation7 + $0x1a8] sm:$0xf]
    %v234 = vld [vmem:[#allocation7 + $0x1ac] sm:$0xf]
    %v235 = vld [vmem:[#allocation7 + $0x1b0] sm:$0xf]
    %v236 = vld [vmem:[#allocation7 + $0x1b4] sm:$0xf]
    %v237 = vld [vmem:[#allocation7 + $0x1b8] sm:$0xf]
    %v238 = vld [vmem:[#allocation7 + $0x1bc] sm:$0xf]
    %v239 = vld [vmem:[#allocation7 + $0x1c0] sm:$0xf]
    %v240 = vld [vmem:[#allocation7 + $0x1c4] sm:$0xf]
    %v241 = vld [vmem:[#allocation7 + $0x1c8] sm:$0xf]
    %v242 = vld [vmem:[#allocation7 + $0x1cc] sm:$0xf]
    %v243 = vld [vmem:[#allocation7 + $0x1d0] sm:$0xf]
    %v244 = vld [vmem:[#allocation7 + $0x1d4] sm:$0xf]
    %v245 = vld [vmem:[#allocation7 + $0x1d8] sm:$0xf]
    %v246 = vld [vmem:[#allocation7 + $0x1dc] sm:$0xf]
    %v247 = vld [vmem:[#allocation7 + $0x1e0] sm:$0xf]
    %v248 = vld [vmem:[#allocation7 + $0x1e4] sm:$0xf]
    %v249 = vld [vmem:[#allocation7 + $0x1e8] sm:$0xf]
    %v250 = vld [vmem:[#allocation7 + $0x1ec] sm:$0xf]
    %v251 = vld [vmem:[#allocation7 + $0x1f0] sm:$0xf]
    %v252 = vld [vmem:[#allocation7 + $0x1f4] sm:$0xf]
    %v253 = vld [vmem:[#allocation7 + $0x1f8] sm:$0xf]
    %v254 = vld [vmem:[#allocation7 + $0x1fc] sm:$0xf]
    %v255 = vld [vmem:[#allocation8] sm:$0xf]
    %v256 = vld [vmem:[#allocation8 + $0x4] sm:$0xf]
    %v257 = vld [vmem:[#allocation8 + $0x8] sm:$0xf]
    %v258 = vld [vmem:[#allocation8 + $0xc] sm:$0xf]
    %v259 = vld [vmem:[#allocation8 + $0x10] sm:$0xf]
    %v260 = vld [vmem:[#allocation8 + $0x14] sm:$0xf]
    %v261 = vld [vmem:[#allocation8 + $0x18] sm:$0xf]
    %v262 = vld [vmem:[#allocation8 + $0x1c] sm:$0xf]
    %v263 = vld [vmem:[#allocation8 + $0x20] sm:$0xf]
    %v264 = vld [vmem:[#allocation8 + $0x24] sm:$0xf]
    %v265 = vld [vmem:[#allocation8 + $0x28] sm:$0xf]
    %v266 = vld [vmem:[#allocation8 + $0x2c] sm:$0xf]
    %v267 = vld [vmem:[#allocation8 + $0x30] sm:$0xf]
    %v268 = vld [vmem:[#allocation8 + $0x34] sm:$0xf]
    %v269 = vld [vmem:[#allocation8 + $0x38] sm:$0xf]
    %v270 = vld [vmem:[#allocation8 + $0x3c] sm:$0xf]
    %v271 = vld [vmem:[#allocation8 + $0x40] sm:$0xf]
    %v272 = vld [vmem:[#allocation8 + $0x44] sm:$0xf]
    %v273 = vld [vmem:[#allocation8 + $0x48] sm:$0xf]
    %v274 = vld [vmem:[#allocation8 + $0x4c] sm:$0xf]
    %v275 = vld [vmem:[#allocation8 + $0x50] sm:$0xf]
    %v276 = vld [vmem:[#allocation8 + $0x54] sm:$0xf]
    %v277 = vld [vmem:[#allocation8 + $0x58] sm:$0xf]
    %v278 = vld [vmem:[#allocation8 + $0x5c] sm:$0xf]
    %v279 = vld [vmem:[#allocation8 + $0x60] sm:$0xf]
    %v280 = vld [vmem:[#allocation8 + $0x64] sm:$0xf]
    %v281 = vld [vmem:[#allocation8 + $0x68] sm:$0xf]
    %v282 = vld [vmem:[#allocation8 + $0x6c] sm:$0xf]
    %v283 = vld [vmem:[#allocation8 + $0x70] sm:$0xf]
    %v284 = vld [vmem:[#allocation8 + $0x74] sm:$0xf]
    %v285 = vld [vmem:[#allocation8 + $0x78] sm:$0xf]
    %v286 = vld [vmem:[#allocation8 + $0x7c] sm:$0xf]
    %v287 = vld [vmem:[#allocation8 + $0x80] sm:$0xf]
    %v288 = vld [vmem:[#allocation8 + $0x84] sm:$0xf]
    %v289 = vld [vmem:[#allocation8 + $0x88] sm:$0xf]
    %v290 = vld [vmem:[#allocation8 + $0x8c] sm:$0xf]
    %v291 = vld [vmem:[#allocation8 + $0x90] sm:$0xf]
    %v292 = vld [vmem:[#allocation8 + $0x94] sm:$0xf]
    %v293 = vld [vmem:[#allocation8 + $0x98] sm:$0xf]
    %v294 = vld [vmem:[#allocation8 + $0x9c] sm:$0xf]
    %v295 = vld [vmem:[#allocation8 + $0xa0] sm:$0xf]
    %v296 = vld [vmem:[#allocation8 + $0xa4] sm:$0xf]
    %v297 = vld [vmem:[#allocation8 + $0xa8] sm:$0xf]
    %v298 = vld [vmem:[#allocation8 + $0xac] sm:$0xf]
    %v299 = vld [vmem:[#allocation8 + $0xb0] sm:$0xf]
    %v300 = vld [vmem:[#allocation8 + $0xb4] sm:$0xf]
    %v301 = vld [vmem:[#allocation8 + $0xb8] sm:$0xf]
    %v302 = vld [vmem:[#allocation8 + $0xbc] sm:$0xf]
    %v303 = vld [vmem:[#allocation8 + $0xc0] sm:$0xf]
    %v304 = vld [vmem:[#allocation8 + $0xc4] sm:$0xf]
    %v305 = vld [vmem:[#allocation8 + $0xc8] sm:$0xf]
    %v306 = vld [vmem:[#allocation8 + $0xcc] sm:$0xf]
    %v307 = vld [vmem:[#allocation8 + $0xd0] sm:$0xf]
    %v308 = vld [vmem:[#allocation8 + $0xd4] sm:$0xf]
    %v309 = vld [vmem:[#allocation8 + $0xd8] sm:$0xf]
    %v310 = vld [vmem:[#allocation8 + $0xdc] sm:$0xf]
    %v311 = vld [vmem:[#allocation8 + $0xe0] sm:$0xf]
    %v312 = vld [vmem:[#allocation8 + $0xe4] sm:$0xf]
    %v313 = vld [vmem:[#allocation8 + $0xe8] sm:$0xf]
    %v314 = vld [vmem:[#allocation8 + $0xec] sm:$0xf]
    %v315 = vld [vmem:[#allocation8 + $0xf0] sm:$0xf]
    %v316 = vld [vmem:[#allocation8 + $0xf4] sm:$0xf]
    %v317 = vld [vmem:[#allocation8 + $0xf8] sm:$0xf]
    %v318 = vld [vmem:[#allocation8 + $0xfc] sm:$0xf]
    %v319 = vld [vmem:[#allocation8 + $0x100] sm:$0xf]
    %v320 = vld [vmem:[#allocation8 + $0x104] sm:$0xf]
    %v321 = vld [vmem:[#allocation8 + $0x108] sm:$0xf]
    %v322 = vld [vmem:[#allocation8 + $0x10c] sm:$0xf]
    %v323 = vld [vmem:[#allocation8 + $0x110] sm:$0xf]
    %v324 = vld [vmem:[#allocation8 + $0x114] sm:$0xf]
    %v325 = vld [vmem:[#allocation8 + $0x118] sm:$0xf]
    %v326 = vld [vmem:[#allocation8 + $0x11c] sm:$0xf]
    %v327 = vld [vmem:[#allocation8 + $0x120] sm:$0xf]
    %v328 = vld [vmem:[#allocation8 + $0x124] sm:$0xf]
    %v329 = vld [vmem:[#allocation8 + $0x128] sm:$0xf]
    %v330 = vld [vmem:[#allocation8 + $0x12c] sm:$0xf]
    %v331 = vld [vmem:[#allocation8 + $0x130] sm:$0xf]
    %v332 = vld [vmem:[#allocation8 + $0x134] sm:$0xf]
    %v333 = vld [vmem:[#allocation8 + $0x138] sm:$0xf]
    %v334 = vld [vmem:[#allocation8 + $0x13c] sm:$0xf]
    %v335 = vld [vmem:[#allocation8 + $0x140] sm:$0xf]
    %v336 = vld [vmem:[#allocation8 + $0x144] sm:$0xf]
    %v337 = vld [vmem:[#allocation8 + $0x148] sm:$0xf]
    %v338 = vld [vmem:[#allocation8 + $0x14c] sm:$0xf]
    %v339 = vld [vmem:[#allocation8 + $0x150] sm:$0xf]
    %v340 = vld [vmem:[#allocation8 + $0x154] sm:$0xf]
    %v341 = vld [vmem:[#allocation8 + $0x158] sm:$0xf]
    %v342 = vld [vmem:[#allocation8 + $0x15c] sm:$0xf]
    %v343 = vld [vmem:[#allocation8 + $0x160] sm:$0xf]
    %v344 = vld [vmem:[#allocation8 + $0x164] sm:$0xf]
    %v345 = vld [vmem:[#allocation8 + $0x168] sm:$0xf]
    %v346 = vld [vmem:[#allocation8 + $0x16c] sm:$0xf]
    %v347 = vld [vmem:[#allocation8 + $0x170] sm:$0xf]
    %v348 = vld [vmem:[#allocation8 + $0x174] sm:$0xf]
    %v349 = vld [vmem:[#allocation8 + $0x178] sm:$0xf]
    %v350 = vld [vmem:[#allocation8 + $0x17c] sm:$0xf]
    %v351 = vld [vmem:[#allocation8 + $0x180] sm:$0xf]
    %v352 = vld [vmem:[#allocation8 + $0x184] sm:$0xf]
    %v353 = vld [vmem:[#allocation8 + $0x188] sm:$0xf]
    %v354 = vld [vmem:[#allocation8 + $0x18c] sm:$0xf]
    %v355 = vld [vmem:[#allocation8 + $0x190] sm:$0xf]
    %v356 = vld [vmem:[#allocation8 + $0x194] sm:$0xf]
    %v357 = vld [vmem:[#allocation8 + $0x198] sm:$0xf]
    %v358 = vld [vmem:[#allocation8 + $0x19c] sm:$0xf]
    %v359 = vld [vmem:[#allocation8 + $0x1a0] sm:$0xf]
    %v360 = vld [vmem:[#allocation8 + $0x1a4] sm:$0xf]
    %v361 = vld [vmem:[#allocation8 + $0x1a8] sm:$0xf]
    %v362 = vld [vmem:[#allocation8 + $0x1ac] sm:$0xf]
    %v363 = vld [vmem:[#allocation8 + $0x1b0] sm:$0xf]
    %v364 = vld [vmem:[#allocation8 + $0x1b4] sm:$0xf]
    %v365 = vld [vmem:[#allocation8 + $0x1b8] sm:$0xf]
    %v366 = vld [vmem:[#allocation8 + $0x1bc] sm:$0xf]
    %v367 = vld [vmem:[#allocation8 + $0x1c0] sm:$0xf]
    %v368 = vld [vmem:[#allocation8 + $0x1c4] sm:$0xf]
    %v369 = vld [vmem:[#allocation8 + $0x1c8] sm:$0xf]
    %v370 = vld [vmem:[#allocation8 + $0x1cc] sm:$0xf]
    %v371 = vld [vmem:[#allocation8 + $0x1d0] sm:$0xf]
    %v372 = vld [vmem:[#allocation8 + $0x1d4] sm:$0xf]
    %v373 = vld [vmem:[#allocation8 + $0x1d8] sm:$0xf]
    %v374 = vld [vmem:[#allocation8 + $0x1dc] sm:$0xf]
    %v375 = vld [vmem:[#allocation8 + $0x1e0] sm:$0xf]
    %v376 = vld [vmem:[#allocation8 + $0x1e4] sm:$0xf]
    %v377 = vld [vmem:[#allocation8 + $0x1e8] sm:$0xf]
    %v378 = vld [vmem:[#allocation8 + $0x1ec] sm:$0xf]
    %v379 = vld [vmem:[#allocation8 + $0x1f0] sm:$0xf]
    %v380 = vld [vmem:[#allocation8 + $0x1f4] sm:$0xf]
    %v381 = vld [vmem:[#allocation8 + $0x1f8] sm:$0xf]
    %v382 = vld [vmem:[#allocation8 + $0x1fc] sm:$0xf]
    %v383 = vld [vmem:[#allocation10] sm:$0xff]
    %v384 = vld [vmem:[#allocation10 + $0x8] sm:$0xff]
    %v385 = vld [vmem:[#allocation10 + $0x10] sm:$0xff]
    %v386 = vld [vmem:[#allocation10 + $0x18] sm:$0xff]
    %v387 = vld [vmem:[#allocation10 + $0x20] sm:$0xff]
    %v388 = vld [vmem:[#allocation10 + $0x28] sm:$0xff]
    %v389 = vld [vmem:[#allocation10 + $0x30] sm:$0xff]
    %v390 = vld [vmem:[#allocation10 + $0x38] sm:$0xff]
    %v391 = vld [vmem:[#allocation10 + $0x40] sm:$0xff]
    %v392 = vld [vmem:[#allocation10 + $0x48] sm:$0xff]
    %v393 = vld [vmem:[#allocation10 + $0x50] sm:$0xff]
    %v394 = vld [vmem:[#allocation10 + $0x58] sm:$0xff]
    %v395 = vld [vmem:[#allocation10 + $0x60] sm:$0xff]
    %v396 = vld [vmem:[#allocation10 + $0x68] sm:$0xff]
    %v397 = vld [vmem:[#allocation10 + $0x70] sm:$0xff]
    %v398 = vld [vmem:[#allocation10 + $0x78] sm:$0xff]
    %v399 = vld [vmem:[#allocation10 + $0x80] sm:$0xff]
    %v400 = vld [vmem:[#allocation10 + $0x88] sm:$0xff]
    %v401 = vld [vmem:[#allocation10 + $0x90] sm:$0xff]
    %v402 = vld [vmem:[#allocation10 + $0x98] sm:$0xff]
    %v403 = vld [vmem:[#allocation10 + $0xa0] sm:$0xff]
    %v404 = vld [vmem:[#allocation10 + $0xa8] sm:$0xff]
    %v405 = vld [vmem:[#allocation10 + $0xb0] sm:$0xff]
    %v406 = vld [vmem:[#allocation10 + $0xb8] sm:$0xff]
    %v407 = vld [vmem:[#allocation10 + $0xc0] sm:$0xff]
    %v408 = vld [vmem:[#allocation10 + $0xc8] sm:$0xff]
    %v409 = vld [vmem:[#allocation10 + $0xd0] sm:$0xff]
    %v410 = vld [vmem:[#allocation10 + $0xd8] sm:$0xff]
    %v411 = vld [vmem:[#allocation10 + $0xe0] sm:$0xff]
    %v412 = vld [vmem:[#allocation10 + $0xe8] sm:$0xff]
    %v413 = vld [vmem:[#allocation10 + $0xf0] sm:$0xff]
    %v414 = vld [vmem:[#allocation10 + $0xf8] sm:$0xff]
    %v415 = vld [vmem:[#allocation10 + $0x100] sm:$0xff]
    %v416 = vld [vmem:[#allocation10 + $0x108] sm:$0xff]
    %v417 = vld [vmem:[#allocation10 + $0x110] sm:$0xff]
    %v418 = vld [vmem:[#allocation10 + $0x118] sm:$0xff]
    %v419 = vld [vmem:[#allocation10 + $0x120] sm:$0xff]
    %v420 = vld [vmem:[#allocation10 + $0x128] sm:$0xff]
    %v421 = vld [vmem:[#allocation10 + $0x130] sm:$0xff]
    %v422 = vld [vmem:[#allocation10 + $0x138] sm:$0xff]
    %v423 = vld [vmem:[#allocation10 + $0x140] sm:$0xff]
    %v424 = vld [vmem:[#allocation10 + $0x148] sm:$0xff]
    %v425 = vld [vmem:[#allocation10 + $0x150] sm:$0xff]
    %v426 = vld [vmem:[#allocation10 + $0x158] sm:$0xff]
    %v427 = vld [vmem:[#allocation10 + $0x160] sm:$0xff]
    %v428 = vld [vmem:[#allocation10 + $0x168] sm:$0xff]
    %v429 = vld [vmem:[#allocation10 + $0x170] sm:$0xff]
    %v430 = vld [vmem:[#allocation10 + $0x178] sm:$0xff]
    %v431 = vld [vmem:[#allocation10 + $0x180] sm:$0xff]
    %v432 = vld [vmem:[#allocation10 + $0x188] sm:$0xff]
    %v433 = vld [vmem:[#allocation10 + $0x190] sm:$0xff]
    %v434 = vld [vmem:[#allocation10 + $0x198] sm:$0xff]
    %v435 = vld [vmem:[#allocation10 + $0x1a0] sm:$0xff]
    %v436 = vld [vmem:[#allocation10 + $0x1a8] sm:$0xff]
    %v437 = vld [vmem:[#allocation10 + $0x1b0] sm:$0xff]
    %v438 = vld [vmem:[#allocation10 + $0x1b8] sm:$0xff]
    %v439 = vld [vmem:[#allocation10 + $0x1c0] sm:$0xff]
    %v440 = vld [vmem:[#allocation10 + $0x1c8] sm:$0xff]
    %v441 = vld [vmem:[#allocation10 + $0x1d0] sm:$0xff]
    %v442 = vld [vmem:[#allocation10 + $0x1d8] sm:$0xff]
    %v443 = vld [vmem:[#allocation10 + $0x1e0] sm:$0xff]
    %v444 = vld [vmem:[#allocation10 + $0x1e8] sm:$0xff]
    %v445 = vld [vmem:[#allocation10 + $0x1f0] sm:$0xff]
    %v446 = vld [vmem:[#allocation10 + $0x1f8] sm:$0xff]
    %v447 = vld [vmem:[#allocation10 + $0x200] sm:$0xff]
    %v448 = vld [vmem:[#allocation10 + $0x208] sm:$0xff]
    %v449 = vld [vmem:[#allocation10 + $0x210] sm:$0xff]
    %v450 = vld [vmem:[#allocation10 + $0x218] sm:$0xff]
    %v451 = vld [vmem:[#allocation10 + $0x220] sm:$0xff]
    %v452 = vld [vmem:[#allocation10 + $0x228] sm:$0xff]
    %v453 = vld [vmem:[#allocation10 + $0x230] sm:$0xff]
    %v454 = vld [vmem:[#allocation10 + $0x238] sm:$0xff]
    %v455 = vld [vmem:[#allocation10 + $0x240] sm:$0xff]
    %v456 = vld [vmem:[#allocation10 + $0x248] sm:$0xff]
    %v457 = vld [vmem:[#allocation10 + $0x250] sm:$0xff]
    %v458 = vld [vmem:[#allocation10 + $0x258] sm:$0xff]
    %v459 = vld [vmem:[#allocation10 + $0x260] sm:$0xff]
    %v460 = vld [vmem:[#allocation10 + $0x268] sm:$0xff]
    %v461 = vld [vmem:[#allocation10 + $0x270] sm:$0xff]
    %v462 = vld [vmem:[#allocation10 + $0x278] sm:$0xff]
    %v463 = vld [vmem:[#allocation10 + $0x280] sm:$0xff]
    %v464 = vld [vmem:[#allocation10 + $0x288] sm:$0xff]
    %v465 = vld [vmem:[#allocation10 + $0x290] sm:$0xff]
    %v466 = vld [vmem:[#allocation10 + $0x298] sm:$0xff]
    %v467 = vld [vmem:[#allocation10 + $0x2a0] sm:$0xff]
    %v468 = vld [vmem:[#allocation10 + $0x2a8] sm:$0xff]
    %v469 = vld [vmem:[#allocation10 + $0x2b0] sm:$0xff]
    %v470 = vld [vmem:[#allocation10 + $0x2b8] sm:$0xff]
    %v471 = vld [vmem:[#allocation10 + $0x2c0] sm:$0xff]
    %v472 = vld [vmem:[#allocation10 + $0x2c8] sm:$0xff]
    %v473 = vld [vmem:[#allocation10 + $0x2d0] sm:$0xff]
    %v474 = vld [vmem:[#allocation10 + $0x2d8] sm:$0xff]
    %v475 = vld [vmem:[#allocation10 + $0x2e0] sm:$0xff]
    %v476 = vld [vmem:[#allocation10 + $0x2e8] sm:$0xff]
    %v477 = vld [vmem:[#allocation10 + $0x2f0] sm:$0xff]
    %v478 = vld [vmem:[#allocation10 + $0x2f8] sm:$0xff]
    %v479 = vld [vmem:[#allocation10 + $0x300] sm:$0xff]
    %v480 = vld [vmem:[#allocation10 + $0x308] sm:$0xff]
    %v481 = vld [vmem:[#allocation10 + $0x310] sm:$0xff]
    %v482 = vld [vmem:[#allocation10 + $0x318] sm:$0xff]
    %v483 = vld [vmem:[#allocation10 + $0x320] sm:$0xff]
    %v484 = vld [vmem:[#allocation10 + $0x328] sm:$0xff]
    %v485 = vld [vmem:[#allocation10 + $0x330] sm:$0xff]
    %v486 = vld [vmem:[#allocation10 + $0x338] sm:$0xff]
    %v487 = vld [vmem:[#allocation10 + $0x340] sm:$0xff]
    %v488 = vld [vmem:[#allocation10 + $0x348] sm:$0xff]
    %v489 = vld [vmem:[#allocation10 + $0x350] sm:$0xff]
    %v490 = vld [vmem:[#allocation10 + $0x358] sm:$0xff]
    %v491 = vld [vmem:[#allocation10 + $0x360] sm:$0xff]
    %v492 = vld [vmem:[#allocation10 + $0x368] sm:$0xff]
    %v493 = vld [vmem:[#allocation10 + $0x370] sm:$0xff]
    %v494 = vld [vmem:[#allocation10 + $0x378] sm:$0xff]
    %v495 = vld [vmem:[#allocation10 + $0x380] sm:$0xff]
    %v496 = vld [vmem:[#allocation10 + $0x388] sm:$0xff]
    %v497 = vld [vmem:[#allocation10 + $0x390] sm:$0xff]
    %v498 = vld [vmem:[#allocation10 + $0x398] sm:$0xff]
    %v499 = vld [vmem:[#allocation10 + $0x3a0] sm:$0xff]
    %v500 = vld [vmem:[#allocation10 + $0x3a8] sm:$0xff]
    %v501 = vld [vmem:[#allocation10 + $0x3b0] sm:$0xff]
    %v502 = vld [vmem:[#allocation10 + $0x3b8] sm:$0xff]
    %v503 = vld [vmem:[#allocation10 + $0x3c0] sm:$0xff]
    %v504 = vld [vmem:[#allocation10 + $0x3c8] sm:$0xff]
    %v505 = vld [vmem:[#allocation10 + $0x3d0] sm:$0xff]
    %v506 = vld [vmem:[#allocation10 + $0x3d8] sm:$0xff]
    %v507 = vld [vmem:[#allocation10 + $0x3e0] sm:$0xff]
    %v508 = vld [vmem:[#allocation10 + $0x3e8] sm:$0xff]
    %v509 = vld [vmem:[#allocation10 + $0x3f0] sm:$0xff]
    %v510 = vld [vmem:[#allocation10 + $0x3f8] sm:$0xff]
    %v511 = vld [vmem:[#allocation11] sm:$0xff]
    %v512 = vld [vmem:[#allocation11 + $0x8] sm:$0xff]
    %v513 = vld [vmem:[#allocation11 + $0x10] sm:$0xff]
    %v514 = vld [vmem:[#allocation11 + $0x18] sm:$0xff]
    %v515 = vld [vmem:[#allocation11 + $0x20] sm:$0xff]
    %v516 = vld [vmem:[#allocation11 + $0x28] sm:$0xff]
    %v517 = vld [vmem:[#allocation11 + $0x30] sm:$0xff]
    %v518 = vld [vmem:[#allocation11 + $0x38] sm:$0xff]
    %v527 = vunpack.c.l.b16 %v127
    %v528 = vunpack.c.l.b16 %v128
    %v529 = vunpack.c.l.b16 %v129
    %v530 = vunpack.c.l.b16 %v130
    %v531 = vunpack.c.l.b16 %v131
    %v532 = vunpack.c.l.b16 %v132
    %v533 = vunpack.c.l.b16 %v133
    %v534 = vunpack.c.l.b16 %v134
    %v535 = vpack.c.b16 %v528, %v527
    %v536 = vpack.c.b16 %v530, %v529
    %v537 = vpack.c.b16 %v532, %v531
    %v538 = vpack.c.b16 %v534, %v533
    %vm543 = vcmask 523264
    %v545 = vsel %vm543, %v111, 0
    %547 = vmatprep.subr.bf16.mxu0 0
    %548 = vmatpush1.bf16.msra.mxu0 %v535
    %549 = vmatprep.subr.bf16.mxu0 0
    %550 = vmatpush1.bf16.msra.mxu0 %v536
    %551 = vmatprep.subr.bf16.mxu0 0
    %552 = vmatpush1.bf16.msra.mxu0 %v537
    %553 = vmatprep.subr.bf16.mxu0 0
    %554 = vmatpush1.bf16.msra.mxu0 %v538
    %555 = vmatprep.subr.bf16.mxu0 0
    %556 = vmatpush1.bf16.msra.mxu0 0
    %557 = vmatprep.subr.bf16.mxu0 0
    %558 = vmatpush1.bf16.msra.mxu0 0
    %559 = vmatprep.subr.bf16.mxu0 0
    %560 = vmatpush1.bf16.msra.mxu0 0
    %561 = vmatprep.subr.bf16.mxu0 0
    %562 = vmatpush1.bf16.msra.mxu0 0
    %563 = vmatprep.subr.bf16.mxu0 0
    %564 = vmatpush1.bf16.msra.mxu0 0
    %565 = vmatprep.subr.bf16.mxu0 0
    %566 = vmatpush1.bf16.msra.mxu0 0
    %567 = vmatprep.subr.bf16.mxu0 0
    %568 = vmatpush1.bf16.msra.mxu0 0
    %569 = vmatprep.subr.bf16.mxu0 0
    %570 = vmatpush1.bf16.msra.mxu0 0
    %571 = vmatprep.subr.bf16.mxu0 0
    %572 = vmatpush1.bf16.msra.mxu0 0
    %573 = vmatprep.subr.bf16.mxu0 0
    %574 = vmatpush1.bf16.msra.mxu0 0
    %575 = vmatprep.subr.bf16.mxu0 0
    %576 = vmatpush1.bf16.msra.mxu0 0
    %577 = vmatprep.subr.bf16.mxu0 0
    %578 = vmatpush1.bf16.msra.mxu0 0
    %579 = vmatprep.mubr.bf16.mxu0 0
    %580 = vmatmul.mubr.bf16.gmra.mrb[0].mxu0 %v545
    %v581 = vpop.f32.mrb[0].mxu0
    %v582 = vadd.f32 0.0, %v581
    %v583 = vpop.f32.mrb[0].mxu0
    %v584 = vpop.f32.mrb[0].mxu0
    %v585 = vpop.f32.mrb[0].mxu0
    %586 = vdwg.mxu0
    %v595 = vunpack.c.l.b16 %v135
    %v596 = vunpack.c.l.b16 %v136
    %v597 = vunpack.c.l.b16 %v137
    %v598 = vunpack.c.l.b16 %v138
    %v599 = vunpack.c.l.b16 %v139
    %v600 = vunpack.c.l.b16 %v140
    %v601 = vunpack.c.l.b16 %v141
    %v602 = vunpack.c.l.b16 %v142
    %v603 = vpack.c.b16 %v596, %v595
    %v604 = vpack.c.b16 %v598, %v597
    %v605 = vpack.c.b16 %v600, %v599
    %v606 = vpack.c.b16 %v602, %v601
    %v612 = vsel %vm543, %v112, 0
    %614 = vmatprep.subr.bf16.mxu0 0
    %615 = vmatpush1.bf16.msra.mxu0 %v603
    %616 = vmatprep.subr.bf16.mxu0 0
    %617 = vmatpush1.bf16.msra.mxu0 %v604
    %618 = vmatprep.subr.bf16.mxu0 0
    %619 = vmatpush1.bf16.msra.mxu0 %v605
    %620 = vmatprep.subr.bf16.mxu0 0
    %621 = vmatpush1.bf16.msra.mxu0 %v606
    %622 = vmatprep.subr.bf16.mxu0 0
    %623 = vmatpush1.bf16.msra.mxu0 0
    %624 = vmatprep.subr.bf16.mxu0 0
    %625 = vmatpush1.bf16.msra.mxu0 0
    %626 = vmatprep.subr.bf16.mxu0 0
    %627 = vmatpush1.bf16.msra.mxu0 0
    %628 = vmatprep.subr.bf16.mxu0 0
    %629 = vmatpush1.bf16.msra.mxu0 0
    %630 = vmatprep.subr.bf16.mxu0 0
    %631 = vmatpush1.bf16.msra.mxu0 0
    %632 = vmatprep.subr.bf16.mxu0 0
    %633 = vmatpush1.bf16.msra.mxu0 0
    %634 = vmatprep.subr.bf16.mxu0 0
    %635 = vmatpush1.bf16.msra.mxu0 0
    %636 = vmatprep.subr.bf16.mxu0 0
    %637 = vmatpush1.bf16.msra.mxu0 0
    %638 = vmatprep.subr.bf16.mxu0 0
    %639 = vmatpush1.bf16.msra.mxu0 0
    %640 = vmatprep.subr.bf16.mxu0 0
    %641 = vmatpush1.bf16.msra.mxu0 0
    %642 = vmatprep.subr.bf16.mxu0 0
    %643 = vmatpush1.bf16.msra.mxu0 0
    %644 = vmatprep.subr.bf16.mxu0 0
    %645 = vmatpush1.bf16.msra.mxu0 0
    %646 = vmatprep.mubr.bf16.mxu0 0
    %647 = vmatmul.mubr.bf16.gmra.mrb[0].mxu0 %v612
    %v648 = vpop.f32.mrb[0].mxu0
    %v649 = vadd.f32 0.0, %v648
    %v650 = vpop.f32.mrb[0].mxu0
    %v651 = vpop.f32.mrb[0].mxu0
    %v652 = vpop.f32.mrb[0].mxu0
    %653 = vdwg.mxu0
    %v662 = vunpack.c.l.b16 %v143
    %v663 = vunpack.c.l.b16 %v144
    %v664 = vunpack.c.l.b16 %v145
    %v665 = vunpack.c.l.b16 %v146
    %v666 = vunpack.c.l.b16 %v147
    %v667 = vunpack.c.l.b16 %v148
    %v668 = vunpack.c.l.b16 %v149
    %v669 = vunpack.c.l.b16 %v150
    %v670 = vpack.c.b16 %v663, %v662
    %v671 = vpack.c.b16 %v665, %v664
    %v672 = vpack.c.b16 %v667, %v666
    %v673 = vpack.c.b16 %v669, %v668
    %v679 = vsel %vm543, %v113, 0
    %681 = vmatprep.subr.bf16.mxu0 0
    %682 = vmatpush1.bf16.msra.mxu0 %v670
    %683 = vmatprep.subr.bf16.mxu0 0
    %684 = vmatpush1.bf16.msra.mxu0 %v671
    %685 = vmatprep.subr.bf16.mxu0 0
    %686 = vmatpush1.bf16.msra.mxu0 %v672
    %687 = vmatprep.subr.bf16.mxu0 0
    %688 = vmatpush1.bf16.msra.mxu0 %v673
    %689 = vmatprep.subr.bf16.mxu0 0
    %690 = vmatpush1.bf16.msra.mxu0 0
    %691 = vmatprep.subr.bf16.mxu0 0
    %692 = vmatpush1.bf16.msra.mxu0 0
    %693 = vmatprep.subr.bf16.mxu0 0
    %694 = vmatpush1.bf16.msra.mxu0 0
    %695 = vmatprep.subr.bf16.mxu0 0
    %696 = vmatpush1.bf16.msra.mxu0 0
    %697 = vmatprep.subr.bf16.mxu0 0
    %698 = vmatpush1.bf16.msra.mxu0 0
    %699 = vmatprep.subr.bf16.mxu0 0
    %700 = vmatpush1.bf16.msra.mxu0 0
    %701 = vmatprep.subr.bf16.mxu0 0
    %702 = vmatpush1.bf16.msra.mxu0 0
    %703 = vmatprep.subr.bf16.mxu0 0
    %704 = vmatpush1.bf16.msra.mxu0 0
    %705 = vmatprep.subr.bf16.mxu0 0
    %706 = vmatpush1.bf16.msra.mxu0 0
    %707 = vmatprep.subr.bf16.mxu0 0
    %708 = vmatpush1.bf16.msra.mxu0 0
    %709 = vmatprep.subr.bf16.mxu0 0
    %710 = vmatpush1.bf16.msra.mxu0 0
    %711 = vmatprep.subr.bf16.mxu0 0
    %712 = vmatpush1.bf16.msra.mxu0 0
    %713 = vmatprep.mubr.bf16.mxu0 0
    %714 = vmatmul.mubr.bf16.gmra.mrb[0].mxu0 %v679
    %v715 = vpop.f32.mrb[0].mxu0
    %v716 = vadd.f32 0.0, %v715
    %v717 = vpop.f32.mrb[0].mxu0
    %v718 = vpop.f32.mrb[0].mxu0
    %v719 = vpop.f32.mrb[0].mxu0
    %720 = vdwg.mxu0
    %v729 = vunpack.c.l.b16 %v151
    %v730 = vunpack.c.l.b16 %v152
    %v731 = vunpack.c.l.b16 %v153
    %v732 = vunpack.c.l.b16 %v154
    %v733 = vunpack.c.l.b16 %v155
    %v734 = vunpack.c.l.b16 %v156
    %v735 = vunpack.c.l.b16 %v157
    %v736 = vunpack.c.l.b16 %v158
    %v737 = vpack.c.b16 %v730, %v729
    %v738 = vpack.c.b16 %v732, %v731
    %v739 = vpack.c.b16 %v734, %v733
    %v740 = vpack.c.b16 %v736, %v735
    %v746 = vsel %vm543, %v114, 0
    %748 = vmatprep.subr.bf16.mxu0 0
    %749 = vmatpush1.bf16.msra.mxu0 %v737
    %750 = vmatprep.subr.bf16.mxu0 0
    %751 = vmatpush1.bf16.msra.mxu0 %v738
    %752 = vmatprep.subr.bf16.mxu0 0
    %753 = vmatpush1.bf16.msra.mxu0 %v739
    %754 = vmatprep.subr.bf16.mxu0 0
    %755 = vmatpush1.bf16.msra.mxu0 %v740
    %756 = vmatprep.subr.bf16.mxu0 0
    %757 = vmatpush1.bf16.msra.mxu0 0
    %758 = vmatprep.subr.bf16.mxu0 0
    %759 = vmatpush1.bf16.msra.mxu0 0
    %760 = vmatprep.subr.bf16.mxu0 0
    %761 = vmatpush1.bf16.msra.mxu0 0
    %762 = vmatprep.subr.bf16.mxu0 0
    %763 = vmatpush1.bf16.msra.mxu0 0
    %764 = vmatprep.subr.bf16.mxu0 0
    %765 = vmatpush1.bf16.msra.mxu0 0
    %766 = vmatprep.subr.bf16.mxu0 0
    %767 = vmatpush1.bf16.msra.mxu0 0
    %768 = vmatprep.subr.bf16.mxu0 0
    %769 = vmatpush1.bf16.msra.mxu0 0
    %770 = vmatprep.subr.bf16.mxu0 0
    %771 = vmatpush1.bf16.msra.mxu0 0
    %772 = vmatprep.subr.bf16.mxu0 0
    %773 = vmatpush1.bf16.msra.mxu0 0
    %774 = vmatprep.subr.bf16.mxu0 0
    %775 = vmatpush1.bf16.msra.mxu0 0
    %776 = vmatprep.subr.bf16.mxu0 0
    %777 = vmatpush1.bf16.msra.mxu0 0
    %778 = vmatprep.subr.bf16.mxu0 0
    %779 = vmatpush1.bf16.msra.mxu0 0
    %780 = vmatprep.mubr.bf16.mxu0 0
    %781 = vmatmul.mubr.bf16.gmra.mrb[0].mxu0 %v746
    %v782 = vpop.f32.mrb[0].mxu0
    %v783 = vadd.f32 0.0, %v782
    %v784 = vpop.f32.mrb[0].mxu0
    %v785 = vpop.f32.mrb[0].mxu0
    %v786 = vpop.f32.mrb[0].mxu0
    %787 = vdwg.mxu0
    %v796 = vunpack.c.l.b16 %v159
    %v797 = vunpack.c.l.b16 %v160
    %v798 = vunpack.c.l.b16 %v161
    %v799 = vunpack.c.l.b16 %v162
    %v800 = vunpack.c.l.b16 %v163
    %v801 = vunpack.c.l.b16 %v164
    %v802 = vunpack.c.l.b16 %v165
    %v803 = vunpack.c.l.b16 %v166
    %v804 = vpack.c.b16 %v797, %v796
    %v805 = vpack.c.b16 %v799, %v798
    %v806 = vpack.c.b16 %v801, %v800
    %v807 = vpack.c.b16 %v803, %v802
    %v813 = vsel %vm543, %v115, 0
    %815 = vmatprep.subr.bf16.mxu0 0
    %816 = vmatpush1.bf16.msra.mxu0 %v804
    %817 = vmatprep.subr.bf16.mxu0 0
    %818 = vmatpush1.bf16.msra.mxu0 %v805
    %819 = vmatprep.subr.bf16.mxu0 0
    %820 = vmatpush1.bf16.msra.mxu0 %v806
    %821 = vmatprep.subr.bf16.mxu0 0
    %822 = vmatpush1.bf16.msra.mxu0 %v807
    %823 = vmatprep.subr.bf16.mxu0 0
    %824 = vmatpush1.bf16.msra.mxu0 0
    %825 = vmatprep.subr.bf16.mxu0 0
    %826 = vmatpush1.bf16.msra.mxu0 0
    %827 = vmatprep.subr.bf16.mxu0 0
    %828 = vmatpush1.bf16.msra.mxu0 0
    %829 = vmatprep.subr.bf16.mxu0 0
    %830 = vmatpush1.bf16.msra.mxu0 0
    %831 = vmatprep.subr.bf16.mxu0 0
    %832 = vmatpush1.bf16.msra.mxu0 0
    %833 = vmatprep.subr.bf16.mxu0 0
    %834 = vmatpush1.bf16.msra.mxu0 0
    %835 = vmatprep.subr.bf16.mxu0 0
    %836 = vmatpush1.bf16.msra.mxu0 0
    %837 = vmatprep.subr.bf16.mxu0 0
    %838 = vmatpush1.bf16.msra.mxu0 0
    %839 = vmatprep.subr.bf16.mxu0 0
    %840 = vmatpush1.bf16.msra.mxu0 0
    %841 = vmatprep.subr.bf16.mxu0 0
    %842 = vmatpush1.bf16.msra.mxu0 0
    %843 = vmatprep.subr.bf16.mxu0 0
    %844 = vmatpush1.bf16.msra.mxu0 0
    %845 = vmatprep.subr.bf16.mxu0 0
    %846 = vmatpush1.bf16.msra.mxu0 0
    %847 = vmatprep.mubr.bf16.mxu0 0
    %848 = vmatmul.mubr.bf16.gmra.mrb[0].mxu0 %v813
    %v849 = vpop.f32.mrb[0].mxu0
    %v850 = vadd.f32 0.0, %v849
    %v851 = vpop.f32.mrb[0].mxu0
    %v852 = vpop.f32.mrb[0].mxu0
    %v853 = vpop.f32.mrb[0].mxu0
    %854 = vdwg.mxu0
    %v863 = vunpack.c.l.b16 %v167
    %v864 = vunpack.c.l.b16 %v168
    %v865 = vunpack.c.l.b16 %v169
    %v866 = vunpack.c.l.b16 %v170
    %v867 = vunpack.c.l.b16 %v171
    %v868 = vunpack.c.l.b16 %v172
    %v869 = vunpack.c.l.b16 %v173
    %v870 = vunpack.c.l.b16 %v174
    %v871 = vpack.c.b16 %v864, %v863
    %v872 = vpack.c.b16 %v866, %v865
    %v873 = vpack.c.b16 %v868, %v867
    %v874 = vpack.c.b16 %v870, %v869
    %v880 = vsel %vm543, %v116, 0
    %882 = vmatprep.subr.bf16.mxu0 0
    %883 = vmatpush1.bf16.msra.mxu0 %v871
    %884 = vmatprep.subr.bf16.mxu0 0
    %885 = vmatpush1.bf16.msra.mxu0 %v872
    %886 = vmatprep.subr.bf16.mxu0 0
    %887 = vmatpush1.bf16.msra.mxu0 %v873
    %888 = vmatprep.subr.bf16.mxu0 0
    %889 = vmatpush1.bf16.msra.mxu0 %v874
    %890 = vmatprep.subr.bf16.mxu0 0
    %891 = vmatpush1.bf16.msra.mxu0 0
    %892 = vmatprep.subr.bf16.mxu0 0
    %893 = vmatpush1.bf16.msra.mxu0 0
    %894 = vmatprep.subr.bf16.mxu0 0
    %895 = vmatpush1.bf16.msra.mxu0 0
    %896 = vmatprep.subr.bf16.mxu0 0
    %897 = vmatpush1.bf16.msra.mxu0 0
    %898 = vmatprep.subr.bf16.mxu0 0
    %899 = vmatpush1.bf16.msra.mxu0 0
    %900 = vmatprep.subr.bf16.mxu0 0
    %901 = vmatpush1.bf16.msra.mxu0 0
    %902 = vmatprep.subr.bf16.mxu0 0
    %903 = vmatpush1.bf16.msra.mxu0 0
    %904 = vmatprep.subr.bf16.mxu0 0
    %905 = vmatpush1.bf16.msra.mxu0 0
    %906 = vmatprep.subr.bf16.mxu0 0
    %907 = vmatpush1.bf16.msra.mxu0 0
    %908 = vmatprep.subr.bf16.mxu0 0
    %909 = vmatpush1.bf16.msra.mxu0 0
    %910 = vmatprep.subr.bf16.mxu0 0
    %911 = vmatpush1.bf16.msra.mxu0 0
    %912 = vmatprep.subr.bf16.mxu0 0
    %913 = vmatpush1.bf16.msra.mxu0 0
    %914 = vmatprep.mubr.bf16.mxu0 0
    %915 = vmatmul.mubr.bf16.gmra.mrb[0].mxu0 %v880
    %v916 = vpop.f32.mrb[0].mxu0
    %v917 = vadd.f32 0.0, %v916
    %v918 = vpop.f32.mrb[0].mxu0
    %v919 = vpop.f32.mrb[0].mxu0
    %v920 = vpop.f32.mrb[0].mxu0
    %921 = vdwg.mxu0
    %v930 = vunpack.c.l.b16 %v175
    %v931 = vunpack.c.l.b16 %v176
    %v932 = vunpack.c.l.b16 %v177
    %v933 = vunpack.c.l.b16 %v178
    %v934 = vunpack.c.l.b16 %v179
    %v935 = vunpack.c.l.b16 %v180
    %v936 = vunpack.c.l.b16 %v181
    %v937 = vunpack.c.l.b16 %v182
    %v938 = vpack.c.b16 %v931, %v930
    %v939 = vpack.c.b16 %v933, %v932
    %v940 = vpack.c.b16 %v935, %v934
    %v941 = vpack.c.b16 %v937, %v936
    %v947 = vsel %vm543, %v117, 0
    %949 = vmatprep.subr.bf16.mxu0 0
    %950 = vmatpush1.bf16.msra.mxu0 %v938
    %951 = vmatprep.subr.bf16.mxu0 0
    %952 = vmatpush1.bf16.msra.mxu0 %v939
    %953 = vmatprep.subr.bf16.mxu0 0
    %954 = vmatpush1.bf16.msra.mxu0 %v940
    %955 = vmatprep.subr.bf16.mxu0 0
    %956 = vmatpush1.bf16.msra.mxu0 %v941
    %957 = vmatprep.subr.bf16.mxu0 0
    %958 = vmatpush1.bf16.msra.mxu0 0
    %959 = vmatprep.subr.bf16.mxu0 0
    %960 = vmatpush1.bf16.msra.mxu0 0
    %961 = vmatprep.subr.bf16.mxu0 0
    %962 = vmatpush1.bf16.msra.mxu0 0
    %963 = vmatprep.subr.bf16.mxu0 0
    %964 = vmatpush1.bf16.msra.mxu0 0
    %965 = vmatprep.subr.bf16.mxu0 0
    %966 = vmatpush1.bf16.msra.mxu0 0
    %967 = vmatprep.subr.bf16.mxu0 0
    %968 = vmatpush1.bf16.msra.mxu0 0
    %969 = vmatprep.subr.bf16.mxu0 0
    %970 = vmatpush1.bf16.msra.mxu0 0
    %971 = vmatprep.subr.bf16.mxu0 0
    %972 = vmatpush1.bf16.msra.mxu0 0
    %973 = vmatprep.subr.bf16.mxu0 0
    %974 = vmatpush1.bf16.msra.mxu0 0
    %975 = vmatprep.subr.bf16.mxu0 0
    %976 = vmatpush1.bf16.msra.mxu0 0
    %977 = vmatprep.subr.bf16.mxu0 0
    %978 = vmatpush1.bf16.msra.mxu0 0
    %979 = vmatprep.subr.bf16.mxu0 0
    %980 = vmatpush1.bf16.msra.mxu0 0
    %981 = vmatprep.mubr.bf16.mxu0 0
    %982 = vmatmul.mubr.bf16.gmra.mrb[0].mxu0 %v947
    %v983 = vpop.f32.mrb[0].mxu0
    %v984 = vadd.f32 0.0, %v983
    %v985 = vpop.f32.mrb[0].mxu0
    %v986 = vpop.f32.mrb[0].mxu0
    %v987 = vpop.f32.mrb[0].mxu0
    %988 = vdwg.mxu0
    %v997 = vunpack.c.l.b16 %v183
    %v998 = vunpack.c.l.b16 %v184
    %v999 = vunpack.c.l.b16 %v185
    %v1000 = vunpack.c.l.b16 %v186
    %v1001 = vunpack.c.l.b16 %v187
    %v1002 = vunpack.c.l.b16 %v188
    %v1003 = vunpack.c.l.b16 %v189
    %v1004 = vunpack.c.l.b16 %v190
    %v1005 = vpack.c.b16 %v998, %v997
    %v1006 = vpack.c.b16 %v1000, %v999
    %v1007 = vpack.c.b16 %v1002, %v1001
    %v1008 = vpack.c.b16 %v1004, %v1003
    %v1014 = vsel %vm543, %v118, 0
    %1016 = vmatprep.subr.bf16.mxu0 0
    %1017 = vmatpush1.bf16.msra.mxu0 %v1005
    %1018 = vmatprep.subr.bf16.mxu0 0
    %1019 = vmatpush1.bf16.msra.mxu0 %v1006
    %1020 = vmatprep.subr.bf16.mxu0 0
    %1021 = vmatpush1.bf16.msra.mxu0 %v1007
    %1022 = vmatprep.subr.bf16.mxu0 0
    %1023 = vmatpush1.bf16.msra.mxu0 %v1008
    %1024 = vmatprep.subr.bf16.mxu0 0
    %1025 = vmatpush1.bf16.msra.mxu0 0
    %1026 = vmatprep.subr.bf16.mxu0 0
    %1027 = vmatpush1.bf16.msra.mxu0 0
    %1028 = vmatprep.subr.bf16.mxu0 0
    %1029 = vmatpush1.bf16.msra.mxu0 0
    %1030 = vmatprep.subr.bf16.mxu0 0
    %1031 = vmatpush1.bf16.msra.mxu0 0
    %1032 = vmatprep.subr.bf16.mxu0 0
    %1033 = vmatpush1.bf16.msra.mxu0 0
    %1034 = vmatprep.subr.bf16.mxu0 0
    %1035 = vmatpush1.bf16.msra.mxu0 0
    %1036 = vmatprep.subr.bf16.mxu0 0
    %1037 = vmatpush1.bf16.msra.mxu0 0
    %1038 = vmatprep.subr.bf16.mxu0 0
    %1039 = vmatpush1.bf16.msra.mxu0 0
    %1040 = vmatprep.subr.bf16.mxu0 0
    %1041 = vmatpush1.bf16.msra.mxu0 0
    %1042 = vmatprep.subr.bf16.mxu0 0
    %1043 = vmatpush1.bf16.msra.mxu0 0
    %1044 = vmatprep.subr.bf16.mxu0 0
    %1045 = vmatpush1.bf16.msra.mxu0 0
    %1046 = vmatprep.subr.bf16.mxu0 0
    %1047 = vmatpush1.bf16.msra.mxu0 0
    %1048 = vmatprep.mubr.bf16.mxu0 0
    %1049 = vmatmul.mubr.bf16.gmra.mrb[0].mxu0 %v1014
    %v1050 = vpop.f32.mrb[0].mxu0
    %v1051 = vadd.f32 0.0, %v1050
    %v1052 = vpop.f32.mrb[0].mxu0
    %v1053 = vpop.f32.mrb[0].mxu0
    %v1054 = vpop.f32.mrb[0].mxu0
    %1055 = vdwg.mxu0
    %v1064 = vunpack.c.l.b16 %v191
    %v1065 = vunpack.c.l.b16 %v192
    %v1066 = vunpack.c.l.b16 %v193
    %v1067 = vunpack.c.l.b16 %v194
    %v1068 = vunpack.c.l.b16 %v195
    %v1069 = vunpack.c.l.b16 %v196
    %v1070 = vunpack.c.l.b16 %v197
    %v1071 = vunpack.c.l.b16 %v198
    %v1072 = vpack.c.b16 %v1065, %v1064
    %v1073 = vpack.c.b16 %v1067, %v1066
    %v1074 = vpack.c.b16 %v1069, %v1068
    %v1075 = vpack.c.b16 %v1071, %v1070
    %v1081 = vsel %vm543, %v119, 0
    %1083 = vmatprep.subr.bf16.mxu0 0
    %1084 = vmatpush1.bf16.msra.mxu0 %v1072
    %1085 = vmatprep.subr.bf16.mxu0 0
    %1086 = vmatpush1.bf16.msra.mxu0 %v1073
    %1087 = vmatprep.subr.bf16.mxu0 0
    %1088 = vmatpush1.bf16.msra.mxu0 %v1074
    %1089 = vmatprep.subr.bf16.mxu0 0
    %1090 = vmatpush1.bf16.msra.mxu0 %v1075
    %1091 = vmatprep.subr.bf16.mxu0 0
    %1092 = vmatpush1.bf16.msra.mxu0 0
    %1093 = vmatprep.subr.bf16.mxu0 0
    %1094 = vmatpush1.bf16.msra.mxu0 0
    %1095 = vmatprep.subr.bf16.mxu0 0
    %1096 = vmatpush1.bf16.msra.mxu0 0
    %1097 = vmatprep.subr.bf16.mxu0 0
    %1098 = vmatpush1.bf16.msra.mxu0 0
    %1099 = vmatprep.subr.bf16.mxu0 0
    %1100 = vmatpush1.bf16.msra.mxu0 0
    %1101 = vmatprep.subr.bf16.mxu0 0
    %1102 = vmatpush1.bf16.msra.mxu0 0
    %1103 = vmatprep.subr.bf16.mxu0 0
    %1104 = vmatpush1.bf16.msra.mxu0 0
    %1105 = vmatprep.subr.bf16.mxu0 0
    %1106 = vmatpush1.bf16.msra.mxu0 0
    %1107 = vmatprep.subr.bf16.mxu0 0
    %1108 = vmatpush1.bf16.msra.mxu0 0
    %1109 = vmatprep.subr.bf16.mxu0 0
    %1110 = vmatpush1.bf16.msra.mxu0 0
    %1111 = vmatprep.subr.bf16.mxu0 0
    %1112 = vmatpush1.bf16.msra.mxu0 0
    %1113 = vmatprep.subr.bf16.mxu0 0
    %1114 = vmatpush1.bf16.msra.mxu0 0
    %1115 = vmatprep.mubr.bf16.mxu0 0
    %1116 = vmatmul.mubr.bf16.gmra.mrb[0].mxu0 %v1081
    %v1117 = vpop.f32.mrb[0].mxu0
    %v1118 = vadd.f32 0.0, %v1117
    %v1119 = vpop.f32.mrb[0].mxu0
    %v1120 = vpop.f32.mrb[0].mxu0
    %v1121 = vpop.f32.mrb[0].mxu0
    %1122 = vdwg.mxu0
    %v1131 = vunpack.c.l.b16 %v199
    %v1132 = vunpack.c.l.b16 %v200
    %v1133 = vunpack.c.l.b16 %v201
    %v1134 = vunpack.c.l.b16 %v202
    %v1135 = vunpack.c.l.b16 %v203
    %v1136 = vunpack.c.l.b16 %v204
    %v1137 = vunpack.c.l.b16 %v205
    %v1138 = vunpack.c.l.b16 %v206
    %v1139 = vpack.c.b16 %v1132, %v1131
    %v1140 = vpack.c.b16 %v1134, %v1133
    %v1141 = vpack.c.b16 %v1136, %v1135
    %v1142 = vpack.c.b16 %v1138, %v1137
    %v1148 = vsel %vm543, %v120, 0
    %1150 = vmatprep.subr.bf16.mxu0 0
    %1151 = vmatpush1.bf16.msra.mxu0 %v1139
    %1152 = vmatprep.subr.bf16.mxu0 0
    %1153 = vmatpush1.bf16.msra.mxu0 %v1140
    %1154 = vmatprep.subr.bf16.mxu0 0
    %1155 = vmatpush1.bf16.msra.mxu0 %v1141
    %1156 = vmatprep.subr.bf16.mxu0 0
    %1157 = vmatpush1.bf16.msra.mxu0 %v1142
    %1158 = vmatprep.subr.bf16.mxu0 0
    %1159 = vmatpush1.bf16.msra.mxu0 0
    %1160 = vmatprep.subr.bf16.mxu0 0
    %1161 = vmatpush1.bf16.msra.mxu0 0
    %1162 = vmatprep.subr.bf16.mxu0 0
    %1163 = vmatpush1.bf16.msra.mxu0 0
    %1164 = vmatprep.subr.bf16.mxu0 0
    %1165 = vmatpush1.bf16.msra.mxu0 0
    %1166 = vmatprep.subr.bf16.mxu0 0
    %1167 = vmatpush1.bf16.msra.mxu0 0
    %1168 = vmatprep.subr.bf16.mxu0 0
    %1169 = vmatpush1.bf16.msra.mxu0 0
    %1170 = vmatprep.subr.bf16.mxu0 0
    %1171 = vmatpush1.bf16.msra.mxu0 0
    %1172 = vmatprep.subr.bf16.mxu0 0
    %1173 = vmatpush1.bf16.msra.mxu0 0
    %1174 = vmatprep.subr.bf16.mxu0 0
    %1175 = vmatpush1.bf16.msra.mxu0 0
    %1176 = vmatprep.subr.bf16.mxu0 0
    %1177 = vmatpush1.bf16.msra.mxu0 0
    %1178 = vmatprep.subr.bf16.mxu0 0
    %1179 = vmatpush1.bf16.msra.mxu0 0
    %1180 = vmatprep.subr.bf16.mxu0 0
    %1181 = vmatpush1.bf16.msra.mxu0 0
    %1182 = vmatprep.mubr.bf16.mxu0 0
    %1183 = vmatmul.mubr.bf16.gmra.mrb[0].mxu0 %v1148
    %v1184 = vpop.f32.mrb[0].mxu0
    %v1185 = vadd.f32 0.0, %v1184
    %v1186 = vpop.f32.mrb[0].mxu0
    %v1187 = vpop.f32.mrb[0].mxu0
    %v1188 = vpop.f32.mrb[0].mxu0
    %1189 = vdwg.mxu0
    %v1198 = vunpack.c.l.b16 %v207
    %v1199 = vunpack.c.l.b16 %v208
    %v1200 = vunpack.c.l.b16 %v209
    %v1201 = vunpack.c.l.b16 %v210
    %v1202 = vunpack.c.l.b16 %v211
    %v1203 = vunpack.c.l.b16 %v212
    %v1204 = vunpack.c.l.b16 %v213
    %v1205 = vunpack.c.l.b16 %v214
    %v1206 = vpack.c.b16 %v1199, %v1198
    %v1207 = vpack.c.b16 %v1201, %v1200
    %v1208 = vpack.c.b16 %v1203, %v1202
    %v1209 = vpack.c.b16 %v1205, %v1204
    %v1215 = vsel %vm543, %v121, 0
    %1217 = vmatprep.subr.bf16.mxu0 0
    %1218 = vmatpush1.bf16.msra.mxu0 %v1206
    %1219 = vmatprep.subr.bf16.mxu0 0
    %1220 = vmatpush1.bf16.msra.mxu0 %v1207
    %1221 = vmatprep.subr.bf16.mxu0 0
    %1222 = vmatpush1.bf16.msra.mxu0 %v1208
    %1223 = vmatprep.subr.bf16.mxu0 0
    %1224 = vmatpush1.bf16.msra.mxu0 %v1209
    %1225 = vmatprep.subr.bf16.mxu0 0
    %1226 = vmatpush1.bf16.msra.mxu0 0
    %1227 = vmatprep.subr.bf16.mxu0 0
    %1228 = vmatpush1.bf16.msra.mxu0 0
    %1229 = vmatprep.subr.bf16.mxu0 0
    %1230 = vmatpush1.bf16.msra.mxu0 0
    %1231 = vmatprep.subr.bf16.mxu0 0
    %1232 = vmatpush1.bf16.msra.mxu0 0
    %1233 = vmatprep.subr.bf16.mxu0 0
    %1234 = vmatpush1.bf16.msra.mxu0 0
    %1235 = vmatprep.subr.bf16.mxu0 0
    %1236 = vmatpush1.bf16.msra.mxu0 0
    %1237 = vmatprep.subr.bf16.mxu0 0
    %1238 = vmatpush1.bf16.msra.mxu0 0
    %1239 = vmatprep.subr.bf16.mxu0 0
    %1240 = vmatpush1.bf16.msra.mxu0 0
    %1241 = vmatprep.subr.bf16.mxu0 0
    %1242 = vmatpush1.bf16.msra.mxu0 0
    %1243 = vmatprep.subr.bf16.mxu0 0
    %1244 = vmatpush1.bf16.msra.mxu0 0
    %1245 = vmatprep.subr.bf16.mxu0 0
    %1246 = vmatpush1.bf16.msra.mxu0 0
    %1247 = vmatprep.subr.bf16.mxu0 0
    %1248 = vmatpush1.bf16.msra.mxu0 0
    %1249 = vmatprep.mubr.bf16.mxu0 0
    %1250 = vmatmul.mubr.bf16.gmra.mrb[0].mxu0 %v1215
    %v1251 = vpop.f32.mrb[0].mxu0
    %v1252 = vadd.f32 0.0, %v1251
    %v1253 = vpop.f32.mrb[0].mxu0
    %v1254 = vpop.f32.mrb[0].mxu0
    %v1255 = vpop.f32.mrb[0].mxu0
    %1256 = vdwg.mxu0
    %v1265 = vunpack.c.l.b16 %v215
    %v1266 = vunpack.c.l.b16 %v216
    %v1267 = vunpack.c.l.b16 %v217
    %v1268 = vunpack.c.l.b16 %v218
    %v1269 = vunpack.c.l.b16 %v219
    %v1270 = vunpack.c.l.b16 %v220
    %v1271 = vunpack.c.l.b16 %v221
    %v1272 = vunpack.c.l.b16 %v222
    %v1273 = vpack.c.b16 %v1266, %v1265
    %v1274 = vpack.c.b16 %v1268, %v1267
    %v1275 = vpack.c.b16 %v1270, %v1269
    %v1276 = vpack.c.b16 %v1272, %v1271
    %v1282 = vsel %vm543, %v122, 0
    %1284 = vmatprep.subr.bf16.mxu0 0
    %1285 = vmatpush1.bf16.msra.mxu0 %v1273
    %1286 = vmatprep.subr.bf16.mxu0 0
    %1287 = vmatpush1.bf16.msra.mxu0 %v1274
    %1288 = vmatprep.subr.bf16.mxu0 0
    %1289 = vmatpush1.bf16.msra.mxu0 %v1275
    %1290 = vmatprep.subr.bf16.mxu0 0
    %1291 = vmatpush1.bf16.msra.mxu0 %v1276
    %1292 = vmatprep.subr.bf16.mxu0 0
    %1293 = vmatpush1.bf16.msra.mxu0 0
    %1294 = vmatprep.subr.bf16.mxu0 0
    %1295 = vmatpush1.bf16.msra.mxu0 0
    %1296 = vmatprep.subr.bf16.mxu0 0
    %1297 = vmatpush1.bf16.msra.mxu0 0
    %1298 = vmatprep.subr.bf16.mxu0 0
    %1299 = vmatpush1.bf16.msra.mxu0 0
    %1300 = vmatprep.subr.bf16.mxu0 0
    %1301 = vmatpush1.bf16.msra.mxu0 0
    %1302 = vmatprep.subr.bf16.mxu0 0
    %1303 = vmatpush1.bf16.msra.mxu0 0
    %1304 = vmatprep.subr.bf16.mxu0 0
    %1305 = vmatpush1.bf16.msra.mxu0 0
    %1306 = vmatprep.subr.bf16.mxu0 0
    %1307 = vmatpush1.bf16.msra.mxu0 0
    %1308 = vmatprep.subr.bf16.mxu0 0
    %1309 = vmatpush1.bf16.msra.mxu0 0
    %1310 = vmatprep.subr.bf16.mxu0 0
    %1311 = vmatpush1.bf16.msra.mxu0 0
    %1312 = vmatprep.subr.bf16.mxu0 0
    %1313 = vmatpush1.bf16.msra.mxu0 0
    %1314 = vmatprep.subr.bf16.mxu0 0
    %1315 = vmatpush1.bf16.msra.mxu0 0
    %1316 = vmatprep.mubr.bf16.mxu0 0
    %1317 = vmatmul.mubr.bf16.gmra.mrb[0].mxu0 %v1282
    %v1318 = vpop.f32.mrb[0].mxu0
    %v1319 = vadd.f32 0.0, %v1318
    %v1320 = vpop.f32.mrb[0].mxu0
    %v1321 = vpop.f32.mrb[0].mxu0
    %v1322 = vpop.f32.mrb[0].mxu0
    %1323 = vdwg.mxu0
    %v1332 = vunpack.c.l.b16 %v223
    %v1333 = vunpack.c.l.b16 %v224
    %v1334 = vunpack.c.l.b16 %v225
    %v1335 = vunpack.c.l.b16 %v226
    %v1336 = vunpack.c.l.b16 %v227
    %v1337 = vunpack.c.l.b16 %v228
    %v1338 = vunpack.c.l.b16 %v229
    %v1339 = vunpack.c.l.b16 %v230
    %v1340 = vpack.c.b16 %v1333, %v1332
    %v1341 = vpack.c.b16 %v1335, %v1334
    %v1342 = vpack.c.b16 %v1337, %v1336
    %v1343 = vpack.c.b16 %v1339, %v1338
    %v1349 = vsel %vm543, %v123, 0
    %1351 = vmatprep.subr.bf16.mxu0 0
    %1352 = vmatpush1.bf16.msra.mxu0 %v1340
    %1353 = vmatprep.subr.bf16.mxu0 0
    %1354 = vmatpush1.bf16.msra.mxu0 %v1341
    %1355 = vmatprep.subr.bf16.mxu0 0
    %1356 = vmatpush1.bf16.msra.mxu0 %v1342
    %1357 = vmatprep.subr.bf16.mxu0 0
    %1358 = vmatpush1.bf16.msra.mxu0 %v1343
    %1359 = vmatprep.subr.bf16.mxu0 0
    %1360 = vmatpush1.bf16.msra.mxu0 0
    %1361 = vmatprep.subr.bf16.mxu0 0
    %1362 = vmatpush1.bf16.msra.mxu0 0
    %1363 = vmatprep.subr.bf16.mxu0 0
    %1364 = vmatpush1.bf16.msra.mxu0 0
    %1365 = vmatprep.subr.bf16.mxu0 0
    %1366 = vmatpush1.bf16.msra.mxu0 0
    %1367 = vmatprep.subr.bf16.mxu0 0
    %1368 = vmatpush1.bf16.msra.mxu0 0
    %1369 = vmatprep.subr.bf16.mxu0 0
    %1370 = vmatpush1.bf16.msra.mxu0 0
    %1371 = vmatprep.subr.bf16.mxu0 0
    %1372 = vmatpush1.bf16.msra.mxu0 0
    %1373 = vmatprep.subr.bf16.mxu0 0
    %1374 = vmatpush1.bf16.msra.mxu0 0
    %1375 = vmatprep.subr.bf16.mxu0 0
    %1376 = vmatpush1.bf16.msra.mxu0 0
    %1377 = vmatprep.subr.bf16.mxu0 0
    %1378 = vmatpush1.bf16.msra.mxu0 0
    %1379 = vmatprep.subr.bf16.mxu0 0
    %1380 = vmatpush1.bf16.msra.mxu0 0
    %1381 = vmatprep.subr.bf16.mxu0 0
    %1382 = vmatpush1.bf16.msra.mxu0 0
    %1383 = vmatprep.mubr.bf16.mxu0 0
    %1384 = vmatmul.mubr.bf16.gmra.mrb[0].mxu0 %v1349
    %v1385 = vpop.f32.mrb[0].mxu0
    %v1386 = vadd.f32 0.0, %v1385
    %v1387 = vpop.f32.mrb[0].mxu0
    %v1388 = vpop.f32.mrb[0].mxu0
    %v1389 = vpop.f32.mrb[0].mxu0
    %1390 = vdwg.mxu0
    %v1399 = vunpack.c.l.b16 %v231
    %v1400 = vunpack.c.l.b16 %v232
    %v1401 = vunpack.c.l.b16 %v233
    %v1402 = vunpack.c.l.b16 %v234
    %v1403 = vunpack.c.l.b16 %v235
    %v1404 = vunpack.c.l.b16 %v236
    %v1405 = vunpack.c.l.b16 %v237
    %v1406 = vunpack.c.l.b16 %v238
    %v1407 = vpack.c.b16 %v1400, %v1399
    %v1408 = vpack.c.b16 %v1402, %v1401
    %v1409 = vpack.c.b16 %v1404, %v1403
    %v1410 = vpack.c.b16 %v1406, %v1405
    %v1416 = vsel %vm543, %v124, 0
    %1418 = vmatprep.subr.bf16.mxu0 0
    %1419 = vmatpush1.bf16.msra.mxu0 %v1407
    %1420 = vmatprep.subr.bf16.mxu0 0
    %1421 = vmatpush1.bf16.msra.mxu0 %v1408
    %1422 = vmatprep.subr.bf16.mxu0 0
    %1423 = vmatpush1.bf16.msra.mxu0 %v1409
    %1424 = vmatprep.subr.bf16.mxu0 0
    %1425 = vmatpush1.bf16.msra.mxu0 %v1410
    %1426 = vmatprep.subr.bf16.mxu0 0
    %1427 = vmatpush1.bf16.msra.mxu0 0
    %1428 = vmatprep.subr.bf16.mxu0 0
    %1429 = vmatpush1.bf16.msra.mxu0 0
    %1430 = vmatprep.subr.bf16.mxu0 0
    %1431 = vmatpush1.bf16.msra.mxu0 0
    %1432 = vmatprep.subr.bf16.mxu0 0
    %1433 = vmatpush1.bf16.msra.mxu0 0
    %1434 = vmatprep.subr.bf16.mxu0 0
    %1435 = vmatpush1.bf16.msra.mxu0 0
    %1436 = vmatprep.subr.bf16.mxu0 0
    %1437 = vmatpush1.bf16.msra.mxu0 0
    %1438 = vmatprep.subr.bf16.mxu0 0
    %1439 = vmatpush1.bf16.msra.mxu0 0
    %1440 = vmatprep.subr.bf16.mxu0 0
    %1441 = vmatpush1.bf16.msra.mxu0 0
    %1442 = vmatprep.subr.bf16.mxu0 0
    %1443 = vmatpush1.bf16.msra.mxu0 0
    %1444 = vmatprep.subr.bf16.mxu0 0
    %1445 = vmatpush1.bf16.msra.mxu0 0
    %1446 = vmatprep.subr.bf16.mxu0 0
    %1447 = vmatpush1.bf16.msra.mxu0 0
    %1448 = vmatprep.subr.bf16.mxu0 0
    %1449 = vmatpush1.bf16.msra.mxu0 0
    %1450 = vmatprep.mubr.bf16.mxu0 0
    %1451 = vmatmul.mubr.bf16.gmra.mrb[0].mxu0 %v1416
    %v1452 = vpop.f32.mrb[0].mxu0
    %v1453 = vadd.f32 0.0, %v1452
    %v1454 = vpop.f32.mrb[0].mxu0
    %v1455 = vpop.f32.mrb[0].mxu0
    %v1456 = vpop.f32.mrb[0].mxu0
    %1457 = vdwg.mxu0
    %v1466 = vunpack.c.l.b16 %v239
    %v1467 = vunpack.c.l.b16 %v240
    %v1468 = vunpack.c.l.b16 %v241
    %v1469 = vunpack.c.l.b16 %v242
    %v1470 = vunpack.c.l.b16 %v243
    %v1471 = vunpack.c.l.b16 %v244
    %v1472 = vunpack.c.l.b16 %v245
    %v1473 = vunpack.c.l.b16 %v246
    %v1474 = vpack.c.b16 %v1467, %v1466
    %v1475 = vpack.c.b16 %v1469, %v1468
    %v1476 = vpack.c.b16 %v1471, %v1470
    %v1477 = vpack.c.b16 %v1473, %v1472
    %v1483 = vsel %vm543, %v125, 0
    %1485 = vmatprep.subr.bf16.mxu0 0
    %1486 = vmatpush1.bf16.msra.mxu0 %v1474
    %1487 = vmatprep.subr.bf16.mxu0 0
    %1488 = vmatpush1.bf16.msra.mxu0 %v1475
    %1489 = vmatprep.subr.bf16.mxu0 0
    %1490 = vmatpush1.bf16.msra.mxu0 %v1476
    %1491 = vmatprep.subr.bf16.mxu0 0
    %1492 = vmatpush1.bf16.msra.mxu0 %v1477
    %1493 = vmatprep.subr.bf16.mxu0 0
    %1494 = vmatpush1.bf16.msra.mxu0 0
    %1495 = vmatprep.subr.bf16.mxu0 0
    %1496 = vmatpush1.bf16.msra.mxu0 0
    %1497 = vmatprep.subr.bf16.mxu0 0
    %1498 = vmatpush1.bf16.msra.mxu0 0
    %1499 = vmatprep.subr.bf16.mxu0 0
    %1500 = vmatpush1.bf16.msra.mxu0 0
    %1501 = vmatprep.subr.bf16.mxu0 0
    %1502 = vmatpush1.bf16.msra.mxu0 0
    %1503 = vmatprep.subr.bf16.mxu0 0
    %1504 = vmatpush1.bf16.msra.mxu0 0
    %1505 = vmatprep.subr.bf16.mxu0 0
    %1506 = vmatpush1.bf16.msra.mxu0 0
    %1507 = vmatprep.subr.bf16.mxu0 0
    %1508 = vmatpush1.bf16.msra.mxu0 0
    %1509 = vmatprep.subr.bf16.mxu0 0
    %1510 = vmatpush1.bf16.msra.mxu0 0
    %1511 = vmatprep.subr.bf16.mxu0 0
    %1512 = vmatpush1.bf16.msra.mxu0 0
    %1513 = vmatprep.subr.bf16.mxu0 0
    %1514 = vmatpush1.bf16.msra.mxu0 0
    %1515 = vmatprep.subr.bf16.mxu0 0
    %1516 = vmatpush1.bf16.msra.mxu0 0
    %1517 = vmatprep.mubr.bf16.mxu0 0
    %1518 = vmatmul.mubr.bf16.gmra.mrb[0].mxu0 %v1483
    %v1519 = vpop.f32.mrb[0].mxu0
    %v1520 = vadd.f32 0.0, %v1519
    %v1521 = vpop.f32.mrb[0].mxu0
    %v1522 = vpop.f32.mrb[0].mxu0
    %v1523 = vpop.f32.mrb[0].mxu0
    %1524 = vdwg.mxu0
    %v1533 = vunpack.c.l.b16 %v247
    %v1534 = vunpack.c.l.b16 %v248
    %v1535 = vunpack.c.l.b16 %v249
    %v1536 = vunpack.c.l.b16 %v250
    %v1537 = vunpack.c.l.b16 %v251
    %v1538 = vunpack.c.l.b16 %v252
    %v1539 = vunpack.c.l.b16 %v253
    %v1540 = vunpack.c.l.b16 %v254
    %v1541 = vpack.c.b16 %v1534, %v1533
    %v1542 = vpack.c.b16 %v1536, %v1535
    %v1543 = vpack.c.b16 %v1538, %v1537
    %v1544 = vpack.c.b16 %v1540, %v1539
    %v1550 = vsel %vm543, %v126, 0
    %1552 = vmatprep.subr.bf16.mxu0 0
    %1553 = vmatpush1.bf16.msra.mxu0 %v1541
    %1554 = vmatprep.subr.bf16.mxu0 0
    %1555 = vmatpush1.bf16.msra.mxu0 %v1542
    %1556 = vmatprep.subr.bf16.mxu0 0
    %1557 = vmatpush1.bf16.msra.mxu0 %v1543
    %1558 = vmatprep.subr.bf16.mxu0 0
    %1559 = vmatpush1.bf16.msra.mxu0 %v1544
    %1560 = vmatprep.subr.bf16.mxu0 0
    %1561 = vmatpush1.bf16.msra.mxu0 0
    %1562 = vmatprep.subr.bf16.mxu0 0
    %1563 = vmatpush1.bf16.msra.mxu0 0
    %1564 = vmatprep.subr.bf16.mxu0 0
    %1565 = vmatpush1.bf16.msra.mxu0 0
    %1566 = vmatprep.subr.bf16.mxu0 0
    %1567 = vmatpush1.bf16.msra.mxu0 0
    %1568 = vmatprep.subr.bf16.mxu0 0
    %1569 = vmatpush1.bf16.msra.mxu0 0
    %1570 = vmatprep.subr.bf16.mxu0 0
    %1571 = vmatpush1.bf16.msra.mxu0 0
    %1572 = vmatprep.subr.bf16.mxu0 0
    %1573 = vmatpush1.bf16.msra.mxu0 0
    %1574 = vmatprep.subr.bf16.mxu0 0
    %1575 = vmatpush1.bf16.msra.mxu0 0
    %1576 = vmatprep.subr.bf16.mxu0 0
    %1577 = vmatpush1.bf16.msra.mxu0 0
    %1578 = vmatprep.subr.bf16.mxu0 0
    %1579 = vmatpush1.bf16.msra.mxu0 0
    %1580 = vmatprep.subr.bf16.mxu0 0
    %1581 = vmatpush1.bf16.msra.mxu0 0
    %1582 = vmatprep.subr.bf16.mxu0 0
    %1583 = vmatpush1.bf16.msra.mxu0 0
    %1584 = vmatprep.mubr.bf16.mxu0 0
    %1585 = vmatmul.mubr.bf16.gmra.mrb[0].mxu0 %v1550
    %v1586 = vpop.f32.mrb[0].mxu0
    %v1587 = vadd.f32 0.0, %v1586
    %v1588 = vpop.f32.mrb[0].mxu0
    %v1589 = vpop.f32.mrb[0].mxu0
    %v1590 = vpop.f32.mrb[0].mxu0
    %1591 = vdwg.mxu0
    %v1592 = vmul.f32 %v582, 0.00024414063
    %v1593 = vmul.f32 %v649, 0.00024414063
    %v1594 = vmul.f32 %v716, 0.00024414063
    %v1595 = vmul.f32 %v783, 0.00024414063
    %v1596 = vmul.f32 %v850, 0.00024414063
    %v1597 = vmul.f32 %v917, 0.00024414063
    %v1598 = vmul.f32 %v984, 0.00024414063
    %v1599 = vmul.f32 %v1051, 0.00024414063
    %v1600 = vmul.f32 %v1118, 0.00024414063
    %v1601 = vmul.f32 %v1185, 0.00024414063
    %v1602 = vmul.f32 %v1252, 0.00024414063
    %v1603 = vmul.f32 %v1319, 0.00024414063
    %v1604 = vmul.f32 %v1386, 0.00024414063
    %v1605 = vmul.f32 %v1453, 0.00024414063
    %v1606 = vmul.f32 %v1520, 0.00024414063
    %v1607 = vmul.f32 %v1587, 0.00024414063
    %v1608 = vsel %vm543, %v1592, -inf
    %1609 = vmax.xlane.f32.xlu0 %v1608
    %v1610 = vpop.xlane.xlu0 %1609
    %v1611 = vsel %vm543, %v1593, -inf
    %1612 = vmax.xlane.f32.xlu0 %v1611
    %v1613 = vpop.xlane.xlu0 %1612
    %v1614 = vsel %vm543, %v1594, -inf
    %1615 = vmax.xlane.f32.xlu0 %v1614
    %v1616 = vpop.xlane.xlu0 %1615
    %v1617 = vsel %vm543, %v1595, -inf
    %1618 = vmax.xlane.f32.xlu0 %v1617
    %v1619 = vpop.xlane.xlu0 %1618
    %v1620 = vsel %vm543, %v1596, -inf
    %1621 = vmax.xlane.f32.xlu0 %v1620
    %v1622 = vpop.xlane.xlu0 %1621
    %v1623 = vsel %vm543, %v1597, -inf
    %1624 = vmax.xlane.f32.xlu0 %v1623
    %v1625 = vpop.xlane.xlu0 %1624
    %v1626 = vsel %vm543, %v1598, -inf
    %1627 = vmax.xlane.f32.xlu0 %v1626
    %v1628 = vpop.xlane.xlu0 %1627
    %v1629 = vsel %vm543, %v1599, -inf
    %1630 = vmax.xlane.f32.xlu0 %v1629
    %v1631 = vpop.xlane.xlu0 %1630
    %v1632 = vsel %vm543, %v1600, -inf
    %1633 = vmax.xlane.f32.xlu0 %v1632
    %v1634 = vpop.xlane.xlu0 %1633
    %v1635 = vsel %vm543, %v1601, -inf
    %1636 = vmax.xlane.f32.xlu0 %v1635
    %v1637 = vpop.xlane.xlu0 %1636
    %v1638 = vsel %vm543, %v1602, -inf
    %1639 = vmax.xlane.f32.xlu0 %v1638
    %v1640 = vpop.xlane.xlu0 %1639
    %v1641 = vsel %vm543, %v1603, -inf
    %1642 = vmax.xlane.f32.xlu0 %v1641
    %v1643 = vpop.xlane.xlu0 %1642
    %v1644 = vsel %vm543, %v1604, -inf
    %1645 = vmax.xlane.f32.xlu0 %v1644
    %v1646 = vpop.xlane.xlu0 %1645
    %v1647 = vsel %vm543, %v1605, -inf
    %1648 = vmax.xlane.f32.xlu0 %v1647
    %v1649 = vpop.xlane.xlu0 %1648
    %v1650 = vsel %vm543, %v1606, -inf
    %1651 = vmax.xlane.f32.xlu0 %v1650
    %v1652 = vpop.xlane.xlu0 %1651
    %v1653 = vsel %vm543, %v1607, -inf
    %1654 = vmax.xlane.f32.xlu0 %v1653
    %v1655 = vpop.xlane.xlu0 %1654
    %v1656 = vsub.f32 %v1592, %v1610
    %v1657 = vsub.f32 %v1593, %v1613
    %v1658 = vsub.f32 %v1594, %v1616
    %v1659 = vsub.f32 %v1595, %v1619
    %v1660 = vsub.f32 %v1596, %v1622
    %v1661 = vsub.f32 %v1597, %v1625
    %v1662 = vsub.f32 %v1598, %v1628
    %v1663 = vsub.f32 %v1599, %v1631
    %v1664 = vsub.f32 %v1600, %v1634
    %v1665 = vsub.f32 %v1601, %v1637
    %v1666 = vsub.f32 %v1602, %v1640
    %v1667 = vsub.f32 %v1603, %v1643
    %v1668 = vsub.f32 %v1604, %v1646
    %v1669 = vsub.f32 %v1605, %v1649
    %v1670 = vsub.f32 %v1606, %v1652
    %v1671 = vsub.f32 %v1607, %v1655
    %v1672 = vmul.f32 %v1656, 1.442695
    %v1673 = vpow.pop %v1672
    %v1674 = vmul.f32 %v1657, 1.442695
    %v1675 = vpow.pop %v1674
    %v1676 = vmul.f32 %v1658, 1.442695
    %v1677 = vpow.pop %v1676
    %v1678 = vmul.f32 %v1659, 1.442695
    %v1679 = vpow.pop %v1678
    %v1680 = vmul.f32 %v1660, 1.442695
    %v1681 = vpow.pop %v1680
    %v1682 = vmul.f32 %v1661, 1.442695
    %v1683 = vpow.pop %v1682
    %v1684 = vmul.f32 %v1662, 1.442695
    %v1685 = vpow.pop %v1684
    %v1686 = vmul.f32 %v1663, 1.442695
    %v1687 = vpow.pop %v1686
    %v1688 = vmul.f32 %v1664, 1.442695
    %v1689 = vpow.pop %v1688
    %v1690 = vmul.f32 %v1665, 1.442695
    %v1691 = vpow.pop %v1690
    %v1692 = vmul.f32 %v1666, 1.442695
    %v1693 = vpow.pop %v1692
    %v1694 = vmul.f32 %v1667, 1.442695
    %v1695 = vpow.pop %v1694
    %v1696 = vmul.f32 %v1668, 1.442695
    %v1697 = vpow.pop %v1696
    %v1698 = vmul.f32 %v1669, 1.442695
    %v1699 = vpow.pop %v1698
    %v1700 = vmul.f32 %v1670, 1.442695
    %v1701 = vpow.pop %v1700
    %v1702 = vmul.f32 %v1671, 1.442695
    %v1703 = vpow.pop %v1702
    %v1705 = vsel %vm543, %v1673, 0
    %v1708 = vsel %vm543, %v1675, 0
    %v1711 = vsel %vm543, %v1677, 0
    %v1714 = vsel %vm543, %v1679, 0
    %v1717 = vsel %vm543, %v1681, 0
    %v1720 = vsel %vm543, %v1683, 0
    %v1723 = vsel %vm543, %v1685, 0
    %v1726 = vsel %vm543, %v1687, 0
    %v1729 = vsel %vm543, %v1689, 0
    %v1732 = vsel %vm543, %v1691, 0
    %v1735 = vsel %vm543, %v1693, 0
    %v1738 = vsel %vm543, %v1695, 0
    %v1741 = vsel %vm543, %v1697, 0
    %v1744 = vsel %vm543, %v1699, 0
    %v1747 = vsel %vm543, %v1701, 0
    %v1750 = vsel %vm543, %v1703, 0
    %1752 = vmatprep.subr.mxu0 0.0
    %1753 = vmatpush1.msra.mxu0 %v511
    %1754 = vmatprep.subr.mxu0 0.0
    %1755 = vmatpush1.msra.mxu0 %v512
    %1756 = vmatprep.subr.mxu0 0.0
    %1757 = vmatpush1.msra.mxu0 %v513
    %1758 = vmatprep.subr.mxu0 0.0
    %1759 = vmatpush1.msra.mxu0 %v514
    %1760 = vmatprep.subr.mxu0 0.0
    %1761 = vmatpush1.msra.mxu0 %v515
    %1762 = vmatprep.subr.mxu0 0.0
    %1763 = vmatpush1.msra.mxu0 %v516
    %1764 = vmatprep.subr.mxu0 0.0
    %1765 = vmatpush1.msra.mxu0 %v517
    %1766 = vmatprep.subr.mxu0 0.0
    %1767 = vmatpush1.msra.mxu0 %v518
    %1768 = vmatprep.subr.mxu0 0.0
    %1769 = vmatpush1.msra.mxu0 0.0
    %1770 = vmatprep.subr.mxu0 0.0
    %1771 = vmatpush1.msra.mxu0 0.0
    %1772 = vmatprep.subr.mxu0 0.0
    %1773 = vmatpush1.msra.mxu0 0.0
    %1774 = vmatprep.subr.mxu0 0.0
    %1775 = vmatpush1.msra.mxu0 0.0
    %1776 = vmatprep.subr.mxu0 0.0
    %1777 = vmatpush1.msra.mxu0 0.0
    %1778 = vmatprep.subr.mxu0 0.0
    %1779 = vmatpush1.msra.mxu0 0.0
    %1780 = vmatprep.subr.mxu0 0.0
    %1781 = vmatpush1.msra.mxu0 0.0
    %1782 = vmatprep.subr.mxu0 0.0
    %1783 = vmatpush1.msra.mxu0 0.0
    %1784 = vmatprep.subr.mxu0 0.0
    %1785 = vmatpush1.msra.mxu0 0.0
    %1786 = vmatprep.subr.mxu0 0.0
    %1787 = vmatpush1.msra.mxu0 0.0
    %1788 = vmatprep.subr.mxu0 0.0
    %1789 = vmatpush1.msra.mxu0 0.0
    %1790 = vmatprep.subr.mxu0 0.0
    %1791 = vmatpush1.msra.mxu0 0.0
    %1792 = vmatprep.subr.mxu0 0.0
    %1793 = vmatpush1.msra.mxu0 0.0
    %1794 = vmatprep.subr.mxu0 0.0
    %1795 = vmatpush1.msra.mxu0 0.0
    %1796 = vmatprep.subr.mxu0 0.0
    %1797 = vmatpush1.msra.mxu0 0.0
    %1798 = vmatprep.subr.mxu0 0.0
    %1799 = vmatpush1.msra.mxu0 0.0
    %1800 = vmatprep.subr.mxu0 0.0
    %1801 = vmatpush1.msra.mxu0 0.0
    %1802 = vmatprep.subr.mxu0 0.0
    %1803 = vmatpush1.msra.mxu0 0.0
    %1804 = vmatprep.subr.mxu0 0.0
    %1805 = vmatpush1.msra.mxu0 0.0
    %1806 = vmatprep.subr.mxu0 0.0
    %1807 = vmatpush1.msra.mxu0 0.0
    %1808 = vmatprep.subr.mxu0 0.0
    %1809 = vmatpush1.msra.mxu0 0.0
    %1810 = vmatprep.subr.mxu0 0.0
    %1811 = vmatpush1.msra.mxu0 0.0
    %1812 = vmatprep.subr.mxu0 0.0
    %1813 = vmatpush1.msra.mxu0 0.0
    %1814 = vmatprep.subr.mxu0 0.0
    %1815 = vmatpush1.msra.mxu0 0.0
    %1816 = vmatprep.mubr.f32.mxu0 0.0
    %1817 = vmatmul.mubr.f32.gmra.mrb[0].mxu0 %v1705
    %v1818 = vpop.f32.mrb[0].mxu0
    %v1819 = vadd.f32 0.0, %v1818
    %v1820 = vpop.f32.mrb[0].mxu0
    %1821 = vmatprep.mubr.f32.mxu0 0.0
    %1822 = vmatmul.mubr.f32.gmra.mrb[0].mxu0 %v1708
    %v1823 = vpop.f32.mrb[0].mxu0
    %v1824 = vadd.f32 0.0, %v1823
    %v1825 = vpop.f32.mrb[0].mxu0
    %1826 = vmatprep.mubr.f32.mxu0 0.0
    %1827 = vmatmul.mubr.f32.gmra.mrb[0].mxu0 %v1711
    %v1828 = vpop.f32.mrb[0].mxu0
    %v1829 = vadd.f32 0.0, %v1828
    %v1830 = vpop.f32.mrb[0].mxu0
    %1831 = vmatprep.mubr.f32.mxu0 0.0
    %1832 = vmatmul.mubr.f32.gmra.mrb[0].mxu0 %v1714
    %v1833 = vpop.f32.mrb[0].mxu0
    %v1834 = vadd.f32 0.0, %v1833
    %v1835 = vpop.f32.mrb[0].mxu0
    %1836 = vmatprep.mubr.f32.mxu0 0.0
    %1837 = vmatmul.mubr.f32.gmra.mrb[0].mxu0 %v1717
    %v1838 = vpop.f32.mrb[0].mxu0
    %v1839 = vadd.f32 0.0, %v1838
    %v1840 = vpop.f32.mrb[0].mxu0
    %1841 = vmatprep.mubr.f32.mxu0 0.0
    %1842 = vmatmul.mubr.f32.gmra.mrb[0].mxu0 %v1720
    %v1843 = vpop.f32.mrb[0].mxu0
    %v1844 = vadd.f32 0.0, %v1843
    %v1845 = vpop.f32.mrb[0].mxu0
    %1846 = vmatprep.mubr.f32.mxu0 0.0
    %1847 = vmatmul.mubr.f32.gmra.mrb[0].mxu0 %v1723
    %v1848 = vpop.f32.mrb[0].mxu0
    %v1849 = vadd.f32 0.0, %v1848
    %v1850 = vpop.f32.mrb[0].mxu0
    %1851 = vmatprep.mubr.f32.mxu0 0.0
    %1852 = vmatmul.mubr.f32.gmra.mrb[0].mxu0 %v1726
    %v1853 = vpop.f32.mrb[0].mxu0
    %v1854 = vadd.f32 0.0, %v1853
    %v1855 = vpop.f32.mrb[0].mxu0
    %1856 = vmatprep.mubr.f32.mxu0 0.0
    %1857 = vmatmul.mubr.f32.gmra.mrb[0].mxu0 %v1729
    %v1858 = vpop.f32.mrb[0].mxu0
    %v1859 = vadd.f32 0.0, %v1858
    %v1860 = vpop.f32.mrb[0].mxu0
    %1861 = vmatprep.mubr.f32.mxu0 0.0
    %1862 = vmatmul.mubr.f32.gmra.mrb[0].mxu0 %v1732
    %v1863 = vpop.f32.mrb[0].mxu0
    %v1864 = vadd.f32 0.0, %v1863
    %v1865 = vpop.f32.mrb[0].mxu0
    %1866 = vmatprep.mubr.f32.mxu0 0.0
    %1867 = vmatmul.mubr.f32.gmra.mrb[0].mxu0 %v1735
    %v1868 = vpop.f32.mrb[0].mxu0
    %v1869 = vadd.f32 0.0, %v1868
    %v1870 = vpop.f32.mrb[0].mxu0
    %1871 = vmatprep.mubr.f32.mxu0 0.0
    %1872 = vmatmul.mubr.f32.gmra.mrb[0].mxu0 %v1738
    %v1873 = vpop.f32.mrb[0].mxu0
    %v1874 = vadd.f32 0.0, %v1873
    %v1875 = vpop.f32.mrb[0].mxu0
    %1876 = vmatprep.mubr.f32.mxu0 0.0
    %1877 = vmatmul.mubr.f32.gmra.mrb[0].mxu0 %v1741
    %v1878 = vpop.f32.mrb[0].mxu0
    %v1879 = vadd.f32 0.0, %v1878
    %v1880 = vpop.f32.mrb[0].mxu0
    %1881 = vmatprep.mubr.f32.mxu0 0.0
    %1882 = vmatmul.mubr.f32.gmra.mrb[0].mxu0 %v1744
    %v1883 = vpop.f32.mrb[0].mxu0
    %v1884 = vadd.f32 0.0, %v1883
    %v1885 = vpop.f32.mrb[0].mxu0
    %1886 = vmatprep.mubr.f32.mxu0 0.0
    %1887 = vmatmul.mubr.f32.gmra.mrb[0].mxu0 %v1747
    %v1888 = vpop.f32.mrb[0].mxu0
    %v1889 = vadd.f32 0.0, %v1888
    %v1890 = vpop.f32.mrb[0].mxu0
    %1891 = vmatprep.mubr.f32.mxu0 0.0
    %1892 = vmatmul.mubr.f32.gmra.mrb[0].mxu0 %v1750
    %v1893 = vpop.f32.mrb[0].mxu0
    %v1894 = vadd.f32 0.0, %v1893
    %v1895 = vpop.f32.mrb[0].mxu0
    %1896 = vdwg.mxu0
    %v1897 = vrcp.pop %v1819
    %v1898 = vrcp.pop %v1824
    %v1899 = vrcp.pop %v1829
    %v1900 = vrcp.pop %v1834
    %v1901 = vrcp.pop %v1839
    %v1902 = vrcp.pop %v1844
    %v1903 = vrcp.pop %v1849
    %v1904 = vrcp.pop %v1854
    %v1905 = vrcp.pop %v1859
    %v1906 = vrcp.pop %v1864
    %v1907 = vrcp.pop %v1869
    %v1908 = vrcp.pop %v1874
    %v1909 = vrcp.pop %v1879
    %v1910 = vrcp.pop %v1884
    %v1911 = vrcp.pop %v1889
    %v1912 = vrcp.pop %v1894
    %v1913 = vmul.f32 %v1897, 0.5
    %v1914 = vmul.f32 %v1898, 0.5
    %v1915 = vmul.f32 %v1899, 0.5
    %v1916 = vmul.f32 %v1900, 0.5
    %v1917 = vmul.f32 %v1901, 0.5
    %v1918 = vmul.f32 %v1902, 0.5
    %v1919 = vmul.f32 %v1903, 0.5
    %v1920 = vmul.f32 %v1904, 0.5
    %v1921 = vmul.f32 %v1905, 0.5
    %v1922 = vmul.f32 %v1906, 0.5
    %v1923 = vmul.f32 %v1907, 0.5
    %v1924 = vmul.f32 %v1908, 0.5
    %v1925 = vmul.f32 %v1909, 0.5
    %v1926 = vmul.f32 %v1910, 0.5
    %v1927 = vmul.f32 %v1911, 0.5
    %v1928 = vmul.f32 %v1912, 0.5
    %v1929 = vmul.f32 %v1673, %v1913
    %v1930 = vmul.f32 %v1675, %v1914
    %v1931 = vmul.f32 %v1677, %v1915
    %v1932 = vmul.f32 %v1679, %v1916
    %v1933 = vmul.f32 %v1681, %v1917
    %v1934 = vmul.f32 %v1683, %v1918
    %v1935 = vmul.f32 %v1685, %v1919
    %v1936 = vmul.f32 %v1687, %v1920
    %v1937 = vmul.f32 %v1689, %v1921
    %v1938 = vmul.f32 %v1691, %v1922
    %v1939 = vmul.f32 %v1693, %v1923
    %v1940 = vmul.f32 %v1695, %v1924
    %v1941 = vmul.f32 %v1697, %v1925
    %v1942 = vmul.f32 %v1699, %v1926
    %v1943 = vmul.f32 %v1701, %v1927
    %v1944 = vmul.f32 %v1703, %v1928
    %v1945 = vpack.c.bf16 %v1930, %v1929
    %v1946 = vpack.c.bf16 %v1932, %v1931
    %v1947 = vpack.c.bf16 %v1934, %v1933
    %v1948 = vpack.c.bf16 %v1936, %v1935
    %v1949 = vpack.c.bf16 %v1938, %v1937
    %v1950 = vpack.c.bf16 %v1940, %v1939
    %v1951 = vpack.c.bf16 %v1942, %v1941
    %v1952 = vpack.c.bf16 %v1944, %v1943
    %v1961 = vunpack.c.l.b16 %v1945
    %v1962 = vunpack.c.h.b16 %v1945
    %v1963 = vunpack.c.l.b16 %v1946
    %v1964 = vunpack.c.h.b16 %v1946
    %v1965 = vunpack.c.l.b16 %v1947
    %v1966 = vunpack.c.h.b16 %v1947
    %v1967 = vunpack.c.l.b16 %v1948
    %v1968 = vunpack.c.h.b16 %v1948
    %v1969 = vunpack.c.l.b16 %v1949
    %v1970 = vunpack.c.h.b16 %v1949
    %v1971 = vunpack.c.l.b16 %v1950
    %v1972 = vunpack.c.h.b16 %v1950
    %v1973 = vunpack.c.l.b16 %v1951
    %v1974 = vunpack.c.h.b16 %v1951
    %v1975 = vunpack.c.l.b16 %v1952
    %v1976 = vunpack.c.h.b16 %v1952
    %v1977 = vpack.c.b16 %v1961, %v1961
    %v1978 = vpack.c.b16 %v1962, %v1962
    %v1979 = vpack.c.b16 %v1963, %v1963
    %v1980 = vpack.c.b16 %v1964, %v1964
    %v1981 = vpack.c.b16 %v1965, %v1965
    %v1982 = vpack.c.b16 %v1966, %v1966
    %v1983 = vpack.c.b16 %v1967, %v1967
    %v1984 = vpack.c.b16 %v1968, %v1968
    %v1985 = vpack.c.b16 %v1969, %v1969
    %v1986 = vpack.c.b16 %v1970, %v1970
    %v1987 = vpack.c.b16 %v1971, %v1971
    %v1988 = vpack.c.b16 %v1972, %v1972
    %v1989 = vpack.c.b16 %v1973, %v1973
    %v1990 = vpack.c.b16 %v1974, %v1974
    %v1991 = vpack.c.b16 %v1975, %v1975
    %v1992 = vpack.c.b16 %v1976, %v1976
    %v2001 = vunpack.c.l.b16 %v255
    %v2002 = vunpack.c.l.b16 %v256
    %v2003 = vunpack.c.l.b16 %v257
    %v2004 = vunpack.c.l.b16 %v258
    %v2005 = vunpack.c.l.b16 %v259
    %v2006 = vunpack.c.l.b16 %v260
    %v2007 = vunpack.c.l.b16 %v261
    %v2008 = vunpack.c.l.b16 %v262
    %v2009 = vpack.c.b16 %v2002, %v2001
    %v2010 = vpack.c.b16 %v2004, %v2003
    %v2011 = vpack.c.b16 %v2006, %v2005
    %v2012 = vpack.c.b16 %v2008, %v2007
    %v2018 = vsel %vm543, %v1977, 0
    %2020 = vmatprep.subr.bf16.mxu0 0
    %2021 = vmatpush1.bf16.msra.mxu0 %v2009
    %2022 = vmatprep.subr.bf16.mxu0 0
    %2023 = vmatpush1.bf16.msra.mxu0 %v2010
    %2024 = vmatprep.subr.bf16.mxu0 0
    %2025 = vmatpush1.bf16.msra.mxu0 %v2011
    %2026 = vmatprep.subr.bf16.mxu0 0
    %2027 = vmatpush1.bf16.msra.mxu0 %v2012
    %2028 = vmatprep.subr.bf16.mxu0 0
    %2029 = vmatpush1.bf16.msra.mxu0 0
    %2030 = vmatprep.subr.bf16.mxu0 0
    %2031 = vmatpush1.bf16.msra.mxu0 0
    %2032 = vmatprep.subr.bf16.mxu0 0
    %2033 = vmatpush1.bf16.msra.mxu0 0
    %2034 = vmatprep.subr.bf16.mxu0 0
    %2035 = vmatpush1.bf16.msra.mxu0 0
    %2036 = vmatprep.subr.bf16.mxu0 0
    %2037 = vmatpush1.bf16.msra.mxu0 0
    %2038 = vmatprep.subr.bf16.mxu0 0
    %2039 = vmatpush1.bf16.msra.mxu0 0
    %2040 = vmatprep.subr.bf16.mxu0 0
    %2041 = vmatpush1.bf16.msra.mxu0 0
    %2042 = vmatprep.subr.bf16.mxu0 0
    %2043 = vmatpush1.bf16.msra.mxu0 0
    %2044 = vmatprep.subr.bf16.mxu0 0
    %2045 = vmatpush1.bf16.msra.mxu0 0
    %2046 = vmatprep.subr.bf16.mxu0 0
    %2047 = vmatpush1.bf16.msra.mxu0 0
    %2048 = vmatprep.subr.bf16.mxu0 0
    %2049 = vmatpush1.bf16.msra.mxu0 0
    %2050 = vmatprep.subr.bf16.mxu0 0
    %2051 = vmatpush1.bf16.msra.mxu0 0
    %2052 = vmatprep.mubr.bf16.mxu0 0
    %2053 = vmatmul.mubr.bf16.gmra.mrb[0].mxu0 %v2018
    %v2054 = vpop.f32.mrb[0].mxu0
    %v2055 = vadd.f32 0.0, %v2054
    %v2056 = vpop.f32.mrb[0].mxu0
    %v2057 = vpop.f32.mrb[0].mxu0
    %v2058 = vpop.f32.mrb[0].mxu0
    %2059 = vdwg.mxu0
    %v2068 = vunpack.c.l.b16 %v263
    %v2069 = vunpack.c.l.b16 %v264
    %v2070 = vunpack.c.l.b16 %v265
    %v2071 = vunpack.c.l.b16 %v266
    %v2072 = vunpack.c.l.b16 %v267
    %v2073 = vunpack.c.l.b16 %v268
    %v2074 = vunpack.c.l.b16 %v269
    %v2075 = vunpack.c.l.b16 %v270
    %v2076 = vpack.c.b16 %v2069, %v2068
    %v2077 = vpack.c.b16 %v2071, %v2070
    %v2078 = vpack.c.b16 %v2073, %v2072
    %v2079 = vpack.c.b16 %v2075, %v2074
    %v2085 = vsel %vm543, %v1978, 0
    %2087 = vmatprep.subr.bf16.mxu0 0
    %2088 = vmatpush1.bf16.msra.mxu0 %v2076
    %2089 = vmatprep.subr.bf16.mxu0 0
    %2090 = vmatpush1.bf16.msra.mxu0 %v2077
    %2091 = vmatprep.subr.bf16.mxu0 0
    %2092 = vmatpush1.bf16.msra.mxu0 %v2078
    %2093 = vmatprep.subr.bf16.mxu0 0
    %2094 = vmatpush1.bf16.msra.mxu0 %v2079
    %2095 = vmatprep.subr.bf16.mxu0 0
    %2096 = vmatpush1.bf16.msra.mxu0 0
    %2097 = vmatprep.subr.bf16.mxu0 0
    %2098 = vmatpush1.bf16.msra.mxu0 0
    %2099 = vmatprep.subr.bf16.mxu0 0
    %2100 = vmatpush1.bf16.msra.mxu0 0
    %2101 = vmatprep.subr.bf16.mxu0 0
    %2102 = vmatpush1.bf16.msra.mxu0 0
    %2103 = vmatprep.subr.bf16.mxu0 0
    %2104 = vmatpush1.bf16.msra.mxu0 0
    %2105 = vmatprep.subr.bf16.mxu0 0
    %2106 = vmatpush1.bf16.msra.mxu0 0
    %2107 = vmatprep.subr.bf16.mxu0 0
    %2108 = vmatpush1.bf16.msra.mxu0 0
    %2109 = vmatprep.subr.bf16.mxu0 0
    %2110 = vmatpush1.bf16.msra.mxu0 0
    %2111 = vmatprep.subr.bf16.mxu0 0
    %2112 = vmatpush1.bf16.msra.mxu0 0
    %2113 = vmatprep.subr.bf16.mxu0 0
    %2114 = vmatpush1.bf16.msra.mxu0 0
    %2115 = vmatprep.subr.bf16.mxu0 0
    %2116 = vmatpush1.bf16.msra.mxu0 0
    %2117 = vmatprep.subr.bf16.mxu0 0
    %2118 = vmatpush1.bf16.msra.mxu0 0
    %2119 = vmatprep.mubr.bf16.mxu0 0
    %2120 = vmatmul.mubr.bf16.gmra.mrb[0].mxu0 %v2085
    %v2121 = vpop.f32.mrb[0].mxu0
    %v2122 = vadd.f32 0.0, %v2121
    %v2123 = vpop.f32.mrb[0].mxu0
    %v2124 = vpop.f32.mrb[0].mxu0
    %v2125 = vpop.f32.mrb[0].mxu0
    %2126 = vdwg.mxu0
    %v2135 = vunpack.c.l.b16 %v271
    %v2136 = vunpack.c.l.b16 %v272
    %v2137 = vunpack.c.l.b16 %v273
    %v2138 = vunpack.c.l.b16 %v274
    %v2139 = vunpack.c.l.b16 %v275
    %v2140 = vunpack.c.l.b16 %v276
    %v2141 = vunpack.c.l.b16 %v277
    %v2142 = vunpack.c.l.b16 %v278
    %v2143 = vpack.c.b16 %v2136, %v2135
    %v2144 = vpack.c.b16 %v2138, %v2137
    %v2145 = vpack.c.b16 %v2140, %v2139
    %v2146 = vpack.c.b16 %v2142, %v2141
    %v2152 = vsel %vm543, %v1979, 0
    %2154 = vmatprep.subr.bf16.mxu0 0
    %2155 = vmatpush1.bf16.msra.mxu0 %v2143
    %2156 = vmatprep.subr.bf16.mxu0 0
    %2157 = vmatpush1.bf16.msra.mxu0 %v2144
    %2158 = vmatprep.subr.bf16.mxu0 0
    %2159 = vmatpush1.bf16.msra.mxu0 %v2145
    %2160 = vmatprep.subr.bf16.mxu0 0
    %2161 = vmatpush1.bf16.msra.mxu0 %v2146
    %2162 = vmatprep.subr.bf16.mxu0 0
    %2163 = vmatpush1.bf16.msra.mxu0 0
    %2164 = vmatprep.subr.bf16.mxu0 0
    %2165 = vmatpush1.bf16.msra.mxu0 0
    %2166 = vmatprep.subr.bf16.mxu0 0
    %2167 = vmatpush1.bf16.msra.mxu0 0
    %2168 = vmatprep.subr.bf16.mxu0 0
    %2169 = vmatpush1.bf16.msra.mxu0 0
    %2170 = vmatprep.subr.bf16.mxu0 0
    %2171 = vmatpush1.bf16.msra.mxu0 0
    %2172 = vmatprep.subr.bf16.mxu0 0
    %2173 = vmatpush1.bf16.msra.mxu0 0
    %2174 = vmatprep.subr.bf16.mxu0 0
    %2175 = vmatpush1.bf16.msra.mxu0 0
    %2176 = vmatprep.subr.bf16.mxu0 0
    %2177 = vmatpush1.bf16.msra.mxu0 0
    %2178 = vmatprep.subr.bf16.mxu0 0
    %2179 = vmatpush1.bf16.msra.mxu0 0
    %2180 = vmatprep.subr.bf16.mxu0 0
    %2181 = vmatpush1.bf16.msra.mxu0 0
    %2182 = vmatprep.subr.bf16.mxu0 0
    %2183 = vmatpush1.bf16.msra.mxu0 0
    %2184 = vmatprep.subr.bf16.mxu0 0
    %2185 = vmatpush1.bf16.msra.mxu0 0
    %2186 = vmatprep.mubr.bf16.mxu0 0
    %2187 = vmatmul.mubr.bf16.gmra.mrb[0].mxu0 %v2152
    %v2188 = vpop.f32.mrb[0].mxu0
    %v2189 = vadd.f32 0.0, %v2188
    %v2190 = vpop.f32.mrb[0].mxu0
    %v2191 = vpop.f32.mrb[0].mxu0
    %v2192 = vpop.f32.mrb[0].mxu0
    %2193 = vdwg.mxu0
    %v2202 = vunpack.c.l.b16 %v279
    %v2203 = vunpack.c.l.b16 %v280
    %v2204 = vunpack.c.l.b16 %v281
    %v2205 = vunpack.c.l.b16 %v282
    %v2206 = vunpack.c.l.b16 %v283
    %v2207 = vunpack.c.l.b16 %v284
    %v2208 = vunpack.c.l.b16 %v285
    %v2209 = vunpack.c.l.b16 %v286
    %v2210 = vpack.c.b16 %v2203, %v2202
    %v2211 = vpack.c.b16 %v2205, %v2204
    %v2212 = vpack.c.b16 %v2207, %v2206
    %v2213 = vpack.c.b16 %v2209, %v2208
    %v2219 = vsel %vm543, %v1980, 0
    %2221 = vmatprep.subr.bf16.mxu0 0
    %2222 = vmatpush1.bf16.msra.mxu0 %v2210
    %2223 = vmatprep.subr.bf16.mxu0 0
    %2224 = vmatpush1.bf16.msra.mxu0 %v2211
    %2225 = vmatprep.subr.bf16.mxu0 0
    %2226 = vmatpush1.bf16.msra.mxu0 %v2212
    %2227 = vmatprep.subr.bf16.mxu0 0
    %2228 = vmatpush1.bf16.msra.mxu0 %v2213
    %2229 = vmatprep.subr.bf16.mxu0 0
    %2230 = vmatpush1.bf16.msra.mxu0 0
    %2231 = vmatprep.subr.bf16.mxu0 0
    %2232 = vmatpush1.bf16.msra.mxu0 0
    %2233 = vmatprep.subr.bf16.mxu0 0
    %2234 = vmatpush1.bf16.msra.mxu0 0
    %2235 = vmatprep.subr.bf16.mxu0 0
    %2236 = vmatpush1.bf16.msra.mxu0 0
    %2237 = vmatprep.subr.bf16.mxu0 0
    %2238 = vmatpush1.bf16.msra.mxu0 0
    %2239 = vmatprep.subr.bf16.mxu0 0
    %2240 = vmatpush1.bf16.msra.mxu0 0
    %2241 = vmatprep.subr.bf16.mxu0 0
    %2242 = vmatpush1.bf16.msra.mxu0 0
    %2243 = vmatprep.subr.bf16.mxu0 0
    %2244 = vmatpush1.bf16.msra.mxu0 0
    %2245 = vmatprep.subr.bf16.mxu0 0
    %2246 = vmatpush1.bf16.msra.mxu0 0
    %2247 = vmatprep.subr.bf16.mxu0 0
    %2248 = vmatpush1.bf16.msra.mxu0 0
    %2249 = vmatprep.subr.bf16.mxu0 0
    %2250 = vmatpush1.bf16.msra.mxu0 0
    %2251 = vmatprep.subr.bf16.mxu0 0
    %2252 = vmatpush1.bf16.msra.mxu0 0
    %2253 = vmatprep.mubr.bf16.mxu0 0
    %2254 = vmatmul.mubr.bf16.gmra.mrb[0].mxu0 %v2219
    %v2255 = vpop.f32.mrb[0].mxu0
    %v2256 = vadd.f32 0.0, %v2255
    %v2257 = vpop.f32.mrb[0].mxu0
    %v2258 = vpop.f32.mrb[0].mxu0
    %v2259 = vpop.f32.mrb[0].mxu0
    %2260 = vdwg.mxu0
    %v2269 = vunpack.c.l.b16 %v287
    %v2270 = vunpack.c.l.b16 %v288
    %v2271 = vunpack.c.l.b16 %v289
    %v2272 = vunpack.c.l.b16 %v290
    %v2273 = vunpack.c.l.b16 %v291
    %v2274 = vunpack.c.l.b16 %v292
    %v2275 = vunpack.c.l.b16 %v293
    %v2276 = vunpack.c.l.b16 %v294
    %v2277 = vpack.c.b16 %v2270, %v2269
    %v2278 = vpack.c.b16 %v2272, %v2271
    %v2279 = vpack.c.b16 %v2274, %v2273
    %v2280 = vpack.c.b16 %v2276, %v2275
    %v2286 = vsel %vm543, %v1981, 0
    %2288 = vmatprep.subr.bf16.mxu0 0
    %2289 = vmatpush1.bf16.msra.mxu0 %v2277
    %2290 = vmatprep.subr.bf16.mxu0 0
    %2291 = vmatpush1.bf16.msra.mxu0 %v2278
    %2292 = vmatprep.subr.bf16.mxu0 0
    %2293 = vmatpush1.bf16.msra.mxu0 %v2279
    %2294 = vmatprep.subr.bf16.mxu0 0
    %2295 = vmatpush1.bf16.msra.mxu0 %v2280
    %2296 = vmatprep.subr.bf16.mxu0 0
    %2297 = vmatpush1.bf16.msra.mxu0 0
    %2298 = vmatprep.subr.bf16.mxu0 0
    %2299 = vmatpush1.bf16.msra.mxu0 0
    %2300 = vmatprep.subr.bf16.mxu0 0
    %2301 = vmatpush1.bf16.msra.mxu0 0
    %2302 = vmatprep.subr.bf16.mxu0 0
    %2303 = vmatpush1.bf16.msra.mxu0 0
    %2304 = vmatprep.subr.bf16.mxu0 0
    %2305 = vmatpush1.bf16.msra.mxu0 0
    %2306 = vmatprep.subr.bf16.mxu0 0
    %2307 = vmatpush1.bf16.msra.mxu0 0
    %2308 = vmatprep.subr.bf16.mxu0 0
    %2309 = vmatpush1.bf16.msra.mxu0 0
    %2310 = vmatprep.subr.bf16.mxu0 0
    %2311 = vmatpush1.bf16.msra.mxu0 0
    %2312 = vmatprep.subr.bf16.mxu0 0
    %2313 = vmatpush1.bf16.msra.mxu0 0
    %2314 = vmatprep.subr.bf16.mxu0 0
    %2315 = vmatpush1.bf16.msra.mxu0 0
    %2316 = vmatprep.subr.bf16.mxu0 0
    %2317 = vmatpush1.bf16.msra.mxu0 0
    %2318 = vmatprep.subr.bf16.mxu0 0
    %2319 = vmatpush1.bf16.msra.mxu0 0
    %2320 = vmatprep.mubr.bf16.mxu0 0
    %2321 = vmatmul.mubr.bf16.gmra.mrb[0].mxu0 %v2286
    %v2322 = vpop.f32.mrb[0].mxu0
    %v2323 = vadd.f32 0.0, %v2322
    %v2324 = vpop.f32.mrb[0].mxu0
    %v2325 = vpop.f32.mrb[0].mxu0
    %v2326 = vpop.f32.mrb[0].mxu0
    %2327 = vdwg.mxu0
    %v2336 = vunpack.c.l.b16 %v295
    %v2337 = vunpack.c.l.b16 %v296
    %v2338 = vunpack.c.l.b16 %v297
    %v2339 = vunpack.c.l.b16 %v298
    %v2340 = vunpack.c.l.b16 %v299
    %v2341 = vunpack.c.l.b16 %v300
    %v2342 = vunpack.c.l.b16 %v301
    %v2343 = vunpack.c.l.b16 %v302
    %v2344 = vpack.c.b16 %v2337, %v2336
    %v2345 = vpack.c.b16 %v2339, %v2338
    %v2346 = vpack.c.b16 %v2341, %v2340
    %v2347 = vpack.c.b16 %v2343, %v2342
    %v2353 = vsel %vm543, %v1982, 0
    %2355 = vmatprep.subr.bf16.mxu0 0
    %2356 = vmatpush1.bf16.msra.mxu0 %v2344
    %2357 = vmatprep.subr.bf16.mxu0 0
    %2358 = vmatpush1.bf16.msra.mxu0 %v2345
    %2359 = vmatprep.subr.bf16.mxu0 0
    %2360 = vmatpush1.bf16.msra.mxu0 %v2346
    %2361 = vmatprep.subr.bf16.mxu0 0
    %2362 = vmatpush1.bf16.msra.mxu0 %v2347
    %2363 = vmatprep.subr.bf16.mxu0 0
    %2364 = vmatpush1.bf16.msra.mxu0 0
    %2365 = vmatprep.subr.bf16.mxu0 0
    %2366 = vmatpush1.bf16.msra.mxu0 0
    %2367 = vmatprep.subr.bf16.mxu0 0
    %2368 = vmatpush1.bf16.msra.mxu0 0
    %2369 = vmatprep.subr.bf16.mxu0 0
    %2370 = vmatpush1.bf16.msra.mxu0 0
    %2371 = vmatprep.subr.bf16.mxu0 0
    %2372 = vmatpush1.bf16.msra.mxu0 0
    %2373 = vmatprep.subr.bf16.mxu0 0
    %2374 = vmatpush1.bf16.msra.mxu0 0
    %2375 = vmatprep.subr.bf16.mxu0 0
    %2376 = vmatpush1.bf16.msra.mxu0 0
    %2377 = vmatprep.subr.bf16.mxu0 0
    %2378 = vmatpush1.bf16.msra.mxu0 0
    %2379 = vmatprep.subr.bf16.mxu0 0
    %2380 = vmatpush1.bf16.msra.mxu0 0
    %2381 = vmatprep.subr.bf16.mxu0 0
    %2382 = vmatpush1.bf16.msra.mxu0 0
    %2383 = vmatprep.subr.bf16.mxu0 0
    %2384 = vmatpush1.bf16.msra.mxu0 0
    %2385 = vmatprep.subr.bf16.mxu0 0
    %2386 = vmatpush1.bf16.msra.mxu0 0
    %2387 = vmatprep.mubr.bf16.mxu0 0
    %2388 = vmatmul.mubr.bf16.gmra.mrb[0].mxu0 %v2353
    %v2389 = vpop.f32.mrb[0].mxu0
    %v2390 = vadd.f32 0.0, %v2389
    %v2391 = vpop.f32.mrb[0].mxu0
    %v2392 = vpop.f32.mrb[0].mxu0
    %v2393 = vpop.f32.mrb[0].mxu0
    %2394 = vdwg.mxu0
    %v2403 = vunpack.c.l.b16 %v303
    %v2404 = vunpack.c.l.b16 %v304
    %v2405 = vunpack.c.l.b16 %v305
    %v2406 = vunpack.c.l.b16 %v306
    %v2407 = vunpack.c.l.b16 %v307
    %v2408 = vunpack.c.l.b16 %v308
    %v2409 = vunpack.c.l.b16 %v309
    %v2410 = vunpack.c.l.b16 %v310
    %v2411 = vpack.c.b16 %v2404, %v2403
    %v2412 = vpack.c.b16 %v2406, %v2405
    %v2413 = vpack.c.b16 %v2408, %v2407
    %v2414 = vpack.c.b16 %v2410, %v2409
    %v2420 = vsel %vm543, %v1983, 0
    %2422 = vmatprep.subr.bf16.mxu0 0
    %2423 = vmatpush1.bf16.msra.mxu0 %v2411
    %2424 = vmatprep.subr.bf16.mxu0 0
    %2425 = vmatpush1.bf16.msra.mxu0 %v2412
    %2426 = vmatprep.subr.bf16.mxu0 0
    %2427 = vmatpush1.bf16.msra.mxu0 %v2413
    %2428 = vmatprep.subr.bf16.mxu0 0
    %2429 = vmatpush1.bf16.msra.mxu0 %v2414
    %2430 = vmatprep.subr.bf16.mxu0 0
    %2431 = vmatpush1.bf16.msra.mxu0 0
    %2432 = vmatprep.subr.bf16.mxu0 0
    %2433 = vmatpush1.bf16.msra.mxu0 0
    %2434 = vmatprep.subr.bf16.mxu0 0
    %2435 = vmatpush1.bf16.msra.mxu0 0
    %2436 = vmatprep.subr.bf16.mxu0 0
    %2437 = vmatpush1.bf16.msra.mxu0 0
    %2438 = vmatprep.subr.bf16.mxu0 0
    %2439 = vmatpush1.bf16.msra.mxu0 0
    %2440 = vmatprep.subr.bf16.mxu0 0
    %2441 = vmatpush1.bf16.msra.mxu0 0
    %2442 = vmatprep.subr.bf16.mxu0 0
    %2443 = vmatpush1.bf16.msra.mxu0 0
    %2444 = vmatprep.subr.bf16.mxu0 0
    %2445 = vmatpush1.bf16.msra.mxu0 0
    %2446 = vmatprep.subr.bf16.mxu0 0
    %2447 = vmatpush1.bf16.msra.mxu0 0
    %2448 = vmatprep.subr.bf16.mxu0 0
    %2449 = vmatpush1.bf16.msra.mxu0 0
    %2450 = vmatprep.subr.bf16.mxu0 0
    %2451 = vmatpush1.bf16.msra.mxu0 0
    %2452 = vmatprep.subr.bf16.mxu0 0
    %2453 = vmatpush1.bf16.msra.mxu0 0
    %2454 = vmatprep.mubr.bf16.mxu0 0
    %2455 = vmatmul.mubr.bf16.gmra.mrb[0].mxu0 %v2420
    %v2456 = vpop.f32.mrb[0].mxu0
    %v2457 = vadd.f32 0.0, %v2456
    %v2458 = vpop.f32.mrb[0].mxu0
    %v2459 = vpop.f32.mrb[0].mxu0
    %v2460 = vpop.f32.mrb[0].mxu0
    %2461 = vdwg.mxu0
    %v2470 = vunpack.c.l.b16 %v311
    %v2471 = vunpack.c.l.b16 %v312
    %v2472 = vunpack.c.l.b16 %v313
    %v2473 = vunpack.c.l.b16 %v314
    %v2474 = vunpack.c.l.b16 %v315
    %v2475 = vunpack.c.l.b16 %v316
    %v2476 = vunpack.c.l.b16 %v317
    %v2477 = vunpack.c.l.b16 %v318
    %v2478 = vpack.c.b16 %v2471, %v2470
    %v2479 = vpack.c.b16 %v2473, %v2472
    %v2480 = vpack.c.b16 %v2475, %v2474
    %v2481 = vpack.c.b16 %v2477, %v2476
    %v2487 = vsel %vm543, %v1984, 0
    %2489 = vmatprep.subr.bf16.mxu0 0
    %2490 = vmatpush1.bf16.msra.mxu0 %v2478
    %2491 = vmatprep.subr.bf16.mxu0 0
    %2492 = vmatpush1.bf16.msra.mxu0 %v2479
    %2493 = vmatprep.subr.bf16.mxu0 0
    %2494 = vmatpush1.bf16.msra.mxu0 %v2480
    %2495 = vmatprep.subr.bf16.mxu0 0
    %2496 = vmatpush1.bf16.msra.mxu0 %v2481
    %2497 = vmatprep.subr.bf16.mxu0 0
    %2498 = vmatpush1.bf16.msra.mxu0 0
    %2499 = vmatprep.subr.bf16.mxu0 0
    %2500 = vmatpush1.bf16.msra.mxu0 0
    %2501 = vmatprep.subr.bf16.mxu0 0
    %2502 = vmatpush1.bf16.msra.mxu0 0
    %2503 = vmatprep.subr.bf16.mxu0 0
    %2504 = vmatpush1.bf16.msra.mxu0 0
    %2505 = vmatprep.subr.bf16.mxu0 0
    %2506 = vmatpush1.bf16.msra.mxu0 0
    %2507 = vmatprep.subr.bf16.mxu0 0
    %2508 = vmatpush1.bf16.msra.mxu0 0
    %2509 = vmatprep.subr.bf16.mxu0 0
    %2510 = vmatpush1.bf16.msra.mxu0 0
    %2511 = vmatprep.subr.bf16.mxu0 0
    %2512 = vmatpush1.bf16.msra.mxu0 0
    %2513 = vmatprep.subr.bf16.mxu0 0
    %2514 = vmatpush1.bf16.msra.mxu0 0
    %2515 = vmatprep.subr.bf16.mxu0 0
    %2516 = vmatpush1.bf16.msra.mxu0 0
    %2517 = vmatprep.subr.bf16.mxu0 0
    %2518 = vmatpush1.bf16.msra.mxu0 0
    %2519 = vmatprep.subr.bf16.mxu0 0
    %2520 = vmatpush1.bf16.msra.mxu0 0
    %2521 = vmatprep.mubr.bf16.mxu0 0
    %2522 = vmatmul.mubr.bf16.gmra.mrb[0].mxu0 %v2487
    %v2523 = vpop.f32.mrb[0].mxu0
    %v2524 = vadd.f32 0.0, %v2523
    %v2525 = vpop.f32.mrb[0].mxu0
    %v2526 = vpop.f32.mrb[0].mxu0
    %v2527 = vpop.f32.mrb[0].mxu0
    %2528 = vdwg.mxu0
    %v2537 = vunpack.c.l.b16 %v319
    %v2538 = vunpack.c.l.b16 %v320
    %v2539 = vunpack.c.l.b16 %v321
    %v2540 = vunpack.c.l.b16 %v322
    %v2541 = vunpack.c.l.b16 %v323
    %v2542 = vunpack.c.l.b16 %v324
    %v2543 = vunpack.c.l.b16 %v325
    %v2544 = vunpack.c.l.b16 %v326
    %v2545 = vpack.c.b16 %v2538, %v2537
    %v2546 = vpack.c.b16 %v2540, %v2539
    %v2547 = vpack.c.b16 %v2542, %v2541
    %v2548 = vpack.c.b16 %v2544, %v2543
    %v2554 = vsel %vm543, %v1985, 0
    %2556 = vmatprep.subr.bf16.mxu0 0
    %2557 = vmatpush1.bf16.msra.mxu0 %v2545
    %2558 = vmatprep.subr.bf16.mxu0 0
    %2559 = vmatpush1.bf16.msra.mxu0 %v2546
    %2560 = vmatprep.subr.bf16.mxu0 0
    %2561 = vmatpush1.bf16.msra.mxu0 %v2547
    %2562 = vmatprep.subr.bf16.mxu0 0
    %2563 = vmatpush1.bf16.msra.mxu0 %v2548
    %2564 = vmatprep.subr.bf16.mxu0 0
    %2565 = vmatpush1.bf16.msra.mxu0 0
    %2566 = vmatprep.subr.bf16.mxu0 0
    %2567 = vmatpush1.bf16.msra.mxu0 0
    %2568 = vmatprep.subr.bf16.mxu0 0
    %2569 = vmatpush1.bf16.msra.mxu0 0
    %2570 = vmatprep.subr.bf16.mxu0 0
    %2571 = vmatpush1.bf16.msra.mxu0 0
    %2572 = vmatprep.subr.bf16.mxu0 0
    %2573 = vmatpush1.bf16.msra.mxu0 0
    %2574 = vmatprep.subr.bf16.mxu0 0
    %2575 = vmatpush1.bf16.msra.mxu0 0
    %2576 = vmatprep.subr.bf16.mxu0 0
    %2577 = vmatpush1.bf16.msra.mxu0 0
    %2578 = vmatprep.subr.bf16.mxu0 0
    %2579 = vmatpush1.bf16.msra.mxu0 0
    %2580 = vmatprep.subr.bf16.mxu0 0
    %2581 = vmatpush1.bf16.msra.mxu0 0
    %2582 = vmatprep.subr.bf16.mxu0 0
    %2583 = vmatpush1.bf16.msra.mxu0 0
    %2584 = vmatprep.subr.bf16.mxu0 0
    %2585 = vmatpush1.bf16.msra.mxu0 0
    %2586 = vmatprep.subr.bf16.mxu0 0
    %2587 = vmatpush1.bf16.msra.mxu0 0
    %2588 = vmatprep.mubr.bf16.mxu0 0
    %2589 = vmatmul.mubr.bf16.gmra.mrb[0].mxu0 %v2554
    %v2590 = vpop.f32.mrb[0].mxu0
    %v2591 = vadd.f32 0.0, %v2590
    %v2592 = vpop.f32.mrb[0].mxu0
    %v2593 = vpop.f32.mrb[0].mxu0
    %v2594 = vpop.f32.mrb[0].mxu0
    %2595 = vdwg.mxu0
    %v2604 = vunpack.c.l.b16 %v327
    %v2605 = vunpack.c.l.b16 %v328
    %v2606 = vunpack.c.l.b16 %v329
    %v2607 = vunpack.c.l.b16 %v330
    %v2608 = vunpack.c.l.b16 %v331
    %v2609 = vunpack.c.l.b16 %v332
    %v2610 = vunpack.c.l.b16 %v333
    %v2611 = vunpack.c.l.b16 %v334
    %v2612 = vpack.c.b16 %v2605, %v2604
    %v2613 = vpack.c.b16 %v2607, %v2606
    %v2614 = vpack.c.b16 %v2609, %v2608
    %v2615 = vpack.c.b16 %v2611, %v2610
    %v2621 = vsel %vm543, %v1986, 0
    %2623 = vmatprep.subr.bf16.mxu0 0
    %2624 = vmatpush1.bf16.msra.mxu0 %v2612
    %2625 = vmatprep.subr.bf16.mxu0 0
    %2626 = vmatpush1.bf16.msra.mxu0 %v2613
    %2627 = vmatprep.subr.bf16.mxu0 0
    %2628 = vmatpush1.bf16.msra.mxu0 %v2614
    %2629 = vmatprep.subr.bf16.mxu0 0
    %2630 = vmatpush1.bf16.msra.mxu0 %v2615
    %2631 = vmatprep.subr.bf16.mxu0 0
    %2632 = vmatpush1.bf16.msra.mxu0 0
    %2633 = vmatprep.subr.bf16.mxu0 0
    %2634 = vmatpush1.bf16.msra.mxu0 0
    %2635 = vmatprep.subr.bf16.mxu0 0
    %2636 = vmatpush1.bf16.msra.mxu0 0
    %2637 = vmatprep.subr.bf16.mxu0 0
    %2638 = vmatpush1.bf16.msra.mxu0 0
    %2639 = vmatprep.subr.bf16.mxu0 0
    %2640 = vmatpush1.bf16.msra.mxu0 0
    %2641 = vmatprep.subr.bf16.mxu0 0
    %2642 = vmatpush1.bf16.msra.mxu0 0
    %2643 = vmatprep.subr.bf16.mxu0 0
    %2644 = vmatpush1.bf16.msra.mxu0 0
    %2645 = vmatprep.subr.bf16.mxu0 0
    %2646 = vmatpush1.bf16.msra.mxu0 0
    %2647 = vmatprep.subr.bf16.mxu0 0
    %2648 = vmatpush1.bf16.msra.mxu0 0
    %2649 = vmatprep.subr.bf16.mxu0 0
    %2650 = vmatpush1.bf16.msra.mxu0 0
    %2651 = vmatprep.subr.bf16.mxu0 0
    %2652 = vmatpush1.bf16.msra.mxu0 0
    %2653 = vmatprep.subr.bf16.mxu0 0
    %2654 = vmatpush1.bf16.msra.mxu0 0
    %2655 = vmatprep.mubr.bf16.mxu0 0
    %2656 = vmatmul.mubr.bf16.gmra.mrb[0].mxu0 %v2621
    %v2657 = vpop.f32.mrb[0].mxu0
    %v2658 = vadd.f32 0.0, %v2657
    %v2659 = vpop.f32.mrb[0].mxu0
    %v2660 = vpop.f32.mrb[0].mxu0
    %v2661 = vpop.f32.mrb[0].mxu0
    %2662 = vdwg.mxu0
    %v2671 = vunpack.c.l.b16 %v335
    %v2672 = vunpack.c.l.b16 %v336
    %v2673 = vunpack.c.l.b16 %v337
    %v2674 = vunpack.c.l.b16 %v338
    %v2675 = vunpack.c.l.b16 %v339
    %v2676 = vunpack.c.l.b16 %v340
    %v2677 = vunpack.c.l.b16 %v341
    %v2678 = vunpack.c.l.b16 %v342
    %v2679 = vpack.c.b16 %v2672, %v2671
    %v2680 = vpack.c.b16 %v2674, %v2673
    %v2681 = vpack.c.b16 %v2676, %v2675
    %v2682 = vpack.c.b16 %v2678, %v2677
    %v2688 = vsel %vm543, %v1987, 0
    %2690 = vmatprep.subr.bf16.mxu0 0
    %2691 = vmatpush1.bf16.msra.mxu0 %v2679
    %2692 = vmatprep.subr.bf16.mxu0 0
    %2693 = vmatpush1.bf16.msra.mxu0 %v2680
    %2694 = vmatprep.subr.bf16.mxu0 0
    %2695 = vmatpush1.bf16.msra.mxu0 %v2681
    %2696 = vmatprep.subr.bf16.mxu0 0
    %2697 = vmatpush1.bf16.msra.mxu0 %v2682
    %2698 = vmatprep.subr.bf16.mxu0 0
    %2699 = vmatpush1.bf16.msra.mxu0 0
    %2700 = vmatprep.subr.bf16.mxu0 0
    %2701 = vmatpush1.bf16.msra.mxu0 0
    %2702 = vmatprep.subr.bf16.mxu0 0
    %2703 = vmatpush1.bf16.msra.mxu0 0
    %2704 = vmatprep.subr.bf16.mxu0 0
    %2705 = vmatpush1.bf16.msra.mxu0 0
    %2706 = vmatprep.subr.bf16.mxu0 0
    %2707 = vmatpush1.bf16.msra.mxu0 0
    %2708 = vmatprep.subr.bf16.mxu0 0
    %2709 = vmatpush1.bf16.msra.mxu0 0
    %2710 = vmatprep.subr.bf16.mxu0 0
    %2711 = vmatpush1.bf16.msra.mxu0 0
    %2712 = vmatprep.subr.bf16.mxu0 0
    %2713 = vmatpush1.bf16.msra.mxu0 0
    %2714 = vmatprep.subr.bf16.mxu0 0
    %2715 = vmatpush1.bf16.msra.mxu0 0
    %2716 = vmatprep.subr.bf16.mxu0 0
    %2717 = vmatpush1.bf16.msra.mxu0 0
    %2718 = vmatprep.subr.bf16.mxu0 0
    %2719 = vmatpush1.bf16.msra.mxu0 0
    %2720 = vmatprep.subr.bf16.mxu0 0
    %2721 = vmatpush1.bf16.msra.mxu0 0
    %2722 = vmatprep.mubr.bf16.mxu0 0
    %2723 = vmatmul.mubr.bf16.gmra.mrb[0].mxu0 %v2688
    %v2724 = vpop.f32.mrb[0].mxu0
    %v2725 = vadd.f32 0.0, %v2724
    %v2726 = vpop.f32.mrb[0].mxu0
    %v2727 = vpop.f32.mrb[0].mxu0
    %v2728 = vpop.f32.mrb[0].mxu0
    %2729 = vdwg.mxu0
    %v2738 = vunpack.c.l.b16 %v343
    %v2739 = vunpack.c.l.b16 %v344
    %v2740 = vunpack.c.l.b16 %v345
    %v2741 = vunpack.c.l.b16 %v346
    %v2742 = vunpack.c.l.b16 %v347
    %v2743 = vunpack.c.l.b16 %v348
    %v2744 = vunpack.c.l.b16 %v349
    %v2745 = vunpack.c.l.b16 %v350
    %v2746 = vpack.c.b16 %v2739, %v2738
    %v2747 = vpack.c.b16 %v2741, %v2740
    %v2748 = vpack.c.b16 %v2743, %v2742
    %v2749 = vpack.c.b16 %v2745, %v2744
    %v2755 = vsel %vm543, %v1988, 0
    %2757 = vmatprep.subr.bf16.mxu0 0
    %2758 = vmatpush1.bf16.msra.mxu0 %v2746
    %2759 = vmatprep.subr.bf16.mxu0 0
    %2760 = vmatpush1.bf16.msra.mxu0 %v2747
    %2761 = vmatprep.subr.bf16.mxu0 0
    %2762 = vmatpush1.bf16.msra.mxu0 %v2748
    %2763 = vmatprep.subr.bf16.mxu0 0
    %2764 = vmatpush1.bf16.msra.mxu0 %v2749
    %2765 = vmatprep.subr.bf16.mxu0 0
    %2766 = vmatpush1.bf16.msra.mxu0 0
    %2767 = vmatprep.subr.bf16.mxu0 0
    %2768 = vmatpush1.bf16.msra.mxu0 0
    %2769 = vmatprep.subr.bf16.mxu0 0
    %2770 = vmatpush1.bf16.msra.mxu0 0
    %2771 = vmatprep.subr.bf16.mxu0 0
    %2772 = vmatpush1.bf16.msra.mxu0 0
    %2773 = vmatprep.subr.bf16.mxu0 0
    %2774 = vmatpush1.bf16.msra.mxu0 0
    %2775 = vmatprep.subr.bf16.mxu0 0
    %2776 = vmatpush1.bf16.msra.mxu0 0
    %2777 = vmatprep.subr.bf16.mxu0 0
    %2778 = vmatpush1.bf16.msra.mxu0 0
    %2779 = vmatprep.subr.bf16.mxu0 0
    %2780 = vmatpush1.bf16.msra.mxu0 0
    %2781 = vmatprep.subr.bf16.mxu0 0
    %2782 = vmatpush1.bf16.msra.mxu0 0
    %2783 = vmatprep.subr.bf16.mxu0 0
    %2784 = vmatpush1.bf16.msra.mxu0 0
    %2785 = vmatprep.subr.bf16.mxu0 0
    %2786 = vmatpush1.bf16.msra.mxu0 0
    %2787 = vmatprep.subr.bf16.mxu0 0
    %2788 = vmatpush1.bf16.msra.mxu0 0
    %2789 = vmatprep.mubr.bf16.mxu0 0
    %2790 = vmatmul.mubr.bf16.gmra.mrb[0].mxu0 %v2755
    %v2791 = vpop.f32.mrb[0].mxu0
    %v2792 = vadd.f32 0.0, %v2791
    %v2793 = vpop.f32.mrb[0].mxu0
    %v2794 = vpop.f32.mrb[0].mxu0
    %v2795 = vpop.f32.mrb[0].mxu0
    %2796 = vdwg.mxu0
    %v2805 = vunpack.c.l.b16 %v351
    %v2806 = vunpack.c.l.b16 %v352
    %v2807 = vunpack.c.l.b16 %v353
    %v2808 = vunpack.c.l.b16 %v354
    %v2809 = vunpack.c.l.b16 %v355
    %v2810 = vunpack.c.l.b16 %v356
    %v2811 = vunpack.c.l.b16 %v357
    %v2812 = vunpack.c.l.b16 %v358
    %v2813 = vpack.c.b16 %v2806, %v2805
    %v2814 = vpack.c.b16 %v2808, %v2807
    %v2815 = vpack.c.b16 %v2810, %v2809
    %v2816 = vpack.c.b16 %v2812, %v2811
    %v2822 = vsel %vm543, %v1989, 0
    %2824 = vmatprep.subr.bf16.mxu0 0
    %2825 = vmatpush1.bf16.msra.mxu0 %v2813
    %2826 = vmatprep.subr.bf16.mxu0 0
    %2827 = vmatpush1.bf16.msra.mxu0 %v2814
    %2828 = vmatprep.subr.bf16.mxu0 0
    %2829 = vmatpush1.bf16.msra.mxu0 %v2815
    %2830 = vmatprep.subr.bf16.mxu0 0
    %2831 = vmatpush1.bf16.msra.mxu0 %v2816
    %2832 = vmatprep.subr.bf16.mxu0 0
    %2833 = vmatpush1.bf16.msra.mxu0 0
    %2834 = vmatprep.subr.bf16.mxu0 0
    %2835 = vmatpush1.bf16.msra.mxu0 0
    %2836 = vmatprep.subr.bf16.mxu0 0
    %2837 = vmatpush1.bf16.msra.mxu0 0
    %2838 = vmatprep.subr.bf16.mxu0 0
    %2839 = vmatpush1.bf16.msra.mxu0 0
    %2840 = vmatprep.subr.bf16.mxu0 0
    %2841 = vmatpush1.bf16.msra.mxu0 0
    %2842 = vmatprep.subr.bf16.mxu0 0
    %2843 = vmatpush1.bf16.msra.mxu0 0
    %2844 = vmatprep.subr.bf16.mxu0 0
    %2845 = vmatpush1.bf16.msra.mxu0 0
    %2846 = vmatprep.subr.bf16.mxu0 0
    %2847 = vmatpush1.bf16.msra.mxu0 0
    %2848 = vmatprep.subr.bf16.mxu0 0
    %2849 = vmatpush1.bf16.msra.mxu0 0
    %2850 = vmatprep.subr.bf16.mxu0 0
    %2851 = vmatpush1.bf16.msra.mxu0 0
    %2852 = vmatprep.subr.bf16.mxu0 0
    %2853 = vmatpush1.bf16.msra.mxu0 0
    %2854 = vmatprep.subr.bf16.mxu0 0
    %2855 = vmatpush1.bf16.msra.mxu0 0
    %2856 = vmatprep.mubr.bf16.mxu0 0
    %2857 = vmatmul.mubr.bf16.gmra.mrb[0].mxu0 %v2822
    %v2858 = vpop.f32.mrb[0].mxu0
    %v2859 = vadd.f32 0.0, %v2858
    %v2860 = vpop.f32.mrb[0].mxu0
    %v2861 = vpop.f32.mrb[0].mxu0
    %v2862 = vpop.f32.mrb[0].mxu0
    %2863 = vdwg.mxu0
    %v2872 = vunpack.c.l.b16 %v359
    %v2873 = vunpack.c.l.b16 %v360
    %v2874 = vunpack.c.l.b16 %v361
    %v2875 = vunpack.c.l.b16 %v362
    %v2876 = vunpack.c.l.b16 %v363
    %v2877 = vunpack.c.l.b16 %v364
    %v2878 = vunpack.c.l.b16 %v365
    %v2879 = vunpack.c.l.b16 %v366
    %v2880 = vpack.c.b16 %v2873, %v2872
    %v2881 = vpack.c.b16 %v2875, %v2874
    %v2882 = vpack.c.b16 %v2877, %v2876
    %v2883 = vpack.c.b16 %v2879, %v2878
    %v2889 = vsel %vm543, %v1990, 0
    %2891 = vmatprep.subr.bf16.mxu0 0
    %2892 = vmatpush1.bf16.msra.mxu0 %v2880
    %2893 = vmatprep.subr.bf16.mxu0 0
    %2894 = vmatpush1.bf16.msra.mxu0 %v2881
    %2895 = vmatprep.subr.bf16.mxu0 0
    %2896 = vmatpush1.bf16.msra.mxu0 %v2882
    %2897 = vmatprep.subr.bf16.mxu0 0
    %2898 = vmatpush1.bf16.msra.mxu0 %v2883
    %2899 = vmatprep.subr.bf16.mxu0 0
    %2900 = vmatpush1.bf16.msra.mxu0 0
    %2901 = vmatprep.subr.bf16.mxu0 0
    %2902 = vmatpush1.bf16.msra.mxu0 0
    %2903 = vmatprep.subr.bf16.mxu0 0
    %2904 = vmatpush1.bf16.msra.mxu0 0
    %2905 = vmatprep.subr.bf16.mxu0 0
    %2906 = vmatpush1.bf16.msra.mxu0 0
    %2907 = vmatprep.subr.bf16.mxu0 0
    %2908 = vmatpush1.bf16.msra.mxu0 0
    %2909 = vmatprep.subr.bf16.mxu0 0
    %2910 = vmatpush1.bf16.msra.mxu0 0
    %2911 = vmatprep.subr.bf16.mxu0 0
    %2912 = vmatpush1.bf16.msra.mxu0 0
    %2913 = vmatprep.subr.bf16.mxu0 0
    %2914 = vmatpush1.bf16.msra.mxu0 0
    %2915 = vmatprep.subr.bf16.mxu0 0
    %2916 = vmatpush1.bf16.msra.mxu0 0
    %2917 = vmatprep.subr.bf16.mxu0 0
    %2918 = vmatpush1.bf16.msra.mxu0 0
    %2919 = vmatprep.subr.bf16.mxu0 0
    %2920 = vmatpush1.bf16.msra.mxu0 0
    %2921 = vmatprep.subr.bf16.mxu0 0
    %2922 = vmatpush1.bf16.msra.mxu0 0
    %2923 = vmatprep.mubr.bf16.mxu0 0
    %2924 = vmatmul.mubr.bf16.gmra.mrb[0].mxu0 %v2889
    %v2925 = vpop.f32.mrb[0].mxu0
    %v2926 = vadd.f32 0.0, %v2925
    %v2927 = vpop.f32.mrb[0].mxu0
    %v2928 = vpop.f32.mrb[0].mxu0
    %v2929 = vpop.f32.mrb[0].mxu0
    %2930 = vdwg.mxu0
    %v2939 = vunpack.c.l.b16 %v367
    %v2940 = vunpack.c.l.b16 %v368
    %v2941 = vunpack.c.l.b16 %v369
    %v2942 = vunpack.c.l.b16 %v370
    %v2943 = vunpack.c.l.b16 %v371
    %v2944 = vunpack.c.l.b16 %v372
    %v2945 = vunpack.c.l.b16 %v373
    %v2946 = vunpack.c.l.b16 %v374
    %v2947 = vpack.c.b16 %v2940, %v2939
    %v2948 = vpack.c.b16 %v2942, %v2941
    %v2949 = vpack.c.b16 %v2944, %v2943
    %v2950 = vpack.c.b16 %v2946, %v2945
    %v2956 = vsel %vm543, %v1991, 0
    %2958 = vmatprep.subr.bf16.mxu0 0
    %2959 = vmatpush1.bf16.msra.mxu0 %v2947
    %2960 = vmatprep.subr.bf16.mxu0 0
    %2961 = vmatpush1.bf16.msra.mxu0 %v2948
    %2962 = vmatprep.subr.bf16.mxu0 0
    %2963 = vmatpush1.bf16.msra.mxu0 %v2949
    %2964 = vmatprep.subr.bf16.mxu0 0
    %2965 = vmatpush1.bf16.msra.mxu0 %v2950
    %2966 = vmatprep.subr.bf16.mxu0 0
    %2967 = vmatpush1.bf16.msra.mxu0 0
    %2968 = vmatprep.subr.bf16.mxu0 0
    %2969 = vmatpush1.bf16.msra.mxu0 0
    %2970 = vmatprep.subr.bf16.mxu0 0
    %2971 = vmatpush1.bf16.msra.mxu0 0
    %2972 = vmatprep.subr.bf16.mxu0 0
    %2973 = vmatpush1.bf16.msra.mxu0 0
    %2974 = vmatprep.subr.bf16.mxu0 0
    %2975 = vmatpush1.bf16.msra.mxu0 0
    %2976 = vmatprep.subr.bf16.mxu0 0
    %2977 = vmatpush1.bf16.msra.mxu0 0
    %2978 = vmatprep.subr.bf16.mxu0 0
    %2979 = vmatpush1.bf16.msra.mxu0 0
    %2980 = vmatprep.subr.bf16.mxu0 0
    %2981 = vmatpush1.bf16.msra.mxu0 0
    %2982 = vmatprep.subr.bf16.mxu0 0
    %2983 = vmatpush1.bf16.msra.mxu0 0
    %2984 = vmatprep.subr.bf16.mxu0 0
    %2985 = vmatpush1.bf16.msra.mxu0 0
    %2986 = vmatprep.subr.bf16.mxu0 0
    %2987 = vmatpush1.bf16.msra.mxu0 0
    %2988 = vmatprep.subr.bf16.mxu0 0
    %2989 = vmatpush1.bf16.msra.mxu0 0
    %2990 = vmatprep.mubr.bf16.mxu0 0
    %2991 = vmatmul.mubr.bf16.gmra.mrb[0].mxu0 %v2956
    %v2992 = vpop.f32.mrb[0].mxu0
    %v2993 = vadd.f32 0.0, %v2992
    %v2994 = vpop.f32.mrb[0].mxu0
    %v2995 = vpop.f32.mrb[0].mxu0
    %v2996 = vpop.f32.mrb[0].mxu0
    %2997 = vdwg.mxu0
    %v3006 = vunpack.c.l.b16 %v375
    %v3007 = vunpack.c.l.b16 %v376
    %v3008 = vunpack.c.l.b16 %v377
    %v3009 = vunpack.c.l.b16 %v378
    %v3010 = vunpack.c.l.b16 %v379
    %v3011 = vunpack.c.l.b16 %v380
    %v3012 = vunpack.c.l.b16 %v381
    %v3013 = vunpack.c.l.b16 %v382
    %v3014 = vpack.c.b16 %v3007, %v3006
    %v3015 = vpack.c.b16 %v3009, %v3008
    %v3016 = vpack.c.b16 %v3011, %v3010
    %v3017 = vpack.c.b16 %v3013, %v3012
    %v3023 = vsel %vm543, %v1992, 0
    %3025 = vmatprep.subr.bf16.mxu0 0
    %3026 = vmatpush1.bf16.msra.mxu0 %v3014
    %3027 = vmatprep.subr.bf16.mxu0 0
    %3028 = vmatpush1.bf16.msra.mxu0 %v3015
    %3029 = vmatprep.subr.bf16.mxu0 0
    %3030 = vmatpush1.bf16.msra.mxu0 %v3016
    %3031 = vmatprep.subr.bf16.mxu0 0
    %3032 = vmatpush1.bf16.msra.mxu0 %v3017
    %3033 = vmatprep.subr.bf16.mxu0 0
    %3034 = vmatpush1.bf16.msra.mxu0 0
    %3035 = vmatprep.subr.bf16.mxu0 0
    %3036 = vmatpush1.bf16.msra.mxu0 0
    %3037 = vmatprep.subr.bf16.mxu0 0
    %3038 = vmatpush1.bf16.msra.mxu0 0
    %3039 = vmatprep.subr.bf16.mxu0 0
    %3040 = vmatpush1.bf16.msra.mxu0 0
    %3041 = vmatprep.subr.bf16.mxu0 0
    %3042 = vmatpush1.bf16.msra.mxu0 0
    %3043 = vmatprep.subr.bf16.mxu0 0
    %3044 = vmatpush1.bf16.msra.mxu0 0
    %3045 = vmatprep.subr.bf16.mxu0 0
    %3046 = vmatpush1.bf16.msra.mxu0 0
    %3047 = vmatprep.subr.bf16.mxu0 0
    %3048 = vmatpush1.bf16.msra.mxu0 0
    %3049 = vmatprep.subr.bf16.mxu0 0
    %3050 = vmatpush1.bf16.msra.mxu0 0
    %3051 = vmatprep.subr.bf16.mxu0 0
    %3052 = vmatpush1.bf16.msra.mxu0 0
    %3053 = vmatprep.subr.bf16.mxu0 0
    %3054 = vmatpush1.bf16.msra.mxu0 0
    %3055 = vmatprep.subr.bf16.mxu0 0
    %3056 = vmatpush1.bf16.msra.mxu0 0
    %3057 = vmatprep.mubr.bf16.mxu0 0
    %3058 = vmatmul.mubr.bf16.gmra.mrb[0].mxu0 %v3023
    %v3059 = vpop.f32.mrb[0].mxu0
    %v3060 = vadd.f32 0.0, %v3059
    %v3061 = vpop.f32.mrb[0].mxu0
    %v3062 = vpop.f32.mrb[0].mxu0
    %v3063 = vpop.f32.mrb[0].mxu0
    %3064 = vdwg.mxu0
    %v3065 = vcombine.low %v2055, %v2189
    %v3066 = vcombine.high %v2055, %v2189
    %v3068 = vunpack.c.l.s4 1983009808
    %v3069 = vunpack.c.0.s8 %v3068
    %v3070 = vlaneseq
    %v3071 = vshrl.u32 %v3070, 7
    %v3072 = vsub.s32 %v3069, %v3071
    %v3073 = vrot.slane %v3065, %v3072
    %v3075 = vunpack.c.l.s4 1983009808
    %v3076 = vunpack.c.0.s8 %v3075
    %v3077 = vlaneseq
    %v3078 = vshrl.u32 %v3077, 7
    %v3079 = vsub.s32 %v3076, %v3078
    %v3080 = vrot.slane %v3066, %v3079
    %v3081 = vcombine.low %v2122, %v2256
    %v3082 = vcombine.high %v2122, %v2256
    %v3084 = vunpack.c.l.s4 1983009808
    %v3085 = vunpack.c.0.s8 %v3084
    %v3086 = vlaneseq
    %v3087 = vshrl.u32 %v3086, 7
    %v3088 = vsub.s32 %v3085, %v3087
    %v3089 = vrot.slane %v3081, %v3088
    %v3091 = vunpack.c.l.s4 1983009808
    %v3092 = vunpack.c.0.s8 %v3091
    %v3093 = vlaneseq
    %v3094 = vshrl.u32 %v3093, 7
    %v3095 = vsub.s32 %v3092, %v3094
    %v3096 = vrot.slane %v3082, %v3095
    %v3097 = vcombine.low %v2323, %v2457
    %v3098 = vcombine.high %v2323, %v2457
    %v3100 = vunpack.c.l.s4 1983009808
    %v3101 = vunpack.c.0.s8 %v3100
    %v3102 = vlaneseq
    %v3103 = vshrl.u32 %v3102, 7
    %v3104 = vsub.s32 %v3101, %v3103
    %v3105 = vrot.slane %v3097, %v3104
    %v3107 = vunpack.c.l.s4 1983009808
    %v3108 = vunpack.c.0.s8 %v3107
    %v3109 = vlaneseq
    %v3110 = vshrl.u32 %v3109, 7
    %v3111 = vsub.s32 %v3108, %v3110
    %v3112 = vrot.slane %v3098, %v3111
    %v3113 = vcombine.low %v2390, %v2524
    %v3114 = vcombine.high %v2390, %v2524
    %v3116 = vunpack.c.l.s4 1983009808
    %v3117 = vunpack.c.0.s8 %v3116
    %v3118 = vlaneseq
    %v3119 = vshrl.u32 %v3118, 7
    %v3120 = vsub.s32 %v3117, %v3119
    %v3121 = vrot.slane %v3113, %v3120
    %v3123 = vunpack.c.l.s4 1983009808
    %v3124 = vunpack.c.0.s8 %v3123
    %v3125 = vlaneseq
    %v3126 = vshrl.u32 %v3125, 7
    %v3127 = vsub.s32 %v3124, %v3126
    %v3128 = vrot.slane %v3114, %v3127
    %v3129 = vcombine.low %v3073, %v3089
    %v3130 = vcombine.high %v3073, %v3089
    %v3132 = vunpack.c.l.s4 1934713408
    %v3133 = vunpack.c.0.s8 %v3132
    %v3134 = vlaneseq
    %v3135 = vshrl.u32 %v3134, 7
    %v3136 = vsub.s32 %v3133, %v3135
    %v3137 = vrot.slane %v3129, %v3136
    %v3139 = vunpack.c.l.s4 1934713408
    %v3140 = vunpack.c.0.s8 %v3139
    %v3141 = vlaneseq
    %v3142 = vshrl.u32 %v3141, 7
    %v3143 = vsub.s32 %v3140, %v3142
    %v3144 = vrot.slane %v3130, %v3143
    %v3145 = vcombine.low %v3080, %v3096
    %v3146 = vcombine.high %v3080, %v3096
    %v3148 = vunpack.c.l.s4 1934713408
    %v3149 = vunpack.c.0.s8 %v3148
    %v3150 = vlaneseq
    %v3151 = vshrl.u32 %v3150, 7
    %v3152 = vsub.s32 %v3149, %v3151
    %v3153 = vrot.slane %v3145, %v3152
    %v3155 = vunpack.c.l.s4 1934713408
    %v3156 = vunpack.c.0.s8 %v3155
    %v3157 = vlaneseq
    %v3158 = vshrl.u32 %v3157, 7
    %v3159 = vsub.s32 %v3156, %v3158
    %v3160 = vrot.slane %v3146, %v3159
    %v3161 = vcombine.low %v3105, %v3121
    %v3162 = vcombine.high %v3105, %v3121
    %v3164 = vunpack.c.l.s4 1934713408
    %v3165 = vunpack.c.0.s8 %v3164
    %v3166 = vlaneseq
    %v3167 = vshrl.u32 %v3166, 7
    %v3168 = vsub.s32 %v3165, %v3167
    %v3169 = vrot.slane %v3161, %v3168
    %v3171 = vunpack.c.l.s4 1934713408
    %v3172 = vunpack.c.0.s8 %v3171
    %v3173 = vlaneseq
    %v3174 = vshrl.u32 %v3173, 7
    %v3175 = vsub.s32 %v3172, %v3174
    %v3176 = vrot.slane %v3162, %v3175
    %v3177 = vcombine.low %v3112, %v3128
    %v3178 = vcombine.high %v3112, %v3128
    %v3180 = vunpack.c.l.s4 1934713408
    %v3181 = vunpack.c.0.s8 %v3180
    %v3182 = vlaneseq
    %v3183 = vshrl.u32 %v3182, 7
    %v3184 = vsub.s32 %v3181, %v3183
    %v3185 = vrot.slane %v3177, %v3184
    %v3187 = vunpack.c.l.s4 1934713408
    %v3188 = vunpack.c.0.s8 %v3187
    %v3189 = vlaneseq
    %v3190 = vshrl.u32 %v3189, 7
    %v3191 = vsub.s32 %v3188, %v3190
    %v3192 = vrot.slane %v3178, %v3191
    %v3193 = vcombine.low %v3137, %v3169
    %v3194 = vcombine.high %v3137, %v3169
    %v3195 = vcombine.low %v3144, %v3176
    %v3196 = vcombine.high %v3144, %v3176
    %v3197 = vcombine.low %v3153, %v3185
    %v3198 = vcombine.high %v3153, %v3185
    %v3199 = vcombine.low %v3160, %v3192
    %v3200 = vcombine.high %v3160, %v3192
    %v3201 = vcombine.low %v2591, %v2725
    %v3202 = vcombine.high %v2591, %v2725
    %v3204 = vunpack.c.l.s4 1983009808
    %v3205 = vunpack.c.0.s8 %v3204
    %v3206 = vlaneseq
    %v3207 = vshrl.u32 %v3206, 7
    %v3208 = vsub.s32 %v3205, %v3207
    %v3209 = vrot.slane %v3201, %v3208
    %v3211 = vunpack.c.l.s4 1983009808
    %v3212 = vunpack.c.0.s8 %v3211
    %v3213 = vlaneseq
    %v3214 = vshrl.u32 %v3213, 7
    %v3215 = vsub.s32 %v3212, %v3214
    %v3216 = vrot.slane %v3202, %v3215
    %v3217 = vcombine.low %v2658, %v2792
    %v3218 = vcombine.high %v2658, %v2792
    %v3220 = vunpack.c.l.s4 1983009808
    %v3221 = vunpack.c.0.s8 %v3220
    %v3222 = vlaneseq
    %v3223 = vshrl.u32 %v3222, 7
    %v3224 = vsub.s32 %v3221, %v3223
    %v3225 = vrot.slane %v3217, %v3224
    %v3227 = vunpack.c.l.s4 1983009808
    %v3228 = vunpack.c.0.s8 %v3227
    %v3229 = vlaneseq
    %v3230 = vshrl.u32 %v3229, 7
    %v3231 = vsub.s32 %v3228, %v3230
    %v3232 = vrot.slane %v3218, %v3231
    %v3233 = vcombine.low %v2859, %v2993
    %v3234 = vcombine.high %v2859, %v2993
    %v3236 = vunpack.c.l.s4 1983009808
    %v3237 = vunpack.c.0.s8 %v3236
    %v3238 = vlaneseq
    %v3239 = vshrl.u32 %v3238, 7
    %v3240 = vsub.s32 %v3237, %v3239
    %v3241 = vrot.slane %v3233, %v3240
    %v3243 = vunpack.c.l.s4 1983009808
    %v3244 = vunpack.c.0.s8 %v3243
    %v3245 = vlaneseq
    %v3246 = vshrl.u32 %v3245, 7
    %v3247 = vsub.s32 %v3244, %v3246
    %v3248 = vrot.slane %v3234, %v3247
    %v3249 = vcombine.low %v2926, %v3060
    %v3250 = vcombine.high %v2926, %v3060
    %v3252 = vunpack.c.l.s4 1983009808
    %v3253 = vunpack.c.0.s8 %v3252
    %v3254 = vlaneseq
    %v3255 = vshrl.u32 %v3254, 7
    %v3256 = vsub.s32 %v3253, %v3255
    %v3257 = vrot.slane %v3249, %v3256
    %v3259 = vunpack.c.l.s4 1983009808
    %v3260 = vunpack.c.0.s8 %v3259
    %v3261 = vlaneseq
    %v3262 = vshrl.u32 %v3261, 7
    %v3263 = vsub.s32 %v3260, %v3262
    %v3264 = vrot.slane %v3250, %v3263
    %v3265 = vcombine.low %v3209, %v3225
    %v3266 = vcombine.high %v3209, %v3225
    %v3268 = vunpack.c.l.s4 1934713408
    %v3269 = vunpack.c.0.s8 %v3268
    %v3270 = vlaneseq
    %v3271 = vshrl.u32 %v3270, 7
    %v3272 = vsub.s32 %v3269, %v3271
    %v3273 = vrot.slane %v3265, %v3272
    %v3275 = vunpack.c.l.s4 1934713408
    %v3276 = vunpack.c.0.s8 %v3275
    %v3277 = vlaneseq
    %v3278 = vshrl.u32 %v3277, 7
    %v3279 = vsub.s32 %v3276, %v3278
    %v3280 = vrot.slane %v3266, %v3279
    %v3281 = vcombine.low %v3216, %v3232
    %v3282 = vcombine.high %v3216, %v3232
    %v3284 = vunpack.c.l.s4 1934713408
    %v3285 = vunpack.c.0.s8 %v3284
    %v3286 = vlaneseq
    %v3287 = vshrl.u32 %v3286, 7
    %v3288 = vsub.s32 %v3285, %v3287
    %v3289 = vrot.slane %v3281, %v3288
    %v3291 = vunpack.c.l.s4 1934713408
    %v3292 = vunpack.c.0.s8 %v3291
    %v3293 = vlaneseq
    %v3294 = vshrl.u32 %v3293, 7
    %v3295 = vsub.s32 %v3292, %v3294
    %v3296 = vrot.slane %v3282, %v3295
    %v3297 = vcombine.low %v3241, %v3257
    %v3298 = vcombine.high %v3241, %v3257
    %v3300 = vunpack.c.l.s4 1934713408
    %v3301 = vunpack.c.0.s8 %v3300
    %v3302 = vlaneseq
    %v3303 = vshrl.u32 %v3302, 7
    %v3304 = vsub.s32 %v3301, %v3303
    %v3305 = vrot.slane %v3297, %v3304
    %v3307 = vunpack.c.l.s4 1934713408
    %v3308 = vunpack.c.0.s8 %v3307
    %v3309 = vlaneseq
    %v3310 = vshrl.u32 %v3309, 7
    %v3311 = vsub.s32 %v3308, %v3310
    %v3312 = vrot.slane %v3298, %v3311
    %v3313 = vcombine.low %v3248, %v3264
    %v3314 = vcombine.high %v3248, %v3264
    %v3316 = vunpack.c.l.s4 1934713408
    %v3317 = vunpack.c.0.s8 %v3316
    %v3318 = vlaneseq
    %v3319 = vshrl.u32 %v3318, 7
    %v3320 = vsub.s32 %v3317, %v3319
    %v3321 = vrot.slane %v3313, %v3320
    %v3323 = vunpack.c.l.s4 1934713408
    %v3324 = vunpack.c.0.s8 %v3323
    %v3325 = vlaneseq
    %v3326 = vshrl.u32 %v3325, 7
    %v3327 = vsub.s32 %v3324, %v3326
    %v3328 = vrot.slane %v3314, %v3327
    %v3329 = vcombine.low %v3273, %v3305
    %v3330 = vcombine.high %v3273, %v3305
    %v3331 = vcombine.low %v3280, %v3312
    %v3332 = vcombine.high %v3280, %v3312
    %v3333 = vcombine.low %v3289, %v3321
    %v3334 = vcombine.high %v3289, %v3321
    %v3335 = vcombine.low %v3296, %v3328
    %v3336 = vcombine.high %v3296, %v3328
    %3339 = vrot.lane.b32.xlu0 %v3194, 64
    %v3340 = vpop.permute.xlu0 %3339
    %3341 = vrot.lane.b32.xlu0 %v3330, 64
    %v3342 = vpop.permute.xlu0 %3341
    %3347 = vrot.lane.b32.xlu0 %v3196, 64
    %v3348 = vpop.permute.xlu0 %3347
    %3349 = vrot.lane.b32.xlu0 %v3332, 64
    %v3350 = vpop.permute.xlu0 %3349
    %3355 = vrot.lane.b32.xlu0 %v3198, 64
    %v3356 = vpop.permute.xlu0 %3355
    %3357 = vrot.lane.b32.xlu0 %v3334, 64
    %v3358 = vpop.permute.xlu0 %3357
    %3363 = vrot.lane.b32.xlu0 %v3200, 64
    %v3364 = vpop.permute.xlu0 %3363
    %3365 = vrot.lane.b32.xlu0 %v3336, 64
    %v3366 = vpop.permute.xlu0 %3365
    %v3369 = vsel %vm543, %v3193, %v3340
    %v3370 = vsel %vm543, %v3329, %v3342
    %v3371 = vsel %vm543, %v3195, %v3348
    %v3372 = vsel %vm543, %v3331, %v3350
    %v3373 = vsel %vm543, %v3197, %v3356
    %v3374 = vsel %vm543, %v3333, %v3358
    %v3375 = vsel %vm543, %v3199, %v3364
    %v3376 = vsel %vm543, %v3335, %v3366
    %v3381 = vunpack.c.l.b16 %v107
    %v3382 = vunpack.c.h.b16 %v107
    %v3383 = vunpack.c.l.b16 %v108
    %v3384 = vunpack.c.h.b16 %v108
    %v3385 = vunpack.c.l.b16 %v109
    %v3386 = vunpack.c.h.b16 %v109
    %v3387 = vunpack.c.l.b16 %v110
    %v3388 = vunpack.c.h.b16 %v110
    %v3389 = vpack.c.b16 %v3385, %v3381
    %v3390 = vpack.c.b16 %v3386, %v3382
    %v3391 = vpack.c.b16 %v3387, %v3383
    %v3392 = vpack.c.b16 %v3388, %v3384
    %v3525 = vunpack.c.l.b16 %v383
    %v3526 = vunpack.c.h.b16 %v383
    %v3527 = vunpack.c.l.b16 %v384
    %v3528 = vunpack.c.h.b16 %v384
    %v3529 = vunpack.c.l.b16 %v385
    %v3530 = vunpack.c.h.b16 %v385
    %v3531 = vunpack.c.l.b16 %v386
    %v3532 = vunpack.c.h.b16 %v386
    %v3533 = vunpack.c.l.b16 %v387
    %v3534 = vunpack.c.h.b16 %v387
    %v3535 = vunpack.c.l.b16 %v388
    %v3536 = vunpack.c.h.b16 %v388
    %v3537 = vunpack.c.l.b16 %v389
    %v3538 = vunpack.c.h.b16 %v389
    %v3539 = vunpack.c.l.b16 %v390
    %v3540 = vunpack.c.h.b16 %v390
    %v3541 = vunpack.c.l.b16 %v391
    %v3542 = vunpack.c.h.b16 %v391
    %v3543 = vunpack.c.l.b16 %v392
    %v3544 = vunpack.c.h.b16 %v392
    %v3545 = vunpack.c.l.b16 %v393
    %v3546 = vunpack.c.h.b16 %v393
    %v3547 = vunpack.c.l.b16 %v394
    %v3548 = vunpack.c.h.b16 %v394
    %v3549 = vunpack.c.l.b16 %v395
    %v3550 = vunpack.c.h.b16 %v395
    %v3551 = vunpack.c.l.b16 %v396
    %v3552 = vunpack.c.h.b16 %v396
    %v3553 = vunpack.c.l.b16 %v397
    %v3554 = vunpack.c.h.b16 %v397
    %v3555 = vunpack.c.l.b16 %v398
    %v3556 = vunpack.c.h.b16 %v398
    %v3557 = vunpack.c.l.b16 %v399
    %v3558 = vunpack.c.h.b16 %v399
    %v3559 = vunpack.c.l.b16 %v400
    %v3560 = vunpack.c.h.b16 %v400
    %v3561 = vunpack.c.l.b16 %v401
    %v3562 = vunpack.c.h.b16 %v401
    %v3563 = vunpack.c.l.b16 %v402
    %v3564 = vunpack.c.h.b16 %v402
    %v3565 = vunpack.c.l.b16 %v403
    %v3566 = vunpack.c.h.b16 %v403
    %v3567 = vunpack.c.l.b16 %v404
    %v3568 = vunpack.c.h.b16 %v404
    %v3569 = vunpack.c.l.b16 %v405
    %v3570 = vunpack.c.h.b16 %v405
    %v3571 = vunpack.c.l.b16 %v406
    %v3572 = vunpack.c.h.b16 %v406
    %v3573 = vunpack.c.l.b16 %v407
    %v3574 = vunpack.c.h.b16 %v407
    %v3575 = vunpack.c.l.b16 %v408
    %v3576 = vunpack.c.h.b16 %v408
    %v3577 = vunpack.c.l.b16 %v409
    %v3578 = vunpack.c.h.b16 %v409
    %v3579 = vunpack.c.l.b16 %v410
    %v3580 = vunpack.c.h.b16 %v410
    %v3581 = vunpack.c.l.b16 %v411
    %v3582 = vunpack.c.h.b16 %v411
    %v3583 = vunpack.c.l.b16 %v412
    %v3584 = vunpack.c.h.b16 %v412
    %v3585 = vunpack.c.l.b16 %v413
    %v3586 = vunpack.c.h.b16 %v413
    %v3587 = vunpack.c.l.b16 %v414
    %v3588 = vunpack.c.h.b16 %v414
    %v3589 = vunpack.c.l.b16 %v415
    %v3590 = vunpack.c.h.b16 %v415
    %v3591 = vunpack.c.l.b16 %v416
    %v3592 = vunpack.c.h.b16 %v416
    %v3593 = vunpack.c.l.b16 %v417
    %v3594 = vunpack.c.h.b16 %v417
    %v3595 = vunpack.c.l.b16 %v418
    %v3596 = vunpack.c.h.b16 %v418
    %v3597 = vunpack.c.l.b16 %v419
    %v3598 = vunpack.c.h.b16 %v419
    %v3599 = vunpack.c.l.b16 %v420
    %v3600 = vunpack.c.h.b16 %v420
    %v3601 = vunpack.c.l.b16 %v421
    %v3602 = vunpack.c.h.b16 %v421
    %v3603 = vunpack.c.l.b16 %v422
    %v3604 = vunpack.c.h.b16 %v422
    %v3605 = vunpack.c.l.b16 %v423
    %v3606 = vunpack.c.h.b16 %v423
    %v3607 = vunpack.c.l.b16 %v424
    %v3608 = vunpack.c.h.b16 %v424
    %v3609 = vunpack.c.l.b16 %v425
    %v3610 = vunpack.c.h.b16 %v425
    %v3611 = vunpack.c.l.b16 %v426
    %v3612 = vunpack.c.h.b16 %v426
    %v3613 = vunpack.c.l.b16 %v427
    %v3614 = vunpack.c.h.b16 %v427
    %v3615 = vunpack.c.l.b16 %v428
    %v3616 = vunpack.c.h.b16 %v428
    %v3617 = vunpack.c.l.b16 %v429
    %v3618 = vunpack.c.h.b16 %v429
    %v3619 = vunpack.c.l.b16 %v430
    %v3620 = vunpack.c.h.b16 %v430
    %v3621 = vunpack.c.l.b16 %v431
    %v3622 = vunpack.c.h.b16 %v431
    %v3623 = vunpack.c.l.b16 %v432
    %v3624 = vunpack.c.h.b16 %v432
    %v3625 = vunpack.c.l.b16 %v433
    %v3626 = vunpack.c.h.b16 %v433
    %v3627 = vunpack.c.l.b16 %v434
    %v3628 = vunpack.c.h.b16 %v434
    %v3629 = vunpack.c.l.b16 %v435
    %v3630 = vunpack.c.h.b16 %v435
    %v3631 = vunpack.c.l.b16 %v436
    %v3632 = vunpack.c.h.b16 %v436
    %v3633 = vunpack.c.l.b16 %v437
    %v3634 = vunpack.c.h.b16 %v437
    %v3635 = vunpack.c.l.b16 %v438
    %v3636 = vunpack.c.h.b16 %v438
    %v3637 = vunpack.c.l.b16 %v439
    %v3638 = vunpack.c.h.b16 %v439
    %v3639 = vunpack.c.l.b16 %v440
    %v3640 = vunpack.c.h.b16 %v440
    %v3641 = vunpack.c.l.b16 %v441
    %v3642 = vunpack.c.h.b16 %v441
    %v3643 = vunpack.c.l.b16 %v442
    %v3644 = vunpack.c.h.b16 %v442
    %v3645 = vunpack.c.l.b16 %v443
    %v3646 = vunpack.c.h.b16 %v443
    %v3647 = vunpack.c.l.b16 %v444
    %v3648 = vunpack.c.h.b16 %v444
    %v3649 = vunpack.c.l.b16 %v445
    %v3650 = vunpack.c.h.b16 %v445
    %v3651 = vunpack.c.l.b16 %v446
    %v3652 = vunpack.c.h.b16 %v446
    %v3653 = vunpack.c.l.b16 %v447
    %v3654 = vunpack.c.h.b16 %v447
    %v3655 = vunpack.c.l.b16 %v448
    %v3656 = vunpack.c.h.b16 %v448
    %v3657 = vunpack.c.l.b16 %v449
    %v3658 = vunpack.c.h.b16 %v449
    %v3659 = vunpack.c.l.b16 %v450
    %v3660 = vunpack.c.h.b16 %v450
    %v3661 = vunpack.c.l.b16 %v451
    %v3662 = vunpack.c.h.b16 %v451
    %v3663 = vunpack.c.l.b16 %v452
    %v3664 = vunpack.c.h.b16 %v452
    %v3665 = vunpack.c.l.b16 %v453
    %v3666 = vunpack.c.h.b16 %v453
    %v3667 = vunpack.c.l.b16 %v454
    %v3668 = vunpack.c.h.b16 %v454
    %v3669 = vunpack.c.l.b16 %v455
    %v3670 = vunpack.c.h.b16 %v455
    %v3671 = vunpack.c.l.b16 %v456
    %v3672 = vunpack.c.h.b16 %v456
    %v3673 = vunpack.c.l.b16 %v457
    %v3674 = vunpack.c.h.b16 %v457
    %v3675 = vunpack.c.l.b16 %v458
    %v3676 = vunpack.c.h.b16 %v458
    %v3677 = vunpack.c.l.b16 %v459
    %v3678 = vunpack.c.h.b16 %v459
    %v3679 = vunpack.c.l.b16 %v460
    %v3680 = vunpack.c.h.b16 %v460
    %v3681 = vunpack.c.l.b16 %v461
    %v3682 = vunpack.c.h.b16 %v461
    %v3683 = vunpack.c.l.b16 %v462
    %v3684 = vunpack.c.h.b16 %v462
    %v3685 = vunpack.c.l.b16 %v463
    %v3686 = vunpack.c.h.b16 %v463
    %v3687 = vunpack.c.l.b16 %v464
    %v3688 = vunpack.c.h.b16 %v464
    %v3689 = vunpack.c.l.b16 %v465
    %v3690 = vunpack.c.h.b16 %v465
    %v3691 = vunpack.c.l.b16 %v466
    %v3692 = vunpack.c.h.b16 %v466
    %v3693 = vunpack.c.l.b16 %v467
    %v3694 = vunpack.c.h.b16 %v467
    %v3695 = vunpack.c.l.b16 %v468
    %v3696 = vunpack.c.h.b16 %v468
    %v3697 = vunpack.c.l.b16 %v469
    %v3698 = vunpack.c.h.b16 %v469
    %v3699 = vunpack.c.l.b16 %v470
    %v3700 = vunpack.c.h.b16 %v470
    %v3701 = vunpack.c.l.b16 %v471
    %v3702 = vunpack.c.h.b16 %v471
    %v3703 = vunpack.c.l.b16 %v472
    %v3704 = vunpack.c.h.b16 %v472
    %v3705 = vunpack.c.l.b16 %v473
    %v3706 = vunpack.c.h.b16 %v473
    %v3707 = vunpack.c.l.b16 %v474
    %v3708 = vunpack.c.h.b16 %v474
    %v3709 = vunpack.c.l.b16 %v475
    %v3710 = vunpack.c.h.b16 %v475
    %v3711 = vunpack.c.l.b16 %v476
    %v3712 = vunpack.c.h.b16 %v476
    %v3713 = vunpack.c.l.b16 %v477
    %v3714 = vunpack.c.h.b16 %v477
    %v3715 = vunpack.c.l.b16 %v478
    %v3716 = vunpack.c.h.b16 %v478
    %v3717 = vunpack.c.l.b16 %v479
    %v3718 = vunpack.c.h.b16 %v479
    %v3719 = vunpack.c.l.b16 %v480
    %v3720 = vunpack.c.h.b16 %v480
    %v3721 = vunpack.c.l.b16 %v481
    %v3722 = vunpack.c.h.b16 %v481
    %v3723 = vunpack.c.l.b16 %v482
    %v3724 = vunpack.c.h.b16 %v482
    %v3725 = vunpack.c.l.b16 %v483
    %v3726 = vunpack.c.h.b16 %v483
    %v3727 = vunpack.c.l.b16 %v484
    %v3728 = vunpack.c.h.b16 %v484
    %v3729 = vunpack.c.l.b16 %v485
    %v3730 = vunpack.c.h.b16 %v485
    %v3731 = vunpack.c.l.b16 %v486
    %v3732 = vunpack.c.h.b16 %v486
    %v3733 = vunpack.c.l.b16 %v487
    %v3734 = vunpack.c.h.b16 %v487
    %v3735 = vunpack.c.l.b16 %v488
    %v3736 = vunpack.c.h.b16 %v488
    %v3737 = vunpack.c.l.b16 %v489
    %v3738 = vunpack.c.h.b16 %v489
    %v3739 = vunpack.c.l.b16 %v490
    %v3740 = vunpack.c.h.b16 %v490
    %v3741 = vunpack.c.l.b16 %v491
    %v3742 = vunpack.c.h.b16 %v491
    %v3743 = vunpack.c.l.b16 %v492
    %v3744 = vunpack.c.h.b16 %v492
    %v3745 = vunpack.c.l.b16 %v493
    %v3746 = vunpack.c.h.b16 %v493
    %v3747 = vunpack.c.l.b16 %v494
    %v3748 = vunpack.c.h.b16 %v494
    %v3749 = vunpack.c.l.b16 %v495
    %v3750 = vunpack.c.h.b16 %v495
    %v3751 = vunpack.c.l.b16 %v496
    %v3752 = vunpack.c.h.b16 %v496
    %v3753 = vunpack.c.l.b16 %v497
    %v3754 = vunpack.c.h.b16 %v497
    %v3755 = vunpack.c.l.b16 %v498
    %v3756 = vunpack.c.h.b16 %v498
    %v3757 = vunpack.c.l.b16 %v499
    %v3758 = vunpack.c.h.b16 %v499
    %v3759 = vunpack.c.l.b16 %v500
    %v3760 = vunpack.c.h.b16 %v500
    %v3761 = vunpack.c.l.b16 %v501
    %v3762 = vunpack.c.h.b16 %v501
    %v3763 = vunpack.c.l.b16 %v502
    %v3764 = vunpack.c.h.b16 %v502
    %v3765 = vunpack.c.l.b16 %v503
    %v3766 = vunpack.c.h.b16 %v503
    %v3767 = vunpack.c.l.b16 %v504
    %v3768 = vunpack.c.h.b16 %v504
    %v3769 = vunpack.c.l.b16 %v505
    %v3770 = vunpack.c.h.b16 %v505
    %v3771 = vunpack.c.l.b16 %v506
    %v3772 = vunpack.c.h.b16 %v506
    %v3773 = vunpack.c.l.b16 %v507
    %v3774 = vunpack.c.h.b16 %v507
    %v3775 = vunpack.c.l.b16 %v508
    %v3776 = vunpack.c.h.b16 %v508
    %v3777 = vunpack.c.l.b16 %v509
    %v3778 = vunpack.c.h.b16 %v509
    %v3779 = vunpack.c.l.b16 %v510
    %v3780 = vunpack.c.h.b16 %v510
    %v3781 = vpack.c.b16 %v3529, %v3525
    %v3782 = vpack.c.b16 %v3530, %v3526
    %v3783 = vpack.c.b16 %v3531, %v3527
    %v3784 = vpack.c.b16 %v3532, %v3528
    %v3785 = vpack.c.b16 %v3537, %v3533
    %v3786 = vpack.c.b16 %v3538, %v3534
    %v3787 = vpack.c.b16 %v3539, %v3535
    %v3788 = vpack.c.b16 %v3540, %v3536
    %v3789 = vpack.c.b16 %v3545, %v3541
    %v3790 = vpack.c.b16 %v3546, %v3542
    %v3791 = vpack.c.b16 %v3547, %v3543
    %v3792 = vpack.c.b16 %v3548, %v3544
    %v3793 = vpack.c.b16 %v3553, %v3549
    %v3794 = vpack.c.b16 %v3554, %v3550
    %v3795 = vpack.c.b16 %v3555, %v3551
    %v3796 = vpack.c.b16 %v3556, %v3552
    %v3797 = vpack.c.b16 %v3561, %v3557
    %v3798 = vpack.c.b16 %v3562, %v3558
    %v3799 = vpack.c.b16 %v3563, %v3559
    %v3800 = vpack.c.b16 %v3564, %v3560
    %v3801 = vpack.c.b16 %v3569, %v3565
    %v3802 = vpack.c.b16 %v3570, %v3566
    %v3803 = vpack.c.b16 %v3571, %v3567
    %v3804 = vpack.c.b16 %v3572, %v3568
    %v3805 = vpack.c.b16 %v3577, %v3573
    %v3806 = vpack.c.b16 %v3578, %v3574
    %v3807 = vpack.c.b16 %v3579, %v3575
    %v3808 = vpack.c.b16 %v3580, %v3576
    %v3809 = vpack.c.b16 %v3585, %v3581
    %v3810 = vpack.c.b16 %v3586, %v3582
    %v3811 = vpack.c.b16 %v3587, %v3583
    %v3812 = vpack.c.b16 %v3588, %v3584
    %v3813 = vpack.c.b16 %v3593, %v3589
    %v3814 = vpack.c.b16 %v3594, %v3590
    %v3815 = vpack.c.b16 %v3595, %v3591
    %v3816 = vpack.c.b16 %v3596, %v3592
    %v3817 = vpack.c.b16 %v3601, %v3597
    %v3818 = vpack.c.b16 %v3602, %v3598
    %v3819 = vpack.c.b16 %v3603, %v3599
    %v3820 = vpack.c.b16 %v3604, %v3600
    %v3821 = vpack.c.b16 %v3609, %v3605
    %v3822 = vpack.c.b16 %v3610, %v3606
    %v3823 = vpack.c.b16 %v3611, %v3607
    %v3824 = vpack.c.b16 %v3612, %v3608
    %v3825 = vpack.c.b16 %v3617, %v3613
    %v3826 = vpack.c.b16 %v3618, %v3614
    %v3827 = vpack.c.b16 %v3619, %v3615
    %v3828 = vpack.c.b16 %v3620, %v3616
    %v3829 = vpack.c.b16 %v3625, %v3621
    %v3830 = vpack.c.b16 %v3626, %v3622
    %v3831 = vpack.c.b16 %v3627, %v3623
    %v3832 = vpack.c.b16 %v3628, %v3624
    %v3833 = vpack.c.b16 %v3633, %v3629
    %v3834 = vpack.c.b16 %v3634, %v3630
    %v3835 = vpack.c.b16 %v3635, %v3631
    %v3836 = vpack.c.b16 %v3636, %v3632
    %v3837 = vpack.c.b16 %v3641, %v3637
    %v3838 = vpack.c.b16 %v3642, %v3638
    %v3839 = vpack.c.b16 %v3643, %v3639
    %v3840 = vpack.c.b16 %v3644, %v3640
    %v3841 = vpack.c.b16 %v3649, %v3645
    %v3842 = vpack.c.b16 %v3650, %v3646
    %v3843 = vpack.c.b16 %v3651, %v3647
    %v3844 = vpack.c.b16 %v3652, %v3648
    %v3845 = vpack.c.b16 %v3657, %v3653
    %v3846 = vpack.c.b16 %v3658, %v3654
    %v3847 = vpack.c.b16 %v3659, %v3655
    %v3848 = vpack.c.b16 %v3660, %v3656
    %v3849 = vpack.c.b16 %v3665, %v3661
    %v3850 = vpack.c.b16 %v3666, %v3662
    %v3851 = vpack.c.b16 %v3667, %v3663
    %v3852 = vpack.c.b16 %v3668, %v3664
    %v3853 = vpack.c.b16 %v3673, %v3669
    %v3854 = vpack.c.b16 %v3674, %v3670
    %v3855 = vpack.c.b16 %v3675, %v3671
    %v3856 = vpack.c.b16 %v3676, %v3672
    %v3857 = vpack.c.b16 %v3681, %v3677
    %v3858 = vpack.c.b16 %v3682, %v3678
    %v3859 = vpack.c.b16 %v3683, %v3679
    %v3860 = vpack.c.b16 %v3684, %v3680
    %v3861 = vpack.c.b16 %v3689, %v3685
    %v3862 = vpack.c.b16 %v3690, %v3686
    %v3863 = vpack.c.b16 %v3691, %v3687
    %v3864 = vpack.c.b16 %v3692, %v3688
    %v3865 = vpack.c.b16 %v3697, %v3693
    %v3866 = vpack.c.b16 %v3698, %v3694
    %v3867 = vpack.c.b16 %v3699, %v3695
    %v3868 = vpack.c.b16 %v3700, %v3696
    %v3869 = vpack.c.b16 %v3705, %v3701
    %v3870 = vpack.c.b16 %v3706, %v3702
    %v3871 = vpack.c.b16 %v3707, %v3703
    %v3872 = vpack.c.b16 %v3708, %v3704
    %v3873 = vpack.c.b16 %v3713, %v3709
    %v3874 = vpack.c.b16 %v3714, %v3710
    %v3875 = vpack.c.b16 %v3715, %v3711
    %v3876 = vpack.c.b16 %v3716, %v3712
    %v3877 = vpack.c.b16 %v3721, %v3717
    %v3878 = vpack.c.b16 %v3722, %v3718
    %v3879 = vpack.c.b16 %v3723, %v3719
    %v3880 = vpack.c.b16 %v3724, %v3720
    %v3881 = vpack.c.b16 %v3729, %v3725
    %v3882 = vpack.c.b16 %v3730, %v3726
    %v3883 = vpack.c.b16 %v3731, %v3727
    %v3884 = vpack.c.b16 %v3732, %v3728
    %v3885 = vpack.c.b16 %v3737, %v3733
    %v3886 = vpack.c.b16 %v3738, %v3734
    %v3887 = vpack.c.b16 %v3739, %v3735
    %v3888 = vpack.c.b16 %v3740, %v3736
    %v3889 = vpack.c.b16 %v3745, %v3741
    %v3890 = vpack.c.b16 %v3746, %v3742
    %v3891 = vpack.c.b16 %v3747, %v3743
    %v3892 = vpack.c.b16 %v3748, %v3744
    %v3893 = vpack.c.b16 %v3753, %v3749
    %v3894 = vpack.c.b16 %v3754, %v3750
    %v3895 = vpack.c.b16 %v3755, %v3751
    %v3896 = vpack.c.b16 %v3756, %v3752
    %v3897 = vpack.c.b16 %v3761, %v3757
    %v3898 = vpack.c.b16 %v3762, %v3758
    %v3899 = vpack.c.b16 %v3763, %v3759
    %v3900 = vpack.c.b16 %v3764, %v3760
    %v3901 = vpack.c.b16 %v3769, %v3765
    %v3902 = vpack.c.b16 %v3770, %v3766
    %v3903 = vpack.c.b16 %v3771, %v3767
    %v3904 = vpack.c.b16 %v3772, %v3768
    %v3905 = vpack.c.b16 %v3777, %v3773
    %v3906 = vpack.c.b16 %v3778, %v3774
    %v3907 = vpack.c.b16 %v3779, %v3775
    %v3908 = vpack.c.b16 %v3780, %v3776
    %4037 = vmatprep.subr.bf16.mxu0 %v3782
    %4038 = vmatpush1.bf16.msra.mxu0 %v3781
    %4039 = vmatprep.subr.bf16.mxu0 %v3786
    %4040 = vmatpush1.bf16.msra.mxu0 %v3785
    %4041 = vmatprep.subr.bf16.mxu0 %v3790
    %4042 = vmatpush1.bf16.msra.mxu0 %v3789
    %4043 = vmatprep.subr.bf16.mxu0 %v3794
    %4044 = vmatpush1.bf16.msra.mxu0 %v3793
    %4045 = vmatprep.subr.bf16.mxu0 %v3798
    %4046 = vmatpush1.bf16.msra.mxu0 %v3797
    %4047 = vmatprep.subr.bf16.mxu0 %v3802
    %4048 = vmatpush1.bf16.msra.mxu0 %v3801
    %4049 = vmatprep.subr.bf16.mxu0 %v3806
    %4050 = vmatpush1.bf16.msra.mxu0 %v3805
    %4051 = vmatprep.subr.bf16.mxu0 %v3810
    %4052 = vmatpush1.bf16.msra.mxu0 %v3809
    %4053 = vmatprep.subr.bf16.mxu0 %v3814
    %4054 = vmatpush1.bf16.msra.mxu0 %v3813
    %4055 = vmatprep.subr.bf16.mxu0 %v3818
    %4056 = vmatpush1.bf16.msra.mxu0 %v3817
    %4057 = vmatprep.subr.bf16.mxu0 %v3822
    %4058 = vmatpush1.bf16.msra.mxu0 %v3821
    %4059 = vmatprep.subr.bf16.mxu0 %v3826
    %4060 = vmatpush1.bf16.msra.mxu0 %v3825
    %4061 = vmatprep.subr.bf16.mxu0 %v3830
    %4062 = vmatpush1.bf16.msra.mxu0 %v3829
    %4063 = vmatprep.subr.bf16.mxu0 %v3834
    %4064 = vmatpush1.bf16.msra.mxu0 %v3833
    %4065 = vmatprep.subr.bf16.mxu0 %v3838
    %4066 = vmatpush1.bf16.msra.mxu0 %v3837
    %4067 = vmatprep.subr.bf16.mxu0 %v3842
    %4068 = vmatpush1.bf16.msra.mxu0 %v3841
    %4069 = vmatprep.mubr.bf16.mxu0 %v3390
    %4070 = vmatmul.mubr.bf16.gmra.mrb[0].mxu0 %v3389
    %v4071 = vpop.f32.mrb[0].mxu0
    %v4072 = vadd.f32 %v3369, %v4071
    %v4073 = vpop.f32.mrb[0].mxu0
    %v4074 = vadd.f32 %v3371, %v4073
    %v4075 = vpop.f32.mrb[0].mxu0
    %v4076 = vadd.f32 %v3370, %v4075
    %v4077 = vpop.f32.mrb[0].mxu0
    %v4078 = vadd.f32 %v3372, %v4077
    %4079 = vdwg.mxu0
    %4080 = vmatprep.subr.bf16.mxu0 %v3846
    %4081 = vmatpush1.bf16.msra.mxu0 %v3845
    %4082 = vmatprep.subr.bf16.mxu0 %v3850
    %4083 = vmatpush1.bf16.msra.mxu0 %v3849
    %4084 = vmatprep.subr.bf16.mxu0 %v3854
    %4085 = vmatpush1.bf16.msra.mxu0 %v3853
    %4086 = vmatprep.subr.bf16.mxu0 %v3858
    %4087 = vmatpush1.bf16.msra.mxu0 %v3857
    %4088 = vmatprep.subr.bf16.mxu0 %v3862
    %4089 = vmatpush1.bf16.msra.mxu0 %v3861
    %4090 = vmatprep.subr.bf16.mxu0 %v3866
    %4091 = vmatpush1.bf16.msra.mxu0 %v3865
    %4092 = vmatprep.subr.bf16.mxu0 %v3870
    %4093 = vmatpush1.bf16.msra.mxu0 %v3869
    %4094 = vmatprep.subr.bf16.mxu0 %v3874
    %4095 = vmatpush1.bf16.msra.mxu0 %v3873
    %4096 = vmatprep.subr.bf16.mxu0 %v3878
    %4097 = vmatpush1.bf16.msra.mxu0 %v3877
    %4098 = vmatprep.subr.bf16.mxu0 %v3882
    %4099 = vmatpush1.bf16.msra.mxu0 %v3881
    %4100 = vmatprep.subr.bf16.mxu0 %v3886
    %4101 = vmatpush1.bf16.msra.mxu0 %v3885
    %4102 = vmatprep.subr.bf16.mxu0 %v3890
    %4103 = vmatpush1.bf16.msra.mxu0 %v3889
    %4104 = vmatprep.subr.bf16.mxu0 %v3894
    %4105 = vmatpush1.bf16.msra.mxu0 %v3893
    %4106 = vmatprep.subr.bf16.mxu0 %v3898
    %4107 = vmatpush1.bf16.msra.mxu0 %v3897
    %4108 = vmatprep.subr.bf16.mxu0 %v3902
    %4109 = vmatpush1.bf16.msra.mxu0 %v3901
    %4110 = vmatprep.subr.bf16.mxu0 %v3906
    %4111 = vmatpush1.bf16.msra.mxu0 %v3905
    %4112 = vmatprep.mubr.bf16.mxu0 %v3392
    %4113 = vmatmul.mubr.bf16.gmra.mrb[0].mxu0 %v3391
    %v4114 = vpop.f32.mrb[0].mxu0
    %v4115 = vadd.f32 %v4072, %v4114
    %v4116 = vpop.f32.mrb[0].mxu0
    %v4117 = vadd.f32 %v4074, %v4116
    %v4118 = vpop.f32.mrb[0].mxu0
    %v4119 = vadd.f32 %v4076, %v4118
    %v4120 = vpop.f32.mrb[0].mxu0
    %v4121 = vadd.f32 %v4078, %v4120
    %4122 = vdwg.mxu0
    %4123 = vmatprep.subr.bf16.mxu0 %v3784
    %4124 = vmatpush1.bf16.msra.mxu0 %v3783
    %4125 = vmatprep.subr.bf16.mxu0 %v3788
    %4126 = vmatpush1.bf16.msra.mxu0 %v3787
    %4127 = vmatprep.subr.bf16.mxu0 %v3792
    %4128 = vmatpush1.bf16.msra.mxu0 %v3791
    %4129 = vmatprep.subr.bf16.mxu0 %v3796
    %4130 = vmatpush1.bf16.msra.mxu0 %v3795
    %4131 = vmatprep.subr.bf16.mxu0 %v3800
    %4132 = vmatpush1.bf16.msra.mxu0 %v3799
    %4133 = vmatprep.subr.bf16.mxu0 %v3804
    %4134 = vmatpush1.bf16.msra.mxu0 %v3803
    %4135 = vmatprep.subr.bf16.mxu0 %v3808
    %4136 = vmatpush1.bf16.msra.mxu0 %v3807
    %4137 = vmatprep.subr.bf16.mxu0 %v3812
    %4138 = vmatpush1.bf16.msra.mxu0 %v3811
    %4139 = vmatprep.subr.bf16.mxu0 %v3816
    %4140 = vmatpush1.bf16.msra.mxu0 %v3815
    %4141 = vmatprep.subr.bf16.mxu0 %v3820
    %4142 = vmatpush1.bf16.msra.mxu0 %v3819
    %4143 = vmatprep.subr.bf16.mxu0 %v3824
    %4144 = vmatpush1.bf16.msra.mxu0 %v3823
    %4145 = vmatprep.subr.bf16.mxu0 %v3828
    %4146 = vmatpush1.bf16.msra.mxu0 %v3827
    %4147 = vmatprep.subr.bf16.mxu0 %v3832
    %4148 = vmatpush1.bf16.msra.mxu0 %v3831
    %4149 = vmatprep.subr.bf16.mxu0 %v3836
    %4150 = vmatpush1.bf16.msra.mxu0 %v3835
    %4151 = vmatprep.subr.bf16.mxu0 %v3840
    %4152 = vmatpush1.bf16.msra.mxu0 %v3839
    %4153 = vmatprep.subr.bf16.mxu0 %v3844
    %4154 = vmatpush1.bf16.msra.mxu0 %v3843
    %4155 = vmatprep.mubr.bf16.mxu0 %v3390
    %4156 = vmatmul.mubr.bf16.gmra.mrb[0].mxu0 %v3389
    %v4157 = vpop.f32.mrb[0].mxu0
    %v4158 = vadd.f32 %v3373, %v4157
    %v4159 = vpop.f32.mrb[0].mxu0
    %v4160 = vadd.f32 %v3375, %v4159
    %v4161 = vpop.f32.mrb[0].mxu0
    %v4162 = vadd.f32 %v3374, %v4161
    %v4163 = vpop.f32.mrb[0].mxu0
    %v4164 = vadd.f32 %v3376, %v4163
    %4165 = vdwg.mxu0
    %4166 = vmatprep.subr.bf16.mxu0 %v3848
    %4167 = vmatpush1.bf16.msra.mxu0 %v3847
    %4168 = vmatprep.subr.bf16.mxu0 %v3852
    %4169 = vmatpush1.bf16.msra.mxu0 %v3851
    %4170 = vmatprep.subr.bf16.mxu0 %v3856
    %4171 = vmatpush1.bf16.msra.mxu0 %v3855
    %4172 = vmatprep.subr.bf16.mxu0 %v3860
    %4173 = vmatpush1.bf16.msra.mxu0 %v3859
    %4174 = vmatprep.subr.bf16.mxu0 %v3864
    %4175 = vmatpush1.bf16.msra.mxu0 %v3863
    %4176 = vmatprep.subr.bf16.mxu0 %v3868
    %4177 = vmatpush1.bf16.msra.mxu0 %v3867
    %4178 = vmatprep.subr.bf16.mxu0 %v3872
    %4179 = vmatpush1.bf16.msra.mxu0 %v3871
    %4180 = vmatprep.subr.bf16.mxu0 %v3876
    %4181 = vmatpush1.bf16.msra.mxu0 %v3875
    %4182 = vmatprep.subr.bf16.mxu0 %v3880
    %4183 = vmatpush1.bf16.msra.mxu0 %v3879
    %4184 = vmatprep.subr.bf16.mxu0 %v3884
    %4185 = vmatpush1.bf16.msra.mxu0 %v3883
    %4186 = vmatprep.subr.bf16.mxu0 %v3888
    %4187 = vmatpush1.bf16.msra.mxu0 %v3887
    %4188 = vmatprep.subr.bf16.mxu0 %v3892
    %4189 = vmatpush1.bf16.msra.mxu0 %v3891
    %4190 = vmatprep.subr.bf16.mxu0 %v3896
    %4191 = vmatpush1.bf16.msra.mxu0 %v3895
    %4192 = vmatprep.subr.bf16.mxu0 %v3900
    %4193 = vmatpush1.bf16.msra.mxu0 %v3899
    %4194 = vmatprep.subr.bf16.mxu0 %v3904
    %4195 = vmatpush1.bf16.msra.mxu0 %v3903
    %4196 = vmatprep.subr.bf16.mxu0 %v3908
    %4197 = vmatpush1.bf16.msra.mxu0 %v3907
    %4198 = vmatprep.mubr.bf16.mxu0 %v3392
    %4199 = vmatmul.mubr.bf16.gmra.mrb[0].mxu0 %v3391
    %v4200 = vpop.f32.mrb[0].mxu0
    %v4201 = vadd.f32 %v4158, %v4200
    %v4202 = vpop.f32.mrb[0].mxu0
    %v4203 = vadd.f32 %v4160, %v4202
    %v4204 = vpop.f32.mrb[0].mxu0
    %v4205 = vadd.f32 %v4162, %v4204
    %v4206 = vpop.f32.mrb[0].mxu0
    %v4207 = vadd.f32 %v4164, %v4206
    %4208 = vdwg.mxu0
    %4209 = vst [vmem:[#allocation13] sm:$0xff] %v4115
    %4210 = vst [vmem:[#allocation13 + $0x8] sm:$0xff] %v4117
    %4211 = vst [vmem:[#allocation13 + $0x10] sm:$0xff] %v4201
    %4212 = vst [vmem:[#allocation13 + $0x18] sm:$0xff] %v4203
    %4213 = vst [vmem:[#allocation13 + $0x20] sm:$0xff] %v4119
    %4214 = vst [vmem:[#allocation13 + $0x28] sm:$0xff] %v4121
    %4215 = vst [vmem:[#allocation13 + $0x30] sm:$0xff] %v4205
    %4216 = vst [vmem:[#allocation13 + $0x38] sm:$0xff] %v4207
    // Predicated region
    $region50: #{tpu_custom_call.1} parent=1 // pred_check
      _
    $region51: #{tpu_custom_call.1} parent=1 // pred_check_branch
      %4218 = sbr.rel (0) target = $region53
    $region52: #{tpu_custom_call.1} parent=1 // pred_region
      %s4220 = ssub.s32 1024, 1024
      %4221 = vsyncadd [#allocation4], %s4220
      %s4222 = sshll.u32 [#allocation13], 4
      %s4223 = int_to_ptr.vmem [resolvable:$true] %s4222
      %4228 = dma.vmem_to_hbm [thread:$0]  %s4223, 1024, %s6, [#allocation4], 512, 512, 32
    $region53: #{tpu_custom_call.1} parent=1 // pred_fallthru
      _
    // Predicated region
    $region54: #{tpu_custom_call.1} parent=1 // pred_check
      _
    $region55: #{tpu_custom_call.1} parent=1 // pred_check_branch
      %4230 = sbr.rel (0) target = $region57
    $region56: #{tpu_custom_call.1} parent=1 // pred_region
      %4231 = dma.done [#allocation4], 1024
    $region57: #{tpu_custom_call.1} parent=1 // pred_fallthru
      _
    %4232 = vsyncpa [#allocation3], 1
    %4233 = vsyncpa [#allocation6], 1
    %4234 = vsyncpa [#allocation9], 1
    %4235 = vsyncpa [#allocation12], 1
    %4236 = vsyncpa [#allocation4], 1

</llo_original>
